<compile_context>
chip_gen: v7x
topology: tpu7x:2x2x1
jax: 0.10.0
libtpu: 0.0.40
codegen_flags: <defaults>
</compile_context>

<pallas_src>
import math
import functools

import jax
import jax.numpy as jnp
from jax import lax
from jax.experimental import pallas as pl
from jax.experimental.pallas import tpu as pltpu


# MXU operand dtype for all in-kernel dots (accumulation stays f32).
_MXU_DTYPE = jnp.float32
# Scoped VMEM limit: > v5e 16 MiB default, < v7x 64 MiB physical.
_VMEM_LIMIT = 48 * 1024 * 1024


def _mm(a, b):
    return jnp.dot(a.astype(_MXU_DTYPE), b.astype(_MXU_DTYPE),
                   preferred_element_type=jnp.float32)


def _mm_dims(a, b, dims):
    return lax.dot_general(a.astype(_MXU_DTYPE), b.astype(_MXU_DTYPE), dims,
                           preferred_element_type=jnp.float32)


# ----------------------------------------------------------------------------
# Tiled linear projection kernel:  y = x @ W_t + b   (W_t is (in, out))
# ----------------------------------------------------------------------------
def linear_kernel(x_ref, w_ref, b_ref, o_ref):
    y = _mm(x_ref[...], w_ref[...]) + b_ref[...].astype(jnp.float32)
    o_ref[...] = y.astype(o_ref.dtype)


def linear(x, w_t, b, *, block_m=256, block_n=1024):
    """x: (M, K), w_t: (K, N) (already transposed), b: (N,) -> (M, N).

    No padding pass: cdiv grid + masked boundary blocks handle ragged M / N.
    N is the outer grid axis so each weight column-tile stays VMEM-resident
    across the whole M loop (fetched from HBM exactly once).
    """
    M, K = x.shape
    N = w_t.shape[1]
    tm = min(block_m, M)
    tn = min(block_n, N)
    grid = (pl.cdiv(N, tn), pl.cdiv(M, tm))

    return pl.pallas_call(
        linear_kernel,
        out_shape=jax.ShapeDtypeStruct((M, N), x.dtype),
        grid_spec=pltpu.PrefetchScalarGridSpec(
            num_scalar_prefetch=0,
            grid=grid,
            in_specs=[
                pl.BlockSpec((tm, K), lambda j, i: (i, 0)),   # activation tile
                pl.BlockSpec((K, tn), lambda j, i: (0, j)),   # weight tile
                pl.BlockSpec((1, tn), lambda j, i: (0, j)),   # bias tile
            ],
            out_specs=pl.BlockSpec((tm, tn), lambda j, i: (i, j)),
        ),
        compiler_params=pltpu.CompilerParams(
            dimension_semantics=("parallel", "parallel"),
            vmem_limit_bytes=_VMEM_LIMIT),
    )(x, w_t, b.reshape(1, N))


# ----------------------------------------------------------------------------
# Chunked causal flow-attention kernel.
# Grid = (B, H//Hb, num_chunks); one step = one (chunk, Hb*D) lane-dense tile.
# Running state for the causal prefixes is carried in VMEM scratch across the
# (sequential, "arbitrary") chunk axis and reset at chunk == 0.
# ----------------------------------------------------------------------------
def flow_attn_kernel(tril_ref, seg_ref, segT_ref,
                     q_ref, k_ref, v_ref, o_ref,
                     kcum_ref, qcum_ref, ksrc_ref, qsink_ref, csum_ref, kv_ref,
                     *, heads_per_block, head_dim, chunk, seq_len):
    eps = 1e-6
    Hb, D, C = heads_per_block, head_dim, chunk
    c = pl.program_id(2)

    @pl.when(c == 0)
    def _init():
        kcum_ref[...] = jnp.zeros_like(kcum_ref)
        qcum_ref[...] = jnp.zeros_like(qcum_ref)
        ksrc_ref[...] = jnp.zeros_like(ksrc_ref)
        qsink_ref[...] = jnp.zeros_like(qsink_ref)
        csum_ref[...] = jnp.zeros_like(csum_ref)
        kv_ref[...] = jnp.zeros_like(kv_ref)

    tril = tril_ref[...]                   # (C, C) inclusive lower-triangular
    seg = seg_ref[...]                     # (Hb*D, Hb)  per-head sum matrix
    segT = segT_ref[...]                   # (Hb, Hb*D)  per-head bcast matrix

    q = jax.nn.sigmoid(q_ref[...].astype(jnp.float32))   # (C, Hb*D)
    k = jax.nn.sigmoid(k_ref[...].astype(jnp.float32))   # (C, Hb*D)
    v = v_ref[...].astype(jnp.float32)                    # (C, Hb*D)

    # Global (1-based) positions of this chunk's rows.
    pos = (lax.broadcasted_iota(jnp.int32, (C, 1), 0).astype(jnp.float32)
           + 1.0 + (c * C).astype(jnp.float32))
    inv_pos = pl.reciprocal(pos, approx=False)

    if seq_len % C != 0:
        # Ragged last chunk: zero rows past the true sequence end so boundary
        # garbage can never poison valid rows through the masked matmuls.
        valid = pos <= float(seq_len)
        q = jnp.where(valid, q, 0.0)
        k = jnp.where(valid, k, 0.0)
        v = jnp.where(valid, v, 0.0)

    def head_sum(x):       # (C, Hb*D) -> (C, Hb)
        return _mm(x, seg)

    def head_bcast(s):     # (C, Hb) -> (C, Hb*D)
        return _mm(s, segT)

    # Inclusive causal cumsums = previous-chunk carry + in-chunk tril matmul.
    k_cum = _mm(tril, k) + kcum_ref[...]
    q_cum = _mm(tril, q) + qcum_ref[...]

    sink_incoming = pl.reciprocal(head_sum((q + eps) * (k_cum + eps)),
                                  approx=False)            # (C, Hb)
    source_outgoing = pl.reciprocal(head_sum((k + eps) * (q_cum + eps)),
                                    approx=False)          # (C, Hb)
    sink_keep = sink_incoming
    sink_in_n = sink_incoming * pos
    src_out_n = source_outgoing * pos

    k_src = k * head_bcast(src_out_n)                       # (C, Hb*D)
    q_sink = q * head_bcast(sink_in_n)                      # (C, Hb*D)
    ksrc_cum = _mm(tril, k_src) + ksrc_ref[...]
    qsink_cum = _mm(tril, q_sink) + qsink_ref[...]

    conserved_sink = head_sum((q + eps) * (ksrc_cum + eps)) * inv_pos
    conserved_source = head_sum((k + eps) * (qsink_cum + eps)) * inv_pos
    conserved_source = jnp.clip(conserved_source, -5.0, 5.0)

    sink_alloc = jax.nn.sigmoid(conserved_sink)             # (C, Hb)
    cs_exp = jnp.exp(conserved_source)                      # (C, Hb)
    cs_cum = _mm(tril, cs_exp) + csum_ref[...]
    source_comp = cs_exp * pl.reciprocal(cs_cum, approx=False) * pos

    qq = q * head_bcast(sink_keep)                          # (C, Hb*D)
    vv = v * head_bcast(source_comp)                        # (C, Hb*D)

    # Carry updates: the last row of each inclusive cumsum is the prefix for
    # the next chunk of the same (batch, head-group).
    kcum_ref[...] = k_cum[C - 1:C, :]
    qcum_ref[...] = q_cum[C - 1:C, :]
    ksrc_ref[...] = ksrc_cum[C - 1:C, :]
    qsink_ref[...] = qsink_cum[C - 1:C, :]
    csum_ref[...] = cs_cum[C - 1:C, :]

    # Per-head causal linear attention with a carried (D, D) KV accumulator.
    # Each head's result is scaled and stored directly (no concatenation).
    for h in range(Hb):
        sl = slice(h * D, (h + 1) * D)
        qq_h, k_h, vv_h = qq[:, sl], k[:, sl], vv[:, sl]
        kv_prev = kv_ref[sl, :]                              # (D, D)
        s = _mm_dims(qq_h, k_h, (((1,), (1,)), ((), ()))) * tril   # (C, C)
        out_h = _mm(s, vv_h) + _mm(qq_h, kv_prev)            # (C, D)
        out_h = out_h * sink_alloc[:, h:h + 1]
        o_ref[:, sl] = out_h.astype(o_ref.dtype)
        kv_ref[sl, :] = kv_prev + _mm_dims(k_h, vv_h,
                                           (((0,), (0,)), ((), ())))


def _heads_per_block(num_heads, head_dim, target_lanes=256, max_lanes=512):
    """Heads folded into the lane dim.

    Prefer a divisor of num_heads whose lane width (Hb*D) is a multiple of 128
    (lane-dense per-head slices, legal strided qkv blocks) near ~256 lanes;
    otherwise fold all heads (H//Hb == 1) so the qkv BlockSpec stays trivial.
    """
    aligned = [d for d in range(1, num_heads + 1)
               if num_heads % d == 0 and (d * head_dim) % 128 == 0
               and d * head_dim <= max_lanes]
    if aligned:
        for d in aligned:
            if d * head_dim >= target_lanes:
                return d
        return aligned[-1]
    return num_heads


def flow_attention(qkv, head_dim, heads_per_block, *, chunk=256):
    """qkv: (T, B, 3, H//Hb, Hb*D) -> attention output (T, B, H//Hb, Hb*D)."""
    T, B, three, HG, HD = qkv.shape
    assert three == 3
    Hb, D = heads_per_block, head_dim
    C = min(chunk, T)
    nc = pl.cdiv(T, C)

    idx = jnp.arange(C)
    tril = (idx[None, :] <= idx[:, None]).astype(jnp.float32)        # (C, C)
    head_id = jnp.arange(HD) // D
    seg = (head_id[:, None] == jnp.arange(Hb)[None, :]).astype(jnp.float32)
    segT = jnp.transpose(seg)                                         # (Hb, HD)

    const = lambda shape: pl.BlockSpec(shape, lambda b, g, c: (0, 0))
    qspec = pl.BlockSpec((C, None, None, None, HD), lambda b, g, c: (c, b, 0, g, 0))
    kspec = pl.BlockSpec((C, None, None, None, HD), lambda b, g, c: (c, b, 1, g, 0))
    vspec = pl.BlockSpec((C, None, None, None, HD), lambda b, g, c: (c, b, 2, g, 0))
    ospec = pl.BlockSpec((C, None, None, HD), lambda b, g, c: (c, b, g, 0))

    kernel = functools.partial(flow_attn_kernel, heads_per_block=Hb,
                               head_dim=D, chunk=C, seq_len=T)
    return pl.pallas_call(
        kernel,
        out_shape=jax.ShapeDtypeStruct((T, B, HG, HD), qkv.dtype),
        grid_spec=pltpu.PrefetchScalarGridSpec(
            num_scalar_prefetch=0,
            grid=(B, HG, nc),
            in_specs=[const((C, C)), const((HD, Hb)), const((Hb, HD)),
                      qspec, kspec, vspec],
            out_specs=ospec,
            scratch_shapes=[
                pltpu.VMEM((1, HD), jnp.float32),   # cumsum(k) carry
                pltpu.VMEM((1, HD), jnp.float32),   # cumsum(q) carry
                pltpu.VMEM((1, HD), jnp.float32),   # cumsum(k*bcast(src)) carry
                pltpu.VMEM((1, HD), jnp.float32),   # cumsum(q*bcast(sink)) carry
                pltpu.VMEM((1, Hb), jnp.float32),   # cumsum(exp(cons_src)) carry
                pltpu.VMEM((HD, D), jnp.float32),   # per-head K^T.V state
            ]),
        compiler_params=pltpu.CompilerParams(
            dimension_semantics=("parallel", "parallel", "arbitrary"),
            vmem_limit_bytes=_VMEM_LIMIT),
    )(tril, seg, segT, qkv, qkv, qkv)


# ----------------------------------------------------------------------------
# Module wrapper (parameter init + forward glue)
# ----------------------------------------------------------------------------
def xavier_uniform(key, shape, gain=1.0):
    fan_out, fan_in = shape
    bound = gain * math.sqrt(6.0 / (fan_in + fan_out))
    return jax.random.uniform(key, shape, jnp.float32, -bound, bound)


def init_params(key, embed_dim):
    """Stores fused, pre-transposed projection weights (no in-kernel .T)."""
    ks = jax.random.split(key, 8)
    g = 1.0 / math.sqrt(2.0)
    wq = xavier_uniform(ks[0], (embed_dim, embed_dim), g)
    wk = xavier_uniform(ks[1], (embed_dim, embed_dim), g)
    wv = xavier_uniform(ks[2], (embed_dim, embed_dim), g)
    wo = xavier_uniform(ks[3], (embed_dim, embed_dim), 1.0)
    bq = jax.random.uniform(ks[4], (embed_dim,), jnp.float32, -0.1, 0.1)
    bk = jax.random.uniform(ks[5], (embed_dim,), jnp.float32, -0.1, 0.1)
    bv = jax.random.uniform(ks[6], (embed_dim,), jnp.float32, -0.1, 0.1)
    bo = jnp.zeros((embed_dim,), jnp.float32)          # out_proj bias init = 0
    return {
        "w_qkv_t": jnp.concatenate([wq.T, wk.T, wv.T], axis=1),   # (E, 3E)
        "b_qkv": jnp.concatenate([bq, bk, bv]),                   # (3E,)
        "w_o_t": wo.T,                                            # (E, E)
        "b_o": bo,                                                # (E,)
    }


@functools.partial(jax.jit, static_argnums=(2, 3))
def multihead_flow_attention(query, params, num_heads, chunk=256):
    """Self-attention, causal flow attention (attn_mask path of the module).

    query: (tgt_len, bsz, embed_dim) -> (tgt_len, bsz, embed_dim)
    """
    T, B, E = query.shape
    H = num_heads
    D = E // H
    assert H * D == E
    Hb = _heads_per_block(H, D)
    HG = H // Hb
    HD = Hb * D

    # Fused QKV projection (one tiled Pallas matmul; x read from HBM once).
    x2d = query.reshape(T * B, E)
    qkv = linear(x2d, params["w_qkv_t"], params["b_qkv"])        # (T*B, 3E)

    # Free (row-major) reshape: no split / transpose HBM passes.
    qkv = qkv.reshape(T, B, 3, HG, HD)
    attn = flow_attention(qkv, D, Hb, chunk=chunk)                # (T, B, HG, HD)

    # Free reshape back to (T*B, E); matches torch transpose(0,1).view(T, B, E).
    attn = attn.reshape(T * B, E)
    out = linear(attn, params["w_o_t"], params["b_o"])
    return out.reshape(T, B, E)


# ----------------------------------------------------------------------------
# Pure-JAX reference (same math, no Pallas) for a sanity check
# ----------------------------------------------------------------------------
def _reference(query, params, num_heads):
    T, B, E = query.shape
    H, D = num_heads, E // num_heads
    eps = 1e-6
    x2d = query.reshape(T * B, E)
    qkv = x2d @ params["w_qkv_t"] + params["b_qkv"]
    q, k, v = qkv[:, :E], qkv[:, E:2 * E], qkv[:, 2 * E:]
    q = q.reshape(T, B * H, D).transpose(1, 0, 2)
    k = k.reshape(T, B * H, D).transpose(1, 0, 2)
    v = v.reshape(T, B * H, D).transpose(1, 0, 2)
    q, k = jax.nn.sigmoid(q), jax.nn.sigmoid(k)
    normal = (jnp.arange(T, dtype=jnp.float32) + 1.0)[None, :]
    sink_in = 1.0 / jnp.einsum("nld,nld->nl", q + eps, jnp.cumsum(k, 1) + eps)
    sink_in_keep = sink_in
    src_out = 1.0 / jnp.einsum("nld,nld->nl", k + eps, jnp.cumsum(q, 1) + eps)
    sink_in = sink_in * normal
    src_out = src_out * normal
    cons_sink = jnp.einsum("nld,nld->nl", q + eps,
                           jnp.cumsum(k * src_out[:, :, None], 1) + eps) / normal
    cons_src = jnp.einsum("nld,nld->nl", k + eps,
                          jnp.cumsum(q * sink_in[:, :, None], 1) + eps) / normal
    cons_src = jnp.clip(cons_src, -5.0, 5.0)
    sink_alloc = jax.nn.sigmoid(cons_sink)
    cons_src = jnp.exp(cons_src)
    src_comp = cons_src / jnp.cumsum(cons_src, -1) * normal
    qq = q * sink_in_keep[:, :, None]
    vv = v * src_comp[:, :, None]
    kv = jnp.cumsum(jnp.einsum("nld,nlm->nldm", k, vv), axis=1)
    attn = jnp.einsum("nld,nldm->nlm", qq, kv) * sink_alloc[:, :, None]
    attn = attn.transpose(1, 0, 2).reshape(T * B, E)
    out = attn @ params["w_o_t"] + params["b_o"]
    return out.reshape(T, B, E)


if __name__ == "__main__":
    embed_dim = 32
    num_heads = 4

    key = jax.random.PRNGKey(0)
    kp, kx1, kx2 = jax.random.split(key, 3)
    params = init_params(kp, embed_dim)

    # Case 1: single chunk (tgt_len=8, bsz=2).
    q1 = jax.random.normal(kx1, (8, 2, embed_dim), jnp.float32)
    out1 = jax.block_until_ready(multihead_flow_attention(q1, params, num_heads, 256))
    ref1 = _reference(q1, params, num_heads)
    assert out1.shape == q1.shape
    assert jnp.allclose(out1, ref1, rtol=1e-4, atol=1e-4), "mismatch (1 chunk)"

    # Case 2: multiple chunks + ragged tail (tgt_len=20, chunk=8) — exercises
    # the carried VMEM state and boundary masking.
    q2 = jax.random.normal(kx2, (20, 2, embed_dim), jnp.float32)
    out2 = jax.block_until_ready(multihead_flow_attention(q2, params, num_heads, 8))
    ref2 = _reference(q2, params, num_heads)
    assert out2.shape == q2.shape
    assert jnp.allclose(out2, ref2, rtol=1e-4, atol=1e-4), "mismatch (chunked)"

    print("KERNEL_OK")
</pallas_src>

<mosaic_0001>
module attributes {stable_mosaic.version = 11 : i64} {
  func.func @linear_kernel(%arg0: i32, %arg1: i32, %arg2: memref<16x32xf32, #tpu.memory_space<vmem>>, %arg3: memref<32x96xf32, #tpu.memory_space<vmem>>, %arg4: memref<1x96xf32, #tpu.memory_space<vmem>>, %arg5: memref<16x96xf32, #tpu.memory_space<vmem>>) attributes {dimension_semantics = [#tpu.dimension_semantics<parallel>, #tpu.dimension_semantics<parallel>], iteration_bounds = array<i64: 1, 1>, scalar_prefetch = 0 : i64, scratch_operands = 0 : i64, tpu.core_type = #tpu.core_type<tc>, window_params = [{transform_indices = @transform_0, window_bounds = array<i64: 16, 32>}, {transform_indices = @transform_1, window_bounds = array<i64: 32, 96>}, {transform_indices = @transform_2, window_bounds = array<i64: 1, 96>}, {transform_indices = @transform_3, window_bounds = array<i64: 16, 96>}]} {
    %c0 = arith.constant 0 : index
    %c0_0 = arith.constant 0 : index
    %0 = vector.load %arg2[%c0, %c0_0] : memref<16x32xf32, #tpu.memory_space<vmem>>, vector<16x32xf32>
    %c0_1 = arith.constant 0 : index
    %c0_2 = arith.constant 0 : index
    %1 = vector.load %arg3[%c0_1, %c0_2] : memref<32x96xf32, #tpu.memory_space<vmem>>, vector<32x96xf32>
    %cst = arith.constant dense<0.000000e+00> : vector<16x96xf32>
    %2 = tpu.matmul %0, %1, %cst {dimension_numbers = #tpu.dot_dimension_numbers<[1], [0], [0], [1], [0, 0, 1, 1], [], []>} : vector<16x32xf32>, vector<32x96xf32>, vector<16x96xf32> -> vector<16x96xf32>
    %c0_3 = arith.constant 0 : index
    %c0_4 = arith.constant 0 : index
    %3 = vector.load %arg4[%c0_3, %c0_4] : memref<1x96xf32, #tpu.memory_space<vmem>>, vector<1x96xf32>
    %4 = vector.broadcast %3 : vector<1x96xf32> to vector<16x96xf32>
    %5 = arith.addf %2, %4 : vector<16x96xf32>
    %c0_5 = arith.constant 0 : index
    %c0_6 = arith.constant 0 : index
    %6 = vector.load %arg5[%c0_5, %c0_6] : memref<16x96xf32, #tpu.memory_space<vmem>>, vector<16x96xf32>
    tpu.vector_store %arg5[%c0_5, %c0_6], %5 {strides = array<i32>} : memref<16x96xf32, #tpu.memory_space<vmem>>, vector<16x96xf32>,
    return
  }
  func.func @transform_0(%arg0: i32, %arg1: i32) -> (i32, i32) {
    %c0_i32 = arith.constant 0 : i32
    %c0_i32_0 = arith.constant 0 : i32
    return %arg1, %c0_i32 : i32, i32
  }
  func.func @transform_1(%arg0: i32, %arg1: i32) -> (i32, i32) {
    %c0_i32 = arith.constant 0 : i32
    %c0_i32_0 = arith.constant 0 : i32
    return %c0_i32, %arg0 : i32, i32
  }
  func.func @transform_2(%arg0: i32, %arg1: i32) -> (i32, i32) {
    %c0_i32 = arith.constant 0 : i32
    %c0_i32_0 = arith.constant 0 : i32
    return %c0_i32, %arg0 : i32, i32
  }
  func.func @transform_3(%arg0: i32, %arg1: i32) -> (i32, i32) {
    %c0_i32 = arith.constant 0 : i32
    return %arg1, %arg0 : i32, i32
  }
}

module attributes {stable_mosaic.version = 11 : i64} {
  func.func @flow_attn_kernel(%arg0: i32, %arg1: i32, %arg2: i32, %arg3: memref<8x8xf32, #tpu.memory_space<vmem>>, %arg4: memref<32x4xf32, #tpu.memory_space<vmem>>, %arg5: memref<4x32xf32, #tpu.memory_space<vmem>>, %arg6: memref<8x1x1x1x32xf32, #tpu.memory_space<vmem>>, %arg7: memref<8x1x1x1x32xf32, #tpu.memory_space<vmem>>, %arg8: memref<8x1x1x1x32xf32, #tpu.memory_space<vmem>>, %arg9: memref<8x1x1x32xf32, #tpu.memory_space<vmem>>, %arg10: memref<1x32xf32, #tpu.memory_space<vmem>>, %arg11: memref<1x32xf32, #tpu.memory_space<vmem>>, %arg12: memref<1x32xf32, #tpu.memory_space<vmem>>, %arg13: memref<1x32xf32, #tpu.memory_space<vmem>>, %arg14: memref<1x4xf32, #tpu.memory_space<vmem>>, %arg15: memref<32x8xf32, #tpu.memory_space<vmem>>) attributes {dimension_semantics = [#tpu.dimension_semantics<parallel>, #tpu.dimension_semantics<parallel>, #tpu.dimension_semantics<arbitrary>], iteration_bounds = array<i64: 2, 1, 1>, scalar_prefetch = 0 : i64, scratch_operands = 6 : i64, tpu.core_type = #tpu.core_type<tc>, window_params = [{pipeline_mode = #tpu.pipeline_mode<synchronous>, transform_indices = @transform_0, window_bounds = array<i64: 8, 8>}, {pipeline_mode = #tpu.pipeline_mode<synchronous>, transform_indices = @transform_1, window_bounds = array<i64: 32, 4>}, {pipeline_mode = #tpu.pipeline_mode<synchronous>, transform_indices = @transform_2, window_bounds = array<i64: 4, 32>}, {transform_indices = @transform_3, window_bounds = array<i64: 8, 1, 1, 1, 32>}, {transform_indices = @transform_4, window_bounds = array<i64: 8, 1, 1, 1, 32>}, {transform_indices = @transform_5, window_bounds = array<i64: 8, 1, 1, 1, 32>}, {transform_indices = @transform_6, window_bounds = array<i64: 8, 1, 1, 32>}]} {
    %c0_i32 = arith.constant 0 : i32
    %0 = arith.cmpi eq, %arg2, %c0_i32 : i32
    %1 = arith.extui %0 : i1 to i32
    %c0_i32_0 = arith.constant 0 : i32
    %2 = arith.cmpi ne, %1, %c0_i32_0 : i32
    scf.if %2 {
      %cst_112 = arith.constant 0.000000e+00 : f32
      %189 = vector.broadcast %cst_112 : f32 to vector<1x32xf32>
      %c0_113 = arith.constant 0 : index
      %c0_114 = arith.constant 0 : index
      %190 = vector.load %arg10[%c0_113, %c0_114] : memref<1x32xf32, #tpu.memory_space<vmem>>, vector<1x32xf32>
      tpu.vector_store %arg10[%c0_113, %c0_114], %189 {strides = array<i32>} : memref<1x32xf32, #tpu.memory_space<vmem>>, vector<1x32xf32>,
      %cst_115 = arith.constant 0.000000e+00 : f32
      %191 = vector.broadcast %cst_115 : f32 to vector<1x32xf32>
      %c0_116 = arith.constant 0 : index
      %c0_117 = arith.constant 0 : index
      %192 = vector.load %arg11[%c0_116, %c0_117] : memref<1x32xf32, #tpu.memory_space<vmem>>, vector<1x32xf32>
      tpu.vector_store %arg11[%c0_116, %c0_117], %191 {strides = array<i32>} : memref<1x32xf32, #tpu.memory_space<vmem>>, vector<1x32xf32>,
      %cst_118 = arith.constant 0.000000e+00 : f32
      %193 = vector.broadcast %cst_118 : f32 to vector<1x32xf32>
      %c0_119 = arith.constant 0 : index
      %c0_120 = arith.constant 0 : index
      %194 = vector.load %arg12[%c0_119, %c0_120] : memref<1x32xf32, #tpu.memory_space<vmem>>, vector<1x32xf32>
      tpu.vector_store %arg12[%c0_119, %c0_120], %193 {strides = array<i32>} : memref<1x32xf32, #tpu.memory_space<vmem>>, vector<1x32xf32>,
      %cst_121 = arith.constant 0.000000e+00 : f32
      %195 = vector.broadcast %cst_121 : f32 to vector<1x32xf32>
      %c0_122 = arith.constant 0 : index
      %c0_123 = arith.constant 0 : index
      %196 = vector.load %arg13[%c0_122, %c0_123] : memref<1x32xf32, #tpu.memory_space<vmem>>, vector<1x32xf32>
      tpu.vector_store %arg13[%c0_122, %c0_123], %195 {strides = array<i32>} : memref<1x32xf32, #tpu.memory_space<vmem>>, vector<1x32xf32>,
      %cst_124 = arith.constant 0.000000e+00 : f32
      %197 = vector.broadcast %cst_124 : f32 to vector<1x4xf32>
      %c0_125 = arith.constant 0 : index
      %c0_126 = arith.constant 0 : index
      %198 = vector.load %arg14[%c0_125, %c0_126] : memref<1x4xf32, #tpu.memory_space<vmem>>, vector<1x4xf32>
      tpu.vector_store %arg14[%c0_125, %c0_126], %197 {strides = array<i32>} : memref<1x4xf32, #tpu.memory_space<vmem>>, vector<1x4xf32>,
      %cst_127 = arith.constant 0.000000e+00 : f32
      %199 = vector.broadcast %cst_127 : f32 to vector<32x8xf32>
      %c0_128 = arith.constant 0 : index
      %c0_129 = arith.constant 0 : index
      %200 = vector.load %arg15[%c0_128, %c0_129] : memref<32x8xf32, #tpu.memory_space<vmem>>, vector<32x8xf32>
      tpu.vector_store %arg15[%c0_128, %c0_129], %199 {strides = array<i32>} : memref<32x8xf32, #tpu.memory_space<vmem>>, vector<32x8xf32>,
    } else {
    }
    %c0 = arith.constant 0 : index
    %c0_1 = arith.constant 0 : index
    %3 = vector.load %arg3[%c0, %c0_1] : memref<8x8xf32, #tpu.memory_space<vmem>>, vector<8x8xf32>
    %c0_2 = arith.constant 0 : index
    %c0_3 = arith.constant 0 : index
    %4 = vector.load %arg4[%c0_2, %c0_3] : memref<32x4xf32, #tpu.memory_space<vmem>>, vector<32x4xf32>
    %c0_4 = arith.constant 0 : index
    %c0_5 = arith.constant 0 : index
    %5 = vector.load %arg5[%c0_4, %c0_5] : memref<4x32xf32, #tpu.memory_space<vmem>>, vector<4x32xf32>
    %c0_6 = arith.constant 0 : index
    %c0_7 = arith.constant 0 : index
    %c0_8 = arith.constant 0 : index
    %c0_9 = arith.constant 0 : index
    %c0_10 = arith.constant 0 : index
    %6 = vector.load %arg6[%c0_6, %c0_7, %c0_8, %c0_9, %c0_10] : memref<8x1x1x1x32xf32, #tpu.memory_space<vmem>>, vector<8x1x1x1x32xf32>
    %7 = vector.shape_cast %6 : vector<8x1x1x1x32xf32> to vector<8x32xf32>
    %8 = arith.negf %7 : vector<8x32xf32>
    %9 = math.exp %8 : vector<8x32xf32>
    %cst = arith.constant 1.000000e+00 : f32
    %10 = vector.broadcast %cst : f32 to vector<8x32xf32>
    %11 = arith.addf %10, %9 : vector<8x32xf32>
    %12 = arith.divf %10, %11 : vector<8x32xf32>
    %c0_11 = arith.constant 0 : index
    %c0_12 = arith.constant 0 : index
    %c0_13 = arith.constant 0 : index
    %c0_14 = arith.constant 0 : index
    %c0_15 = arith.constant 0 : index
    %13 = vector.load %arg7[%c0_11, %c0_12, %c0_13, %c0_14, %c0_15] : memref<8x1x1x1x32xf32, #tpu.memory_space<vmem>>, vector<8x1x1x1x32xf32>
    %14 = vector.shape_cast %13 : vector<8x1x1x1x32xf32> to vector<8x32xf32>
    %15 = arith.negf %14 : vector<8x32xf32>
    %16 = math.exp %15 : vector<8x32xf32>
    %cst_16 = arith.constant 1.000000e+00 : f32
    %17 = vector.broadcast %cst_16 : f32 to vector<8x32xf32>
    %18 = arith.addf %17, %16 : vector<8x32xf32>
    %19 = arith.divf %17, %18 : vector<8x32xf32>
    %c0_17 = arith.constant 0 : index
    %c0_18 = arith.constant 0 : index
    %c0_19 = arith.constant 0 : index
    %c0_20 = arith.constant 0 : index
    %c0_21 = arith.constant 0 : index
    %20 = vector.load %arg8[%c0_17, %c0_18, %c0_19, %c0_20, %c0_21] : memref<8x1x1x1x32xf32, #tpu.memory_space<vmem>>, vector<8x1x1x1x32xf32>
    %21 = vector.shape_cast %20 : vector<8x1x1x1x32xf32> to vector<8x32xf32>
    %22 = tpu.iota {dimensions = array<i32: 0>} : vector<8x1xi32>
    %23 = arith.sitofp %22 : vector<8x1xi32> to vector<8x1xf32>
    %cst_22 = arith.constant 1.000000e+00 : f32
    %24 = vector.broadcast %cst_22 : f32 to vector<8x1xf32>
    %25 = arith.addf %23, %24 : vector<8x1xf32>
    %c8_i32 = arith.constant 8 : i32
    %26 = arith.muli %arg2, %c8_i32 : i32
    %27 = arith.sitofp %26 : i32 to f32
    %28 = vector.broadcast %27 : f32 to vector<8x1xf32>
    %29 = arith.addf %25, %28 : vector<8x1xf32>
    %30 = tpu.reciprocal %29 : vector<8x1xf32> -> vector<8x1xf32>
    %cst_23 = arith.constant dense<0.000000e+00> : vector<8x32xf32>
    %31 = tpu.matmul %3, %19, %cst_23 {dimension_numbers = #tpu.dot_dimension_numbers<[1], [0], [0], [1], [0, 0, 1, 1], [], []>} : vector<8x8xf32>, vector<8x32xf32>, vector<8x32xf32> -> vector<8x32xf32>
    %c0_24 = arith.constant 0 : index
    %c0_25 = arith.constant 0 : index
    %32 = vector.load %arg10[%c0_24, %c0_25] : memref<1x32xf32, #tpu.memory_space<vmem>>, vector<1x32xf32>
    %33 = vector.broadcast %32 : vector<1x32xf32> to vector<8x32xf32>
    %34 = arith.addf %31, %33 : vector<8x32xf32>
    %cst_26 = arith.constant dense<0.000000e+00> : vector<8x32xf32>
    %35 = tpu.matmul %3, %12, %cst_26 {dimension_numbers = #tpu.dot_dimension_numbers<[1], [0], [0], [1], [0, 0, 1, 1], [], []>} : vector<8x8xf32>, vector<8x32xf32>, vector<8x32xf32> -> vector<8x32xf32>
    %c0_27 = arith.constant 0 : index
    %c0_28 = arith.constant 0 : index
    %36 = vector.load %arg11[%c0_27, %c0_28] : memref<1x32xf32, #tpu.memory_space<vmem>>, vector<1x32xf32>
    %37 = vector.broadcast %36 : vector<1x32xf32> to vector<8x32xf32>
    %38 = arith.addf %35, %37 : vector<8x32xf32>
    %cst_29 = arith.constant 9.99999997E-7 : f32
    %39 = vector.broadcast %cst_29 : f32 to vector<8x32xf32>
    %40 = arith.addf %12, %39 : vector<8x32xf32>
    %cst_30 = arith.constant 9.99999997E-7 : f32
    %41 = vector.broadcast %cst_30 : f32 to vector<8x32xf32>
    %42 = arith.addf %34, %41 : vector<8x32xf32>
    %43 = arith.mulf %40, %42 : vector<8x32xf32>
    %cst_31 = arith.constant dense<0.000000e+00> : vector<8x4xf32>
    %44 = tpu.matmul %43, %4, %cst_31 {dimension_numbers = #tpu.dot_dimension_numbers<[1], [0], [0], [1], [0, 0, 1, 1], [], []>} : vector<8x32xf32>, vector<32x4xf32>, vector<8x4xf32> -> vector<8x4xf32>
    %45 = tpu.reciprocal %44 : vector<8x4xf32> -> vector<8x4xf32>
    %cst_32 = arith.constant 9.99999997E-7 : f32
    %46 = vector.broadcast %cst_32 : f32 to vector<8x32xf32>
    %47 = arith.addf %19, %46 : vector<8x32xf32>
    %cst_33 = arith.constant 9.99999997E-7 : f32
    %48 = vector.broadcast %cst_33 : f32 to vector<8x32xf32>
    %49 = arith.addf %38, %48 : vector<8x32xf32>
    %50 = arith.mulf %47, %49 : vector<8x32xf32>
    %cst_34 = arith.constant dense<0.000000e+00> : vector<8x4xf32>
    %51 = tpu.matmul %50, %4, %cst_34 {dimension_numbers = #tpu.dot_dimension_numbers<[1], [0], [0], [1], [0, 0, 1, 1], [], []>} : vector<8x32xf32>, vector<32x4xf32>, vector<8x4xf32> -> vector<8x4xf32>
    %52 = tpu.reciprocal %51 : vector<8x4xf32> -> vector<8x4xf32>
    %53 = vector.broadcast %29 : vector<8x1xf32> to vector<8x4xf32>
    %54 = arith.mulf %45, %53 : vector<8x4xf32>
    %55 = vector.broadcast %29 : vector<8x1xf32> to vector<8x4xf32>
    %56 = arith.mulf %52, %55 : vector<8x4xf32>
    %cst_35 = arith.constant dense<0.000000e+00> : vector<8x32xf32>
    %57 = tpu.matmul %56, %5, %cst_35 {dimension_numbers = #tpu.dot_dimension_numbers<[1], [0], [0], [1], [0, 0, 1, 1], [], []>} : vector<8x4xf32>, vector<4x32xf32>, vector<8x32xf32> -> vector<8x32xf32>
    %58 = arith.mulf %19, %57 : vector<8x32xf32>
    %cst_36 = arith.constant dense<0.000000e+00> : vector<8x32xf32>
    %59 = tpu.matmul %54, %5, %cst_36 {dimension_numbers = #tpu.dot_dimension_numbers<[1], [0], [0], [1], [0, 0, 1, 1], [], []>} : vector<8x4xf32>, vector<4x32xf32>, vector<8x32xf32> -> vector<8x32xf32>
    %60 = arith.mulf %12, %59 : vector<8x32xf32>
    %cst_37 = arith.constant dense<0.000000e+00> : vector<8x32xf32>
    %61 = tpu.matmul %3, %58, %cst_37 {dimension_numbers = #tpu.dot_dimension_numbers<[1], [0], [0], [1], [0, 0, 1, 1], [], []>} : vector<8x8xf32>, vector<8x32xf32>, vector<8x32xf32> -> vector<8x32xf32>
    %c0_38 = arith.constant 0 : index
    %c0_39 = arith.constant 0 : index
    %62 = vector.load %arg12[%c0_38, %c0_39] : memref<1x32xf32, #tpu.memory_space<vmem>>, vector<1x32xf32>
    %63 = vector.broadcast %62 : vector<1x32xf32> to vector<8x32xf32>
    %64 = arith.addf %61, %63 : vector<8x32xf32>
    %cst_40 = arith.constant dense<0.000000e+00> : vector<8x32xf32>
    %65 = tpu.matmul %3, %60, %cst_40 {dimension_numbers = #tpu.dot_dimension_numbers<[1], [0], [0], [1], [0, 0, 1, 1], [], []>} : vector<8x8xf32>, vector<8x32xf32>, vector<8x32xf32> -> vector<8x32xf32>
    %c0_41 = arith.constant 0 : index
    %c0_42 = arith.constant 0 : index
    %66 = vector.load %arg13[%c0_41, %c0_42] : memref<1x32xf32, #tpu.memory_space<vmem>>, vector<1x32xf32>
    %67 = vector.broadcast %66 : vector<1x32xf32> to vector<8x32xf32>
    %68 = arith.addf %65, %67 : vector<8x32xf32>
    %cst_43 = arith.constant 9.99999997E-7 : f32
    %69 = vector.broadcast %cst_43 : f32 to vector<8x32xf32>
    %70 = arith.addf %12, %69 : vector<8x32xf32>
    %cst_44 = arith.constant 9.99999997E-7 : f32
    %71 = vector.broadcast %cst_44 : f32 to vector<8x32xf32>
    %72 = arith.addf %64, %71 : vector<8x32xf32>
    %73 = arith.mulf %70, %72 : vector<8x32xf32>
    %cst_45 = arith.constant dense<0.000000e+00> : vector<8x4xf32>
    %74 = tpu.matmul %73, %4, %cst_45 {dimension_numbers = #tpu.dot_dimension_numbers<[1], [0], [0], [1], [0, 0, 1, 1], [], []>} : vector<8x32xf32>, vector<32x4xf32>, vector<8x4xf32> -> vector<8x4xf32>
    %75 = vector.broadcast %30 : vector<8x1xf32> to vector<8x4xf32>
    %76 = arith.mulf %74, %75 : vector<8x4xf32>
    %cst_46 = arith.constant 9.99999997E-7 : f32
    %77 = vector.broadcast %cst_46 : f32 to vector<8x32xf32>
    %78 = arith.addf %19, %77 : vector<8x32xf32>
    %cst_47 = arith.constant 9.99999997E-7 : f32
    %79 = vector.broadcast %cst_47 : f32 to vector<8x32xf32>
    %80 = arith.addf %68, %79 : vector<8x32xf32>
    %81 = arith.mulf %78, %80 : vector<8x32xf32>
    %cst_48 = arith.constant dense<0.000000e+00> : vector<8x4xf32>
    %82 = tpu.matmul %81, %4, %cst_48 {dimension_numbers = #tpu.dot_dimension_numbers<[1], [0], [0], [1], [0, 0, 1, 1], [], []>} : vector<8x32xf32>, vector<32x4xf32>, vector<8x4xf32> -> vector<8x4xf32>
    %83 = vector.broadcast %30 : vector<8x1xf32> to vector<8x4xf32>
    %84 = arith.mulf %82, %83 : vector<8x4xf32>
    %cst_49 = arith.constant -5.000000e+00 : f32
    %cst_50 = arith.constant 5.000000e+00 : f32
    %85 = vector.broadcast %cst_49 : f32 to vector<8x4xf32>
    %86 = arith.maximumf %85, %84 : vector<8x4xf32>
    %87 = vector.broadcast %cst_50 : f32 to vector<8x4xf32>
    %88 = arith.minimumf %87, %86 : vector<8x4xf32>
    %89 = arith.negf %76 : vector<8x4xf32>
    %90 = math.exp %89 : vector<8x4xf32>
    %cst_51 = arith.constant 1.000000e+00 : f32
    %91 = vector.broadcast %cst_51 : f32 to vector<8x4xf32>
    %92 = arith.addf %91, %90 : vector<8x4xf32>
    %93 = arith.divf %91, %92 : vector<8x4xf32>
    %94 = math.exp %88 : vector<8x4xf32>
    %cst_52 = arith.constant dense<0.000000e+00> : vector<8x4xf32>
    %95 = tpu.matmul %3, %94, %cst_52 {dimension_numbers = #tpu.dot_dimension_numbers<[1], [0], [0], [1], [0, 0, 1, 1], [], []>} : vector<8x8xf32>, vector<8x4xf32>, vector<8x4xf32> -> vector<8x4xf32>
    %c0_53 = arith.constant 0 : index
    %c0_54 = arith.constant 0 : index
    %96 = vector.load %arg14[%c0_53, %c0_54] : memref<1x4xf32, #tpu.memory_space<vmem>>, vector<1x4xf32>
    %97 = vector.broadcast %96 : vector<1x4xf32> to vector<8x4xf32>
    %98 = arith.addf %95, %97 : vector<8x4xf32>
    %99 = tpu.reciprocal %98 : vector<8x4xf32> -> vector<8x4xf32>
    %100 = arith.mulf %94, %99 : vector<8x4xf32>
    %101 = vector.broadcast %29 : vector<8x1xf32> to vector<8x4xf32>
    %102 = arith.mulf %100, %101 : vector<8x4xf32>
    %cst_55 = arith.constant dense<0.000000e+00> : vector<8x32xf32>
    %103 = tpu.matmul %45, %5, %cst_55 {dimension_numbers = #tpu.dot_dimension_numbers<[1], [0], [0], [1], [0, 0, 1, 1], [], []>} : vector<8x4xf32>, vector<4x32xf32>, vector<8x32xf32> -> vector<8x32xf32>
    %104 = arith.mulf %12, %103 : vector<8x32xf32>
    %cst_56 = arith.constant dense<0.000000e+00> : vector<8x32xf32>
    %105 = tpu.matmul %102, %5, %cst_56 {dimension_numbers = #tpu.dot_dimension_numbers<[1], [0], [0], [1], [0, 0, 1, 1], [], []>} : vector<8x4xf32>, vector<4x32xf32>, vector<8x32xf32> -> vector<8x32xf32>
    %106 = arith.mulf %21, %105 : vector<8x32xf32>
    %107 = vector.extract_strided_slice %34 {offsets = [7, 0], sizes = [1, 32], strides = [1, 1]} : vector<8x32xf32> to vector<1x32xf32>
    %c0_57 = arith.constant 0 : index
    %c0_58 = arith.constant 0 : index
    %108 = vector.load %arg10[%c0_57, %c0_58] : memref<1x32xf32, #tpu.memory_space<vmem>>, vector<1x32xf32>
    tpu.vector_store %arg10[%c0_57, %c0_58], %107 {strides = array<i32>} : memref<1x32xf32, #tpu.memory_space<vmem>>, vector<1x32xf32>,
    %109 = vector.extract_strided_slice %38 {offsets = [7, 0], sizes = [1, 32], strides = [1, 1]} : vector<8x32xf32> to vector<1x32xf32>
    %c0_59 = arith.constant 0 : index
    %c0_60 = arith.constant 0 : index
    %110 = vector.load %arg11[%c0_59, %c0_60] : memref<1x32xf32, #tpu.memory_space<vmem>>, vector<1x32xf32>
    tpu.vector_store %arg11[%c0_59, %c0_60], %109 {strides = array<i32>} : memref<1x32xf32, #tpu.memory_space<vmem>>, vector<1x32xf32>,
    %111 = vector.extract_strided_slice %64 {offsets = [7, 0], sizes = [1, 32], strides = [1, 1]} : vector<8x32xf32> to vector<1x32xf32>
    %c0_61 = arith.constant 0 : index
    %c0_62 = arith.constant 0 : index
    %112 = vector.load %arg12[%c0_61, %c0_62] : memref<1x32xf32, #tpu.memory_space<vmem>>, vector<1x32xf32>
    tpu.vector_store %arg12[%c0_61, %c0_62], %111 {strides = array<i32>} : memref<1x32xf32, #tpu.memory_space<vmem>>, vector<1x32xf32>,
    %113 = vector.extract_strided_slice %68 {offsets = [7, 0], sizes = [1, 32], strides = [1, 1]} : vector<8x32xf32> to vector<1x32xf32>
    %c0_63 = arith.constant 0 : index
    %c0_64 = arith.constant 0 : index
    %114 = vector.load %arg13[%c0_63, %c0_64] : memref<1x32xf32, #tpu.memory_space<vmem>>, vector<1x32xf32>
    tpu.vector_store %arg13[%c0_63, %c0_64], %113 {strides = array<i32>} : memref<1x32xf32, #tpu.memory_space<vmem>>, vector<1x32xf32>,
    %115 = vector.extract_strided_slice %98 {offsets = [7, 0], sizes = [1, 4], strides = [1, 1]} : vector<8x4xf32> to vector<1x4xf32>
    %c0_65 = arith.constant 0 : index
    %c0_66 = arith.constant 0 : index
    %116 = vector.load %arg14[%c0_65, %c0_66] : memref<1x4xf32, #tpu.memory_space<vmem>>, vector<1x4xf32>
    tpu.vector_store %arg14[%c0_65, %c0_66], %115 {strides = array<i32>} : memref<1x4xf32, #tpu.memory_space<vmem>>, vector<1x4xf32>,
    %117 = vector.extract_strided_slice %104 {offsets = [0, 0], sizes = [8, 8], strides = [1, 1]} : vector<8x32xf32> to vector<8x8xf32>
    %118 = vector.extract_strided_slice %19 {offsets = [0, 0], sizes = [8, 8], strides = [1, 1]} : vector<8x32xf32> to vector<8x8xf32>
    %119 = vector.extract_strided_slice %106 {offsets = [0, 0], sizes = [8, 8], strides = [1, 1]} : vector<8x32xf32> to vector<8x8xf32>
    %c0_67 = arith.constant 0 : index
    %c0_68 = arith.constant 0 : index
    %120 = vector.load %arg15[%c0_67, %c0_68] : memref<32x8xf32, #tpu.memory_space<vmem>>, vector<8x8xf32>
    %cst_69 = arith.constant dense<0.000000e+00> : vector<8x8xf32>
    %121 = tpu.matmul %117, %118, %cst_69 {dimension_numbers = #tpu.dot_dimension_numbers<[1], [1], [0], [0], [0, 0, 1, 0], [], []>} : vector<8x8xf32>, vector<8x8xf32>, vector<8x8xf32> -> vector<8x8xf32>
    %122 = arith.mulf %121, %3 : vector<8x8xf32>
    %cst_70 = arith.constant dense<0.000000e+00> : vector<8x8xf32>
    %123 = tpu.matmul %122, %119, %cst_70 {dimension_numbers = #tpu.dot_dimension_numbers<[1], [0], [0], [1], [0, 0, 1, 1], [], []>} : vector<8x8xf32>, vector<8x8xf32>, vector<8x8xf32> -> vector<8x8xf32>
    %cst_71 = arith.constant dense<0.000000e+00> : vector<8x8xf32>
    %124 = tpu.matmul %117, %120, %cst_71 {dimension_numbers = #tpu.dot_dimension_numbers<[1], [0], [0], [1], [0, 0, 1, 1], [], []>} : vector<8x8xf32>, vector<8x8xf32>, vector<8x8xf32> -> vector<8x8xf32>
    %125 = arith.addf %123, %124 : vector<8x8xf32>
    %126 = vector.extract_strided_slice %93 {offsets = [0, 0], sizes = [8, 1], strides = [1, 1]} : vector<8x4xf32> to vector<8x1xf32>
    %127 = vector.broadcast %126 : vector<8x1xf32> to vector<8x8xf32>
    %128 = arith.mulf %125, %127 : vector<8x8xf32>
    %c0_72 = arith.constant 0 : index
    %c0_73 = arith.constant 0 : index
    %c0_74 = arith.constant 0 : index
    %c0_75 = arith.constant 0 : index
    %129 = vector.load %arg9[%c0_72, %c0_73, %c0_74, %c0_75] : memref<8x1x1x32xf32, #tpu.memory_space<vmem>>, vector<8x1x1x8xf32>
    %130 = vector.shape_cast %129 : vector<8x1x1x8xf32> to vector<8x8xf32>
    %131 = vector.shape_cast %128 : vector<8x8xf32> to vector<8x1x1x8xf32>
    tpu.vector_store %arg9[%c0_72, %c0_73, %c0_74, %c0_75], %131 {strides = array<i32>} : memref<8x1x1x32xf32, #tpu.memory_space<vmem>>, vector<8x1x1x8xf32>,
    %cst_76 = arith.constant dense<0.000000e+00> : vector<8x8xf32>
    %132 = tpu.matmul %118, %119, %cst_76 {dimension_numbers = #tpu.dot_dimension_numbers<[0], [0], [1], [1], [0, 1, 1, 1], [], []>} : vector<8x8xf32>, vector<8x8xf32>, vector<8x8xf32> -> vector<8x8xf32>
    %133 = arith.addf %120, %132 : vector<8x8xf32>
    %c0_77 = arith.constant 0 : index
    %c0_78 = arith.constant 0 : index
    %134 = vector.load %arg15[%c0_77, %c0_78] : memref<32x8xf32, #tpu.memory_space<vmem>>, vector<8x8xf32>
    tpu.vector_store %arg15[%c0_77, %c0_78], %133 {strides = array<i32>} : memref<32x8xf32, #tpu.memory_space<vmem>>, vector<8x8xf32>,
    %135 = vector.extract_strided_slice %104 {offsets = [0, 8], sizes = [8, 8], strides = [1, 1]} : vector<8x32xf32> to vector<8x8xf32>
    %136 = vector.extract_strided_slice %19 {offsets = [0, 8], sizes = [8, 8], strides = [1, 1]} : vector<8x32xf32> to vector<8x8xf32>
    %137 = vector.extract_strided_slice %106 {offsets = [0, 8], sizes = [8, 8], strides = [1, 1]} : vector<8x32xf32> to vector<8x8xf32>
    %c8 = arith.constant 8 : index
    %c0_79 = arith.constant 0 : index
    %138 = vector.load %arg15[%c8, %c0_79] : memref<32x8xf32, #tpu.memory_space<vmem>>, vector<8x8xf32>
    %cst_80 = arith.constant dense<0.000000e+00> : vector<8x8xf32>
    %139 = tpu.matmul %135, %136, %cst_80 {dimension_numbers = #tpu.dot_dimension_numbers<[1], [1], [0], [0], [0, 0, 1, 0], [], []>} : vector<8x8xf32>, vector<8x8xf32>, vector<8x8xf32> -> vector<8x8xf32>
    %140 = arith.mulf %139, %3 : vector<8x8xf32>
    %cst_81 = arith.constant dense<0.000000e+00> : vector<8x8xf32>
    %141 = tpu.matmul %140, %137, %cst_81 {dimension_numbers = #tpu.dot_dimension_numbers<[1], [0], [0], [1], [0, 0, 1, 1], [], []>} : vector<8x8xf32>, vector<8x8xf32>, vector<8x8xf32> -> vector<8x8xf32>
    %cst_82 = arith.constant dense<0.000000e+00> : vector<8x8xf32>
    %142 = tpu.matmul %135, %138, %cst_82 {dimension_numbers = #tpu.dot_dimension_numbers<[1], [0], [0], [1], [0, 0, 1, 1], [], []>} : vector<8x8xf32>, vector<8x8xf32>, vector<8x8xf32> -> vector<8x8xf32>
    %143 = arith.addf %141, %142 : vector<8x8xf32>
    %144 = vector.extract_strided_slice %93 {offsets = [0, 1], sizes = [8, 1], strides = [1, 1]} : vector<8x4xf32> to vector<8x1xf32>
    %145 = vector.broadcast %144 : vector<8x1xf32> to vector<8x8xf32>
    %146 = arith.mulf %143, %145 : vector<8x8xf32>
    %c0_83 = arith.constant 0 : index
    %c0_84 = arith.constant 0 : index
    %c0_85 = arith.constant 0 : index
    %c8_86 = arith.constant 8 : index
    %147 = vector.load %arg9[%c0_83, %c0_84, %c0_85, %c8_86] : memref<8x1x1x32xf32, #tpu.memory_space<vmem>>, vector<8x1x1x8xf32>
    %148 = vector.shape_cast %147 : vector<8x1x1x8xf32> to vector<8x8xf32>
    %149 = vector.shape_cast %146 : vector<8x8xf32> to vector<8x1x1x8xf32>
    tpu.vector_store %arg9[%c0_83, %c0_84, %c0_85, %c8_86], %149 {strides = array<i32>} : memref<8x1x1x32xf32, #tpu.memory_space<vmem>>, vector<8x1x1x8xf32>,
    %cst_87 = arith.constant dense<0.000000e+00> : vector<8x8xf32>
    %150 = tpu.matmul %136, %137, %cst_87 {dimension_numbers = #tpu.dot_dimension_numbers<[0], [0], [1], [1], [0, 1, 1, 1], [], []>} : vector<8x8xf32>, vector<8x8xf32>, vector<8x8xf32> -> vector<8x8xf32>
    %151 = arith.addf %138, %150 : vector<8x8xf32>
    %c8_88 = arith.constant 8 : index
    %c0_89 = arith.constant 0 : index
    %152 = vector.load %arg15[%c8_88, %c0_89] : memref<32x8xf32, #tpu.memory_space<vmem>>, vector<8x8xf32>
    tpu.vector_store %arg15[%c8_88, %c0_89], %151 {strides = array<i32>} : memref<32x8xf32, #tpu.memory_space<vmem>>, vector<8x8xf32>,
    %153 = vector.extract_strided_slice %104 {offsets = [0, 16], sizes = [8, 8], strides = [1, 1]} : vector<8x32xf32> to vector<8x8xf32>
    %154 = vector.extract_strided_slice %19 {offsets = [0, 16], sizes = [8, 8], strides = [1, 1]} : vector<8x32xf32> to vector<8x8xf32>
    %155 = vector.extract_strided_slice %106 {offsets = [0, 16], sizes = [8, 8], strides = [1, 1]} : vector<8x32xf32> to vector<8x8xf32>
    %c16 = arith.constant 16 : index
    %c0_90 = arith.constant 0 : index
    %156 = vector.load %arg15[%c16, %c0_90] : memref<32x8xf32, #tpu.memory_space<vmem>>, vector<8x8xf32>
    %cst_91 = arith.constant dense<0.000000e+00> : vector<8x8xf32>
    %157 = tpu.matmul %153, %154, %cst_91 {dimension_numbers = #tpu.dot_dimension_numbers<[1], [1], [0], [0], [0, 0, 1, 0], [], []>} : vector<8x8xf32>, vector<8x8xf32>, vector<8x8xf32> -> vector<8x8xf32>
    %158 = arith.mulf %157, %3 : vector<8x8xf32>
    %cst_92 = arith.constant dense<0.000000e+00> : vector<8x8xf32>
    %159 = tpu.matmul %158, %155, %cst_92 {dimension_numbers = #tpu.dot_dimension_numbers<[1], [0], [0], [1], [0, 0, 1, 1], [], []>} : vector<8x8xf32>, vector<8x8xf32>, vector<8x8xf32> -> vector<8x8xf32>
    %cst_93 = arith.constant dense<0.000000e+00> : vector<8x8xf32>
    %160 = tpu.matmul %153, %156, %cst_93 {dimension_numbers = #tpu.dot_dimension_numbers<[1], [0], [0], [1], [0, 0, 1, 1], [], []>} : vector<8x8xf32>, vector<8x8xf32>, vector<8x8xf32> -> vector<8x8xf32>
    %161 = arith.addf %159, %160 : vector<8x8xf32>
    %162 = vector.extract_strided_slice %93 {offsets = [0, 2], sizes = [8, 1], strides = [1, 1]} : vector<8x4xf32> to vector<8x1xf32>
    %163 = vector.broadcast %162 : vector<8x1xf32> to vector<8x8xf32>
    %164 = arith.mulf %161, %163 : vector<8x8xf32>
    %c0_94 = arith.constant 0 : index
    %c0_95 = arith.constant 0 : index
    %c0_96 = arith.constant 0 : index
    %c16_97 = arith.constant 16 : index
    %165 = vector.load %arg9[%c0_94, %c0_95, %c0_96, %c16_97] : memref<8x1x1x32xf32, #tpu.memory_space<vmem>>, vector<8x1x1x8xf32>
    %166 = vector.shape_cast %165 : vector<8x1x1x8xf32> to vector<8x8xf32>
    %167 = vector.shape_cast %164 : vector<8x8xf32> to vector<8x1x1x8xf32>
    tpu.vector_store %arg9[%c0_94, %c0_95, %c0_96, %c16_97], %167 {strides = array<i32>} : memref<8x1x1x32xf32, #tpu.memory_space<vmem>>, vector<8x1x1x8xf32>,
    %cst_98 = arith.constant dense<0.000000e+00> : vector<8x8xf32>
    %168 = tpu.matmul %154, %155, %cst_98 {dimension_numbers = #tpu.dot_dimension_numbers<[0], [0], [1], [1], [0, 1, 1, 1], [], []>} : vector<8x8xf32>, vector<8x8xf32>, vector<8x8xf32> -> vector<8x8xf32>
    %169 = arith.addf %156, %168 : vector<8x8xf32>
    %c16_99 = arith.constant 16 : index
    %c0_100 = arith.constant 0 : index
    %170 = vector.load %arg15[%c16_99, %c0_100] : memref<32x8xf32, #tpu.memory_space<vmem>>, vector<8x8xf32>
    tpu.vector_store %arg15[%c16_99, %c0_100], %169 {strides = array<i32>} : memref<32x8xf32, #tpu.memory_space<vmem>>, vector<8x8xf32>,
    %171 = vector.extract_strided_slice %104 {offsets = [0, 24], sizes = [8, 8], strides = [1, 1]} : vector<8x32xf32> to vector<8x8xf32>
    %172 = vector.extract_strided_slice %19 {offsets = [0, 24], sizes = [8, 8], strides = [1, 1]} : vector<8x32xf32> to vector<8x8xf32>
    %173 = vector.extract_strided_slice %106 {offsets = [0, 24], sizes = [8, 8], strides = [1, 1]} : vector<8x32xf32> to vector<8x8xf32>
    %c24 = arith.constant 24 : index
    %c0_101 = arith.constant 0 : index
    %174 = vector.load %arg15[%c24, %c0_101] : memref<32x8xf32, #tpu.memory_space<vmem>>, vector<8x8xf32>
    %cst_102 = arith.constant dense<0.000000e+00> : vector<8x8xf32>
    %175 = tpu.matmul %171, %172, %cst_102 {dimension_numbers = #tpu.dot_dimension_numbers<[1], [1], [0], [0], [0, 0, 1, 0], [], []>} : vector<8x8xf32>, vector<8x8xf32>, vector<8x8xf32> -> vector<8x8xf32>
    %176 = arith.mulf %175, %3 : vector<8x8xf32>
    %cst_103 = arith.constant dense<0.000000e+00> : vector<8x8xf32>
    %177 = tpu.matmul %176, %173, %cst_103 {dimension_numbers = #tpu.dot_dimension_numbers<[1], [0], [0], [1], [0, 0, 1, 1], [], []>} : vector<8x8xf32>, vector<8x8xf32>, vector<8x8xf32> -> vector<8x8xf32>
    %cst_104 = arith.constant dense<0.000000e+00> : vector<8x8xf32>
    %178 = tpu.matmul %171, %174, %cst_104 {dimension_numbers = #tpu.dot_dimension_numbers<[1], [0], [0], [1], [0, 0, 1, 1], [], []>} : vector<8x8xf32>, vector<8x8xf32>, vector<8x8xf32> -> vector<8x8xf32>
    %179 = arith.addf %177, %178 : vector<8x8xf32>
    %180 = vector.extract_strided_slice %93 {offsets = [0, 3], sizes = [8, 1], strides = [1, 1]} : vector<8x4xf32> to vector<8x1xf32>
    %181 = vector.broadcast %180 : vector<8x1xf32> to vector<8x8xf32>
    %182 = arith.mulf %179, %181 : vector<8x8xf32>
    %c0_105 = arith.constant 0 : index
    %c0_106 = arith.constant 0 : index
    %c0_107 = arith.constant 0 : index
    %c24_108 = arith.constant 24 : index
    %183 = vector.load %arg9[%c0_105, %c0_106, %c0_107, %c24_108] : memref<8x1x1x32xf32, #tpu.memory_space<vmem>>, vector<8x1x1x8xf32>
    %184 = vector.shape_cast %183 : vector<8x1x1x8xf32> to vector<8x8xf32>
    %185 = vector.shape_cast %182 : vector<8x8xf32> to vector<8x1x1x8xf32>
    tpu.vector_store %arg9[%c0_105, %c0_106, %c0_107, %c24_108], %185 {strides = array<i32>} : memref<8x1x1x32xf32, #tpu.memory_space<vmem>>, vector<8x1x1x8xf32>,
    %cst_109 = arith.constant dense<0.000000e+00> : vector<8x8xf32>
    %186 = tpu.matmul %172, %173, %cst_109 {dimension_numbers = #tpu.dot_dimension_numbers<[0], [0], [1], [1], [0, 1, 1, 1], [], []>} : vector<8x8xf32>, vector<8x8xf32>, vector<8x8xf32> -> vector<8x8xf32>
    %187 = arith.addf %174, %186 : vector<8x8xf32>
    %c24_110 = arith.constant 24 : index
    %c0_111 = arith.constant 0 : index
    %188 = vector.load %arg15[%c24_110, %c0_111] : memref<32x8xf32, #tpu.memory_space<vmem>>, vector<8x8xf32>
    tpu.vector_store %arg15[%c24_110, %c0_111], %187 {strides = array<i32>} : memref<32x8xf32, #tpu.memory_space<vmem>>, vector<8x8xf32>,
    return
  }
  func.func @transform_0(%arg0: i32, %arg1: i32, %arg2: i32) -> (i32, i32) {
    %c0_i32 = arith.constant 0 : i32
    %c0_i32_0 = arith.constant 0 : i32
    %c0_i32_1 = arith.constant 0 : i32
    return %c0_i32, %c0_i32_0 : i32, i32
  }
  func.func @transform_1(%arg0: i32, %arg1: i32, %arg2: i32) -> (i32, i32) {
    %c0_i32 = arith.constant 0 : i32
    %c0_i32_0 = arith.constant 0 : i32
    %c0_i32_1 = arith.constant 0 : i32
    return %c0_i32, %c0_i32_0 : i32, i32
  }
  func.func @transform_2(%arg0: i32, %arg1: i32, %arg2: i32) -> (i32, i32) {
    %c0_i32 = arith.constant 0 : i32
    %c0_i32_0 = arith.constant 0 : i32
    %c0_i32_1 = arith.constant 0 : i32
    return %c0_i32, %c0_i32_0 : i32, i32
  }
  func.func @transform_3(%arg0: i32, %arg1: i32, %arg2: i32) -> (i32, i32, i32, i32, i32) {
    %c0_i32 = arith.constant 0 : i32
    %c0_i32_0 = arith.constant 0 : i32
    %c0_i32_1 = arith.constant 0 : i32
    return %arg2, %arg0, %c0_i32, %arg1, %c0_i32_0 : i32, i32, i32, i32, i32
  }
  func.func @transform_4(%arg0: i32, %arg1: i32, %arg2: i32) -> (i32, i32, i32, i32, i32) {
    %c1_i32 = arith.constant 1 : i32
    %c0_i32 = arith.constant 0 : i32
    %c0_i32_0 = arith.constant 0 : i32
    return %arg2, %arg0, %c1_i32, %arg1, %c0_i32 : i32, i32, i32, i32, i32
  }
  func.func @transform_5(%arg0: i32, %arg1: i32, %arg2: i32) -> (i32, i32, i32, i32, i32) {
    %c2_i32 = arith.constant 2 : i32
    %c0_i32 = arith.constant 0 : i32
    %c0_i32_0 = arith.constant 0 : i32
    return %arg2, %arg0, %c2_i32, %arg1, %c0_i32 : i32, i32, i32, i32, i32
  }
  func.func @transform_6(%arg0: i32, %arg1: i32, %arg2: i32) -> (i32, i32, i32, i32) {
    %c0_i32 = arith.constant 0 : i32
    %c0_i32_0 = arith.constant 0 : i32
    return %arg2, %arg0, %arg1, %c0_i32 : i32, i32, i32, i32
  }
}

module attributes {stable_mosaic.version = 11 : i64} {
  func.func @linear_kernel(%arg0: i32, %arg1: i32, %arg2: memref<16x32xf32, #tpu.memory_space<vmem>>, %arg3: memref<32x32xf32, #tpu.memory_space<vmem>>, %arg4: memref<1x32xf32, #tpu.memory_space<vmem>>, %arg5: memref<16x32xf32, #tpu.memory_space<vmem>>) attributes {dimension_semantics = [#tpu.dimension_semantics<parallel>, #tpu.dimension_semantics<parallel>], iteration_bounds = array<i64: 1, 1>, scalar_prefetch = 0 : i64, scratch_operands = 0 : i64, tpu.core_type = #tpu.core_type<tc>, window_params = [{transform_indices = @transform_0, window_bounds = array<i64: 16, 32>}, {transform_indices = @transform_1, window_bounds = array<i64: 32, 32>}, {transform_indices = @transform_2, window_bounds = array<i64: 1, 32>}, {transform_indices = @transform_3, window_bounds = array<i64: 16, 32>}]} {
    %c0 = arith.constant 0 : index
    %c0_0 = arith.constant 0 : index
    %0 = vector.load %arg2[%c0, %c0_0] : memref<16x32xf32, #tpu.memory_space<vmem>>, vector<16x32xf32>
    %c0_1 = arith.constant 0 : index
    %c0_2 = arith.constant 0 : index
    %1 = vector.load %arg3[%c0_1, %c0_2] : memref<32x32xf32, #tpu.memory_space<vmem>>, vector<32x32xf32>
    %cst = arith.constant dense<0.000000e+00> : vector<16x32xf32>
    %2 = tpu.matmul %0, %1, %cst {dimension_numbers = #tpu.dot_dimension_numbers<[1], [0], [0], [1], [0, 0, 1, 1], [], []>} : vector<16x32xf32>, vector<32x32xf32>, vector<16x32xf32> -> vector<16x32xf32>
    %c0_3 = arith.constant 0 : index
    %c0_4 = arith.constant 0 : index
    %3 = vector.load %arg4[%c0_3, %c0_4] : memref<1x32xf32, #tpu.memory_space<vmem>>, vector<1x32xf32>
    %4 = vector.broadcast %3 : vector<1x32xf32> to vector<16x32xf32>
    %5 = arith.addf %2, %4 : vector<16x32xf32>
    %c0_5 = arith.constant 0 : index
    %c0_6 = arith.constant 0 : index
    %6 = vector.load %arg5[%c0_5, %c0_6] : memref<16x32xf32, #tpu.memory_space<vmem>>, vector<16x32xf32>
    tpu.vector_store %arg5[%c0_5, %c0_6], %5 {strides = array<i32>} : memref<16x32xf32, #tpu.memory_space<vmem>>, vector<16x32xf32>,
    return
  }
  func.func @transform_0(%arg0: i32, %arg1: i32) -> (i32, i32) {
    %c0_i32 = arith.constant 0 : i32
    %c0_i32_0 = arith.constant 0 : i32
    return %arg1, %c0_i32 : i32, i32
  }
  func.func @transform_1(%arg0: i32, %arg1: i32) -> (i32, i32) {
    %c0_i32 = arith.constant 0 : i32
    %c0_i32_0 = arith.constant 0 : i32
    return %c0_i32, %arg0 : i32, i32
  }
  func.func @transform_2(%arg0: i32, %arg1: i32) -> (i32, i32) {
    %c0_i32 = arith.constant 0 : i32
    %c0_i32_0 = arith.constant 0 : i32
    return %c0_i32, %arg0 : i32, i32
  }
  func.func @transform_3(%arg0: i32, %arg1: i32) -> (i32, i32) {
    %c0_i32 = arith.constant 0 : i32
    return %arg1, %arg0 : i32, i32
  }
}

</mosaic_0001>

<llo_original>
// kernel: multihead_flow_attention.3
$region0: #{multihead_flow_attention.3}
  #allocation0 [shape = 'u32[]', space=smem, size = 0x4, offset = 0x4, fixed_abs, tag = 'smem constant byte address 0x4 - core index']
  #allocation1 [shape = 'u32[144,128]{1,0:T(1,128)}', space=vmem, size = 0x12000, scoped, tag = 'internal scratch']
  %s0 = inlined_call_operand.hbm [shape: f32[16,32], index: 0, kind: input, shape index: {}]
  %s1 = inlined_call_operand.vmem [shape: f32[32,96], index: 1, kind: input, shape index: {}]
  %s2 = inlined_call_operand.vmem [shape: f32[1,96], index: 2, kind: input, shape index: {}]
  %s3 = inlined_call_operand.vmem [shape: f32[16,96], index: 3, kind: output, shape index: {}]
  %s4 = sld [smem:[#allocation0]]
  $region26: #{multihead_flow_attention.3} parent=0
    _
  %s6 = ssub.s32 1, %s4
  %s7 = scalar_select 0, %s6, %s4
  $region1: #{multihead_flow_attention.3} parent=0
    #allocation2 [shape = 'u8[8192]{0}', space=vmem, size = 0x2000, scoped, tag = 'input window, operand 0, single buffered']
    #allocation3 [shape = 's32[1]{0}', space=sflag, size = 0x4, scoped, tag = 'scoped memory for multihead_flow_attention.3']
    %8 = vsyncpa [#allocation3], 0
    // Predicated region
    $region2: #{multihead_flow_attention.3} parent=1 // pred_check
      _
    $region3: #{multihead_flow_attention.3} parent=1 // pred_check_branch
      %10 = sbr.rel (0) target = $region5
    $region4: #{multihead_flow_attention.3} parent=1 // pred_region
      %s12 = ssub.s32 256, 256
      %13 = vsyncadd [#allocation3], %s12
      %s14 = sshll.u32 [#allocation2], 4
      %s15 = int_to_ptr.vmem [resolvable:$true] %s14
      %20 = dma.hbm_to_vmem [thread:$0]  %s0, 256, %s15, [#allocation3], 128, 128, 8
    $region5: #{multihead_flow_attention.3} parent=1 // pred_fallthru
      _
    // Predicated region
    $region6: #{multihead_flow_attention.3} parent=1 // pred_check
      _
    $region7: #{multihead_flow_attention.3} parent=1 // pred_check_branch
      %22 = sbr.rel (0) target = $region9
    $region8: #{multihead_flow_attention.3} parent=1 // pred_region
      _
    $region9: #{multihead_flow_attention.3} parent=1 // pred_fallthru
      _
    // Predicated region
    $region10: #{multihead_flow_attention.3} parent=1 // pred_check
      _
    $region11: #{multihead_flow_attention.3} parent=1 // pred_check_branch
      %24 = sbr.rel (0) target = $region13
    $region12: #{multihead_flow_attention.3} parent=1 // pred_region
      _
    $region13: #{multihead_flow_attention.3} parent=1 // pred_fallthru
      _
    // Predicated region
    $region14: #{multihead_flow_attention.3} parent=1 // pred_check
      _
    $region15: #{multihead_flow_attention.3} parent=1 // pred_check_branch
      %26 = sbr.rel (0) target = $region17
    $region16: #{multihead_flow_attention.3} parent=1 // pred_region
      %27 = dma.done [#allocation3], 256
    $region17: #{multihead_flow_attention.3} parent=1 // pred_fallthru
      _
    %v28 = vld [vmem:[#allocation2] sm:$0xff]
    %v29 = vld [vmem:[#allocation2 + $0x8] sm:$0xff]
    %v30 = vld [vmem:[%s1] sm:$0xff]
    %v31 = vld [vmem:[%s1 + $0x8] sm:$0xff]
    %v32 = vld [vmem:[%s1 + $0x10] sm:$0xff]
    %v33 = vld [vmem:[%s1 + $0x18] sm:$0xff]
    %v34 = vld [vmem:[%s2] sm:$0x1]
    %v36 = vlaneseq
    %v37 = vshrl.u32 %v36, 7
    %v38 = vsub.s32 0, %v37
    %v39 = vrot.slane %v34, %v38
    %vm41 = vcmask 261120
    %v43 = vsel %vm41, %v28, 0
    %v46 = vsel %vm41, %v29, 0
    %48 = vmatprep.subr.mxu0 0.0
    %49 = vmatpush1.msra.mxu0 %v30
    %50 = vmatprep.subr.mxu0 0.0
    %51 = vmatpush1.msra.mxu0 %v31
    %52 = vmatprep.subr.mxu0 0.0
    %53 = vmatpush1.msra.mxu0 %v32
    %54 = vmatprep.subr.mxu0 0.0
    %55 = vmatpush1.msra.mxu0 %v33
    %56 = vmatprep.subr.mxu0 0.0
    %57 = vmatpush1.msra.mxu0 0.0
    %58 = vmatprep.subr.mxu0 0.0
    %59 = vmatpush1.msra.mxu0 0.0
    %60 = vmatprep.subr.mxu0 0.0
    %61 = vmatpush1.msra.mxu0 0.0
    %62 = vmatprep.subr.mxu0 0.0
    %63 = vmatpush1.msra.mxu0 0.0
    %64 = vmatprep.subr.mxu0 0.0
    %65 = vmatpush1.msra.mxu0 0.0
    %66 = vmatprep.subr.mxu0 0.0
    %67 = vmatpush1.msra.mxu0 0.0
    %68 = vmatprep.subr.mxu0 0.0
    %69 = vmatpush1.msra.mxu0 0.0
    %70 = vmatprep.subr.mxu0 0.0
    %71 = vmatpush1.msra.mxu0 0.0
    %72 = vmatprep.subr.mxu0 0.0
    %73 = vmatpush1.msra.mxu0 0.0
    %74 = vmatprep.subr.mxu0 0.0
    %75 = vmatpush1.msra.mxu0 0.0
    %76 = vmatprep.subr.mxu0 0.0
    %77 = vmatpush1.msra.mxu0 0.0
    %78 = vmatprep.subr.mxu0 0.0
    %79 = vmatpush1.msra.mxu0 0.0
    %80 = vmatprep.subr.mxu0 0.0
    %81 = vmatpush1.msra.mxu0 0.0
    %82 = vmatprep.subr.mxu0 0.0
    %83 = vmatpush1.msra.mxu0 0.0
    %84 = vmatprep.subr.mxu0 0.0
    %85 = vmatpush1.msra.mxu0 0.0
    %86 = vmatprep.subr.mxu0 0.0
    %87 = vmatpush1.msra.mxu0 0.0
    %88 = vmatprep.subr.mxu0 0.0
    %89 = vmatpush1.msra.mxu0 0.0
    %90 = vmatprep.subr.mxu0 0.0
    %91 = vmatpush1.msra.mxu0 0.0
    %92 = vmatprep.subr.mxu0 0.0
    %93 = vmatpush1.msra.mxu0 0.0
    %94 = vmatprep.subr.mxu0 0.0
    %95 = vmatpush1.msra.mxu0 0.0
    %96 = vmatprep.subr.mxu0 0.0
    %97 = vmatpush1.msra.mxu0 0.0
    %98 = vmatprep.subr.mxu0 0.0
    %99 = vmatpush1.msra.mxu0 0.0
    %100 = vmatprep.subr.mxu0 0.0
    %101 = vmatpush1.msra.mxu0 0.0
    %102 = vmatprep.subr.mxu0 0.0
    %103 = vmatpush1.msra.mxu0 0.0
    %104 = vmatprep.subr.mxu0 0.0
    %105 = vmatpush1.msra.mxu0 0.0
    %106 = vmatprep.subr.mxu0 0.0
    %107 = vmatpush1.msra.mxu0 0.0
    %108 = vmatprep.subr.mxu0 0.0
    %109 = vmatpush1.msra.mxu0 0.0
    %110 = vmatprep.subr.mxu0 0.0
    %111 = vmatpush1.msra.mxu0 0.0
    %112 = vmatprep.mubr.f32.mxu0 0.0
    %113 = vmatmul.mubr.f32.gmra.mrb[0].mxu0 %v43
    %v114 = vpop.f32.mrb[0].mxu0
    %v115 = vadd.f32 %v39, %v114
    %v116 = vpop.f32.mrb[0].mxu0
    %117 = vmatprep.mubr.f32.mxu0 0.0
    %118 = vmatmul.mubr.f32.gmra.mrb[0].mxu0 %v46
    %v119 = vpop.f32.mrb[0].mxu0
    %v120 = vadd.f32 %v39, %v119
    %v121 = vpop.f32.mrb[0].mxu0
    %122 = vdwg.mxu0
    %vm123 = vcmask 785408
    %124 = vst.msk [vmem:[%s3] sm:$0xff] %vm123, %v115
    %125 = vst.msk [vmem:[%s3 + $0x8] sm:$0xff] %vm123, %v120
    // Predicated region
    $region18: #{multihead_flow_attention.3} parent=1 // pred_check
      _
    $region19: #{multihead_flow_attention.3} parent=1 // pred_check_branch
      %127 = sbr.rel (0) target = $region21
    $region20: #{multihead_flow_attention.3} parent=1 // pred_region
      _
    $region21: #{multihead_flow_attention.3} parent=1 // pred_fallthru
      _
    // Predicated region
    $region22: #{multihead_flow_attention.3} parent=1 // pred_check
      _
    $region23: #{multihead_flow_attention.3} parent=1 // pred_check_branch
      %129 = sbr.rel (0) target = $region25
    $region24: #{multihead_flow_attention.3} parent=1 // pred_region
      _
    $region25: #{multihead_flow_attention.3} parent=1 // pred_fallthru
      _
    %130 = vsyncpa [#allocation3], 1

// kernel: multihead_flow_attention.5
$region0: #{multihead_flow_attention.5}
  #allocation0 [shape = 'u32[]', space=smem, size = 0x4, offset = 0x4, fixed_abs, tag = 'smem constant byte address 0x4 - core index']
  #allocation1 [shape = 'u32[144,128]{1,0:T(1,128)}', space=vmem, size = 0x12000, scoped, tag = 'internal scratch']
  %s0 = inlined_call_operand.vmem [shape: f32[16,32], index: 0, kind: input, shape index: {}]
  %s1 = inlined_call_operand.vmem [shape: f32[32,32], index: 1, kind: input, shape index: {}]
  %s2 = inlined_call_operand.vmem [shape: f32[1,32], index: 2, kind: input, shape index: {}]
  %s3 = inlined_call_operand.hbm [shape: f32[16,32], index: 3, kind: output, shape index: {}]
  %s4 = sld [smem:[#allocation0]]
  $region22: #{multihead_flow_attention.5} parent=0
    _
  %s6 = ssub.s32 1, %s4
  %s7 = scalar_select 0, %s6, %s4
  $region1: #{multihead_flow_attention.5} parent=0
    #allocation2 [shape = 'u8[8192]{0}', space=vmem, size = 0x2000, scoped, tag = 'output window, operand 0, single buffered']
    #allocation3 [shape = 's32[1]{0}', space=sflag, size = 0x4, scoped, tag = 'scoped memory for multihead_flow_attention.5']
    %8 = vsyncpa [#allocation3], 0
    // Predicated region
    $region2: #{multihead_flow_attention.5} parent=1 // pred_check
      _
    $region3: #{multihead_flow_attention.5} parent=1 // pred_check_branch
      %10 = sbr.rel (0) target = $region5
    $region4: #{multihead_flow_attention.5} parent=1 // pred_region
      _
    $region5: #{multihead_flow_attention.5} parent=1 // pred_fallthru
      _
    // Predicated region
    $region6: #{multihead_flow_attention.5} parent=1 // pred_check
      _
    $region7: #{multihead_flow_attention.5} parent=1 // pred_check_branch
      %12 = sbr.rel (0) target = $region9
    $region8: #{multihead_flow_attention.5} parent=1 // pred_region
      _
    $region9: #{multihead_flow_attention.5} parent=1 // pred_fallthru
      _
    // Predicated region
    $region10: #{multihead_flow_attention.5} parent=1 // pred_check
      _
    $region11: #{multihead_flow_attention.5} parent=1 // pred_check_branch
      %14 = sbr.rel (0) target = $region13
    $region12: #{multihead_flow_attention.5} parent=1 // pred_region
      _
    $region13: #{multihead_flow_attention.5} parent=1 // pred_fallthru
      _
    %v15 = vld [vmem:[%s0] sm:$0xff]
    %v16 = vld [vmem:[%s0 + $0x8] sm:$0xff]
    %v17 = vld [vmem:[%s1] sm:$0xff]
    %v18 = vld [vmem:[%s1 + $0x8] sm:$0xff]
    %v19 = vld [vmem:[%s1 + $0x10] sm:$0xff]
    %v20 = vld [vmem:[%s1 + $0x18] sm:$0xff]
    %v21 = vld [vmem:[%s2] sm:$0x1]
    %v23 = vlaneseq
    %v24 = vshrl.u32 %v23, 7
    %v25 = vsub.s32 0, %v24
    %v26 = vrot.slane %v21, %v25
    %vm28 = vcmask 261120
    %v30 = vsel %vm28, %v15, 0
    %v33 = vsel %vm28, %v16, 0
    %35 = vmatprep.subr.mxu0 0.0
    %36 = vmatpush1.msra.mxu0 %v17
    %37 = vmatprep.subr.mxu0 0.0
    %38 = vmatpush1.msra.mxu0 %v18
    %39 = vmatprep.subr.mxu0 0.0
    %40 = vmatpush1.msra.mxu0 %v19
    %41 = vmatprep.subr.mxu0 0.0
    %42 = vmatpush1.msra.mxu0 %v20
    %43 = vmatprep.subr.mxu0 0.0
    %44 = vmatpush1.msra.mxu0 0.0
    %45 = vmatprep.subr.mxu0 0.0
    %46 = vmatpush1.msra.mxu0 0.0
    %47 = vmatprep.subr.mxu0 0.0
    %48 = vmatpush1.msra.mxu0 0.0
    %49 = vmatprep.subr.mxu0 0.0
    %50 = vmatpush1.msra.mxu0 0.0
    %51 = vmatprep.subr.mxu0 0.0
    %52 = vmatpush1.msra.mxu0 0.0
    %53 = vmatprep.subr.mxu0 0.0
    %54 = vmatpush1.msra.mxu0 0.0
    %55 = vmatprep.subr.mxu0 0.0
    %56 = vmatpush1.msra.mxu0 0.0
    %57 = vmatprep.subr.mxu0 0.0
    %58 = vmatpush1.msra.mxu0 0.0
    %59 = vmatprep.subr.mxu0 0.0
    %60 = vmatpush1.msra.mxu0 0.0
    %61 = vmatprep.subr.mxu0 0.0
    %62 = vmatpush1.msra.mxu0 0.0
    %63 = vmatprep.subr.mxu0 0.0
    %64 = vmatpush1.msra.mxu0 0.0
    %65 = vmatprep.subr.mxu0 0.0
    %66 = vmatpush1.msra.mxu0 0.0
    %67 = vmatprep.subr.mxu0 0.0
    %68 = vmatpush1.msra.mxu0 0.0
    %69 = vmatprep.subr.mxu0 0.0
    %70 = vmatpush1.msra.mxu0 0.0
    %71 = vmatprep.subr.mxu0 0.0
    %72 = vmatpush1.msra.mxu0 0.0
    %73 = vmatprep.subr.mxu0 0.0
    %74 = vmatpush1.msra.mxu0 0.0
    %75 = vmatprep.subr.mxu0 0.0
    %76 = vmatpush1.msra.mxu0 0.0
    %77 = vmatprep.subr.mxu0 0.0
    %78 = vmatpush1.msra.mxu0 0.0
    %79 = vmatprep.subr.mxu0 0.0
    %80 = vmatpush1.msra.mxu0 0.0
    %81 = vmatprep.subr.mxu0 0.0
    %82 = vmatpush1.msra.mxu0 0.0
    %83 = vmatprep.subr.mxu0 0.0
    %84 = vmatpush1.msra.mxu0 0.0
    %85 = vmatprep.subr.mxu0 0.0
    %86 = vmatpush1.msra.mxu0 0.0
    %87 = vmatprep.subr.mxu0 0.0
    %88 = vmatpush1.msra.mxu0 0.0
    %89 = vmatprep.subr.mxu0 0.0
    %90 = vmatpush1.msra.mxu0 0.0
    %91 = vmatprep.subr.mxu0 0.0
    %92 = vmatpush1.msra.mxu0 0.0
    %93 = vmatprep.subr.mxu0 0.0
    %94 = vmatpush1.msra.mxu0 0.0
    %95 = vmatprep.subr.mxu0 0.0
    %96 = vmatpush1.msra.mxu0 0.0
    %97 = vmatprep.subr.mxu0 0.0
    %98 = vmatpush1.msra.mxu0 0.0
    %99 = vmatprep.mubr.f32.mxu0 0.0
    %100 = vmatmul.mubr.f32.gmra.mrb[0].mxu0 %v30
    %v101 = vpop.f32.mrb[0].mxu0
    %v102 = vadd.f32 %v26, %v101
    %v103 = vpop.f32.mrb[0].mxu0
    %104 = vmatprep.mubr.f32.mxu0 0.0
    %105 = vmatmul.mubr.f32.gmra.mrb[0].mxu0 %v33
    %v106 = vpop.f32.mrb[0].mxu0
    %v107 = vadd.f32 %v26, %v106
    %v108 = vpop.f32.mrb[0].mxu0
    %109 = vdwg.mxu0
    %110 = vst.msk [vmem:[#allocation2] sm:$0xff] %vm28, %v102
    %111 = vst.msk [vmem:[#allocation2 + $0x8] sm:$0xff] %vm28, %v107
    // Predicated region
    $region14: #{multihead_flow_attention.5} parent=1 // pred_check
      _
    $region15: #{multihead_flow_attention.5} parent=1 // pred_check_branch
      %113 = sbr.rel (0) target = $region17
    $region16: #{multihead_flow_attention.5} parent=1 // pred_region
      %s115 = ssub.s32 256, 256
      %116 = vsyncadd [#allocation3], %s115
      %s117 = sshll.u32 [#allocation2], 4
      %s118 = int_to_ptr.vmem [resolvable:$true] %s117
      %123 = dma.vmem_to_hbm [thread:$0]  %s118, 256, %s3, [#allocation3], 128, 128, 8
    $region17: #{multihead_flow_attention.5} parent=1 // pred_fallthru
      _
    // Predicated region
    $region18: #{multihead_flow_attention.5} parent=1 // pred_check
      _
    $region19: #{multihead_flow_attention.5} parent=1 // pred_check_branch
      %125 = sbr.rel (0) target = $region21
    $region20: #{multihead_flow_attention.5} parent=1 // pred_region
      %126 = dma.done [#allocation3], 256
    $region21: #{multihead_flow_attention.5} parent=1 // pred_fallthru
      _
    %127 = vsyncpa [#allocation3], 1

// kernel: multihead_flow_attention.4
$region0: #{multihead_flow_attention.4}
  #allocation0 [shape = 'u32[]', space=smem, size = 0x4, offset = 0x4, fixed_abs, tag = 'smem constant byte address 0x4 - core index']
  #allocation1 [shape = 'u32[144,128]{1,0:T(1,128)}', space=vmem, size = 0x12000, scoped, tag = 'internal scratch']
  #allocation2 [shape = 'f32[1,32]{1,0:T(1,128)}', space=vmem, size = 0x200, scoped, tag = 'scratch operand']
  #allocation3 [shape = 'f32[1,32]{1,0:T(1,128)}', space=vmem, size = 0x200, scoped, tag = 'scratch operand']
  #allocation4 [shape = 'f32[1,32]{1,0:T(1,128)}', space=vmem, size = 0x200, scoped, tag = 'scratch operand']
  #allocation5 [shape = 'f32[1,32]{1,0:T(1,128)}', space=vmem, size = 0x200, scoped, tag = 'scratch operand']
  #allocation6 [shape = 'f32[1,4]{1,0:T(1,128)}', space=vmem, size = 0x200, scoped, tag = 'scratch operand']
  #allocation7 [shape = 'f32[32,8]{1,0:T(8,128)}', space=vmem, size = 0x4000, scoped, tag = 'scratch operand']
  %s0 = inlined_call_operand.vmem [shape: f32[8,8], index: 0, kind: input, shape index: {}]
  %s1 = inlined_call_operand.vmem [shape: f32[32,4], index: 1, kind: input, shape index: {}]
  %s2 = inlined_call_operand.vmem [shape: f32[4,32], index: 2, kind: input, shape index: {}]
  %s3 = inlined_call_operand.vmem [shape: f32[8,2,3,1,32], index: 3, kind: input, shape index: {}, may-alias: {3,4,5}]
  %s4 = inlined_call_operand.vmem [shape: f32[8,2,3,1,32], index: 4, kind: input, shape index: {}, may-alias: {3,4,5}]
  %s5 = inlined_call_operand.vmem [shape: f32[8,2,3,1,32], index: 5, kind: input, shape index: {}, may-alias: {3,4,5}]
  %s6 = inlined_call_operand.vmem [shape: f32[8,2,1,32], index: 6, kind: output, shape index: {}]
  %s7 = sld [smem:[#allocation0]]
  $region221: #{multihead_flow_attention.4} parent=0
    _
  %s9 = ssub.s32 1, %s7
  %s10 = scalar_select 0, %s9, %s7
  $region1: #{multihead_flow_attention.4} parent=0
    #allocation8 [shape = 'u8[8192]{0}', space=vmem, size = 0x2000, scoped, tag = 'input window, operand 3']
    #allocation9 [shape = 'u8[8192]{0}', space=vmem, size = 0x2000, scoped, tag = 'input window, operand 4']
    #allocation10 [shape = 'u8[8192]{0}', space=vmem, size = 0x2000, scoped, tag = 'input window, operand 5']
    #allocation11 [shape = 'u8[8192]{0}', space=vmem, size = 0x2000, scoped, tag = 'output window, operand 0']
    loop: start=0, step=1, limit=4
    $region2: #{multihead_flow_attention.4} parent=1 // loop_pre_header
      _
    $region3: #{multihead_flow_attention.4} parent=1 // loop_header
      %s12 = sphi 0, %s16
      %p13 = scmp.ge.s32.totalorder %s12, 4
      %s19 = sphi 0, %s38
      %s20 = sphi 0, %s34
      %s21 = sphi 0, %s30
      %s22 = sphi 0, %s19
      %s23 = sphi 0, %s20
      %s24 = sphi 0, %s21
      %s25 = sphi 0, %s22
      %s26 = sphi 0, %s23
      %s27 = sphi 0, %s24
      %s39 = sphi 0, %s39
      %s41 = sphi 0, %s39
      %s42 = sphi 0, %s41
      %s56 = sphi 0, %s42
      %s60 = sphi 0, %s60
      %s62 = sphi 0, %s60
      %s63 = sphi 0, %s62
      %s77 = sphi 0, %s63
      %s81 = sphi 0, %s81
      %s83 = sphi 0, %s81
      %s84 = sphi 0, %s83
      %s98 = sphi 0, %s84
      %s108 = sphi 0, %s110
      %s111 = sphi 0, %s108
      %s112 = sphi 0, %s111
      %s128 = sphi 0, %s112
      %s138 = sphi 0, %s140
      %s141 = sphi 0, %s138
      %s142 = sphi 0, %s141
      %s158 = sphi 0, %s142
      %s168 = sphi 0, %s170
      %s171 = sphi 0, %s168
      %s172 = sphi 0, %s171
      %s188 = sphi 0, %s172
      %s198 = sphi 0, %s200
      %s201 = sphi 0, %s198
      %s202 = sphi 0, %s201
      %s218 = sphi 0, %s202
    $region4: #{multihead_flow_attention.4} parent=1 // loop_header_branch
      %15 = sbr.rel (%p13) target = $region8
    $region5: #{multihead_flow_attention.4} parent=1 // loop_body
      %s17 = ssub.s32 %s12, 1
      %s18 = ssub.s32 %s12, 2
      %s28 = sadd.s32 1, %s21
      %p29 = scmp.ge.s32.totalorder %s28, 1
      %s30 = scalar_select %p29, 0, %s28
      %s31 = sadd.s32 1, %s20
      %s32 = scalar_select %p29, %s31, %s20
      %p33 = scmp.ge.s32.totalorder %s32, 1
      %s34 = scalar_select %p33, 0, %s32
      %s35 = sadd.s32 1, %s19
      %s36 = scalar_select %p33, %s35, %s19
      %p37 = scmp.ge.s32.totalorder %s36, 2
      %s38 = scalar_select %p37, 0, %s36
      %s40 = sadd.s32 %s39, 1
      %p43 = scmp.eq.s32.totalorder %s12, 1
      %p44 = scmp.ne.s32.totalorder %s39, %s41
      %p45 = scmp.eq.s32.totalorder %s12, 0
      %p46 = por %p44, %p45
      %p47 = scmp.ne.s32.totalorder %s39, %s41
      %p48 = scmp.eq.s32.totalorder %s17, 1
      %p49 = por %p47, %p48
      %p50 = scmp.ne.s32.totalorder %s41, %s42
      %p51 = scmp.eq.s32.totalorder %s17, 0
      %p52 = por %p50, %p51
      %p53 = scmp.ne.s32.totalorder %s41, %s42
      %p54 = scmp.eq.s32.totalorder %s18, 1
      %p55 = por %p53, %p54
      %p57 = scmp.ne.s32.totalorder %s42, %s56
      %p58 = scmp.eq.s32.totalorder %s18, 0
      %p59 = por %p57, %p58
      %s61 = sadd.s32 %s60, 1
      %p64 = scmp.eq.s32.totalorder %s12, 1
      %p65 = scmp.ne.s32.totalorder %s60, %s62
      %p66 = scmp.eq.s32.totalorder %s12, 0
      %p67 = por %p65, %p66
      %p68 = scmp.ne.s32.totalorder %s60, %s62
      %p69 = scmp.eq.s32.totalorder %s17, 1
      %p70 = por %p68, %p69
      %p71 = scmp.ne.s32.totalorder %s62, %s63
      %p72 = scmp.eq.s32.totalorder %s17, 0
      %p73 = por %p71, %p72
      %p74 = scmp.ne.s32.totalorder %s62, %s63
      %p75 = scmp.eq.s32.totalorder %s18, 1
      %p76 = por %p74, %p75
      %p78 = scmp.ne.s32.totalorder %s63, %s77
      %p79 = scmp.eq.s32.totalorder %s18, 0
      %p80 = por %p78, %p79
      %s82 = sadd.s32 %s81, 1
      %p85 = scmp.eq.s32.totalorder %s12, 1
      %p86 = scmp.ne.s32.totalorder %s81, %s83
      %p87 = scmp.eq.s32.totalorder %s12, 0
      %p88 = por %p86, %p87
      %p89 = scmp.ne.s32.totalorder %s81, %s83
      %p90 = scmp.eq.s32.totalorder %s17, 1
      %p91 = por %p89, %p90
      %p92 = scmp.ne.s32.totalorder %s83, %s84
      %p93 = scmp.eq.s32.totalorder %s17, 0
      %p94 = por %p92, %p93
      %p95 = scmp.ne.s32.totalorder %s83, %s84
      %p96 = scmp.eq.s32.totalorder %s18, 1
      %p97 = por %p95, %p96
      %p99 = scmp.ne.s32.totalorder %s84, %s98
      %p100 = scmp.eq.s32.totalorder %s18, 0
      %p101 = por %p99, %p100
      %s102 = ssub.s32 %s21, %s30
      %s103 = ssub.s32 %s19, %s38
      %s104 = sor.u32 %s102, %s103
      %s105 = ssub.s32 %s20, %s34
      %s106 = sor.u32 %s104, %s105
      %p107 = scmp.eq.s32.totalorder %s106, 0
      %s109 = sadd.s32 %s108, 1
      %s110 = scalar_select %p107, %s108, %s109
      %p113 = pneg %p107
      %p114 = scmp.eq.s32.totalorder %s12, 1
      %p115 = por %p113, %p114
      %p116 = scmp.ne.s32.totalorder %s108, %s111
      %p117 = scmp.eq.s32.totalorder %s12, 0
      %p118 = por %p116, %p117
      %p119 = scmp.ne.s32.totalorder %s108, %s111
      %p120 = scmp.eq.s32.totalorder %s17, 1
      %p121 = por %p119, %p120
      %p122 = scmp.ne.s32.totalorder %s111, %s112
      %p123 = scmp.eq.s32.totalorder %s17, 0
      %p124 = por %p122, %p123
      %p125 = scmp.ne.s32.totalorder %s111, %s112
      %p126 = scmp.eq.s32.totalorder %s18, 1
      %p127 = por %p125, %p126
      %p129 = scmp.ne.s32.totalorder %s112, %s128
      %p130 = scmp.eq.s32.totalorder %s18, 0
      %p131 = por %p129, %p130
      %s132 = ssub.s32 %s21, %s30
      %s133 = ssub.s32 %s19, %s38
      %s134 = sor.u32 %s132, %s133
      %s135 = ssub.s32 %s20, %s34
      %s136 = sor.u32 %s134, %s135
      %p137 = scmp.eq.s32.totalorder %s136, 0
      %s139 = sadd.s32 %s138, 1
      %s140 = scalar_select %p137, %s138, %s139
      %p143 = pneg %p137
      %p144 = scmp.eq.s32.totalorder %s12, 1
      %p145 = por %p143, %p144
      %p146 = scmp.ne.s32.totalorder %s138, %s141
      %p147 = scmp.eq.s32.totalorder %s12, 0
      %p148 = por %p146, %p147
      %p149 = scmp.ne.s32.totalorder %s138, %s141
      %p150 = scmp.eq.s32.totalorder %s17, 1
      %p151 = por %p149, %p150
      %p152 = scmp.ne.s32.totalorder %s141, %s142
      %p153 = scmp.eq.s32.totalorder %s17, 0
      %p154 = por %p152, %p153
      %p155 = scmp.ne.s32.totalorder %s141, %s142
      %p156 = scmp.eq.s32.totalorder %s18, 1
      %p157 = por %p155, %p156
      %p159 = scmp.ne.s32.totalorder %s142, %s158
      %p160 = scmp.eq.s32.totalorder %s18, 0
      %p161 = por %p159, %p160
      %s162 = ssub.s32 %s21, %s30
      %s163 = ssub.s32 %s19, %s38
      %s164 = sor.u32 %s162, %s163
      %s165 = ssub.s32 %s20, %s34
      %s166 = sor.u32 %s164, %s165
      %p167 = scmp.eq.s32.totalorder %s166, 0
      %s169 = sadd.s32 %s168, 1
      %s170 = scalar_select %p167, %s168, %s169
      %p173 = pneg %p167
      %p174 = scmp.eq.s32.totalorder %s12, 1
      %p175 = por %p173, %p174
      %p176 = scmp.ne.s32.totalorder %s168, %s171
      %p177 = scmp.eq.s32.totalorder %s12, 0
      %p178 = por %p176, %p177
      %p179 = scmp.ne.s32.totalorder %s168, %s171
      %p180 = scmp.eq.s32.totalorder %s17, 1
      %p181 = por %p179, %p180
      %p182 = scmp.ne.s32.totalorder %s171, %s172
      %p183 = scmp.eq.s32.totalorder %s17, 0
      %p184 = por %p182, %p183
      %p185 = scmp.ne.s32.totalorder %s171, %s172
      %p186 = scmp.eq.s32.totalorder %s18, 1
      %p187 = por %p185, %p186
      %p189 = scmp.ne.s32.totalorder %s172, %s188
      %p190 = scmp.eq.s32.totalorder %s18, 0
      %p191 = por %p189, %p190
      %s192 = ssub.s32 %s21, %s30
      %s193 = ssub.s32 %s19, %s38
      %s194 = sor.u32 %s192, %s193
      %s195 = ssub.s32 %s20, %s34
      %s196 = sor.u32 %s194, %s195
      %p197 = scmp.eq.s32.totalorder %s196, 0
      %s199 = sadd.s32 %s198, 1
      %s200 = scalar_select %p197, %s198, %s199
      %p203 = pneg %p197
      %p204 = scmp.eq.s32.totalorder %s12, 1
      %p205 = por %p203, %p204
      %p206 = scmp.ne.s32.totalorder %s198, %s201
      %p207 = scmp.eq.s32.totalorder %s12, 0
      %p208 = por %p206, %p207
      %p209 = scmp.ne.s32.totalorder %s198, %s201
      %p210 = scmp.eq.s32.totalorder %s17, 1
      %p211 = por %p209, %p210
      %p212 = scmp.ne.s32.totalorder %s201, %s202
      %p213 = scmp.eq.s32.totalorder %s17, 0
      %p214 = por %p212, %p213
      %p215 = scmp.ne.s32.totalorder %s201, %s202
      %p216 = scmp.eq.s32.totalorder %s18, 1
      %p217 = por %p215, %p216
      %p219 = scmp.ne.s32.totalorder %s202, %s218
      %p220 = scmp.eq.s32.totalorder %s18, 0
      %p221 = por %p219, %p220
      %p222 = scmp.le.s32.totalorder 1, %s12
      %p223 = scmp.lt.s32.totalorder %s12, 3
      %p224 = pnand %p222, %p223
      %p225 = pneg %p224
      // Predicated region
      $region9: #{multihead_flow_attention.4} parent=5 // pred_check
        _
      $region10: #{multihead_flow_attention.4} parent=5 // pred_check_branch
        %227 = sbr.rel (%p224) target = $region12
      $region11: #{multihead_flow_attention.4} parent=5 // pred_region
        %s228 = ssub.s32 %s12, 1
        // Predicated region
        $region13: #{multihead_flow_attention.4} parent=11 // pred_check
          %p229 = pneg %p52
        $region14: #{multihead_flow_attention.4} parent=11 // pred_check_branch
          %231 = sbr.rel (%p229) target = $region16
        $region15: #{multihead_flow_attention.4} parent=11 // pred_region
          _
        $region16: #{multihead_flow_attention.4} parent=11 // pred_fallthru
          _
        // Predicated region
        $region17: #{multihead_flow_attention.4} parent=11 // pred_check
          %p232 = pneg %p73
        $region18: #{multihead_flow_attention.4} parent=11 // pred_check_branch
          %234 = sbr.rel (%p232) target = $region20
        $region19: #{multihead_flow_attention.4} parent=11 // pred_region
          _
        $region20: #{multihead_flow_attention.4} parent=11 // pred_fallthru
          _
        // Predicated region
        $region21: #{multihead_flow_attention.4} parent=11 // pred_check
          %p235 = pneg %p94
        $region22: #{multihead_flow_attention.4} parent=11 // pred_check_branch
          %237 = sbr.rel (%p235) target = $region24
        $region23: #{multihead_flow_attention.4} parent=11 // pred_region
          _
        $region24: #{multihead_flow_attention.4} parent=11 // pred_fallthru
          _
      $region12: #{multihead_flow_attention.4} parent=5 // pred_fallthru
        _
      %p238 = scmp.lt.s32.totalorder %s12, 2
      // Predicated region
      $region25: #{multihead_flow_attention.4} parent=5 // pred_check
        %p239 = pneg %p238
      $region26: #{multihead_flow_attention.4} parent=5 // pred_check_branch
        %241 = sbr.rel (%p239) target = $region28
      $region27: #{multihead_flow_attention.4} parent=5 // pred_region
        // Predicated region
        $region29: #{multihead_flow_attention.4} parent=27 // pred_check
          %p242 = pneg %p118
        $region30: #{multihead_flow_attention.4} parent=27 // pred_check_branch
          %244 = sbr.rel (%p242) target = $region32
        $region31: #{multihead_flow_attention.4} parent=27 // pred_region
          %s245 = sand.u32 %s108, 1
          %s246 = sand.u32 %s108, 1
          %s247 = smul.addr %s246, 8
          %s248 = scalar_lea.vmem [#allocation8], %s247
          %s249 = smul.u32 8, %s21
          %s250 = smul.addr %s19, 3
          %s251 = sadd.s32 %s20, %s250
          %s252 = smul.addr %s249, 6
          %s253 = sadd.s32 %s251, %s252
          %s254 = scalar_lea.vmem %s3, %s253
          // Predicated region
          $region33: #{multihead_flow_attention.4} parent=31 // pred_check
            _
          $region34: #{multihead_flow_attention.4} parent=31 // pred_check_branch
            %256 = sbr.rel (0) target = $region36
          $region35: #{multihead_flow_attention.4} parent=31 // pred_region
            // Predicated region
            $region37: #{multihead_flow_attention.4} parent=35 // pred_check
              _
            $region38: #{multihead_flow_attention.4} parent=35 // pred_check_branch
              %258 = sbr.rel target = $region40
            $region39: #{multihead_flow_attention.4} parent=35 // pred_region
              // Predicated region
              $region52: #{multihead_flow_attention.4} parent=39 // pred_check
                _
              $region53: #{multihead_flow_attention.4} parent=39 // pred_check_branch
                %287 = sbr.rel (0) target = $region55
              $region54: #{multihead_flow_attention.4} parent=39 // pred_region
                loop: start=0, step=1, limit=1
                $region56: #{multihead_flow_attention.4} parent=54 // loop_pre_header
                  _
                $region57: #{multihead_flow_attention.4} parent=54 // loop_header
                  %s289 = sphi 0, %s293
                  %p290 = scmp.ge.s32.totalorder %s289, 1
                  %s294 = sphi %s254, %s254
                  %s295 = sphi %s248, %s248
                $region58: #{multihead_flow_attention.4} parent=54 // loop_header_branch
                  %292 = sbr.rel (%p290) target = $region62
                $region59: #{multihead_flow_attention.4} parent=54 // loop_body
                  _
                $region60: #{multihead_flow_attention.4} parent=54 // loop_footer
                  %s293 = sadd.s32 1, %s289
                $region61: #{multihead_flow_attention.4} parent=54 // loop_footer_branch
                  %288 = sbr.rel target = $region57
                $region62: #{multihead_flow_attention.4} parent=54 // loop_exit
                  _
                loop: start=0, step=1, limit=1
                $region63: #{multihead_flow_attention.4} parent=54 // loop_pre_header
                  _
                $region64: #{multihead_flow_attention.4} parent=54 // loop_header
                  %s298 = sphi 0, %s302
                  %p299 = scmp.ge.s32.totalorder %s298, 1
                  %s303 = sphi %s254, %s254
                  %s304 = sphi %s248, %s248
                $region65: #{multihead_flow_attention.4} parent=54 // loop_header_branch
                  %301 = sbr.rel (%p299) target = $region69
                $region66: #{multihead_flow_attention.4} parent=54 // loop_body
                  %v305 = vld [vmem:[%s303] sm:$0x1]
                  %306 = vst [vmem:[%s304] sm:$0x1] %v305
                  %v307 = vld [vmem:[%s303 + $0x6] sm:$0x1]
                  %308 = vst [vmem:[%s304 + $0x1] sm:$0x1] %v307
                  %v309 = vld [vmem:[%s303 + $0xc] sm:$0x1]
                  %310 = vst [vmem:[%s304 + $0x2] sm:$0x1] %v309
                  %v311 = vld [vmem:[%s303 + $0x12] sm:$0x1]
                  %312 = vst [vmem:[%s304 + $0x3] sm:$0x1] %v311
                  %v313 = vld [vmem:[%s303 + $0x18] sm:$0x1]
                  %314 = vst [vmem:[%s304 + $0x4] sm:$0x1] %v313
                  %v315 = vld [vmem:[%s303 + $0x1e] sm:$0x1]
                  %316 = vst [vmem:[%s304 + $0x5] sm:$0x1] %v315
                  %v317 = vld [vmem:[%s303 + $0x24] sm:$0x1]
                  %318 = vst [vmem:[%s304 + $0x6] sm:$0x1] %v317
                  %v319 = vld [vmem:[%s303 + $0x2a] sm:$0x1]
                  %320 = vst [vmem:[%s304 + $0x7] sm:$0x1] %v319
                $region67: #{multihead_flow_attention.4} parent=54 // loop_footer
                  %s302 = sadd.s32 1, %s298
                $region68: #{multihead_flow_attention.4} parent=54 // loop_footer_branch
                  %297 = sbr.rel target = $region64
                $region69: #{multihead_flow_attention.4} parent=54 // loop_exit
                  _
              $region55: #{multihead_flow_attention.4} parent=39 // pred_fallthru
                _
            $region40: #{multihead_flow_attention.4} parent=35 // pred_fallthru
              _
            // Predicated region
            $region41: #{multihead_flow_attention.4} parent=35 // pred_check
              _
            $region42: #{multihead_flow_attention.4} parent=35 // pred_check_branch
              %260 = sbr.rel (0) target = $region44
            $region43: #{multihead_flow_attention.4} parent=35 // pred_region
              loop: start=0, step=1, limit=1
              $region45: #{multihead_flow_attention.4} parent=43 // loop_pre_header
                _
              $region46: #{multihead_flow_attention.4} parent=43 // loop_header
                %s263 = sphi 0, %s267
                %p264 = scmp.ge.s32.totalorder %s263, 1
                %s268 = sphi %s254, %s254
                %s269 = sphi %s248, %s248
              $region47: #{multihead_flow_attention.4} parent=43 // loop_header_branch
                %266 = sbr.rel (%p264) target = $region51
              $region48: #{multihead_flow_attention.4} parent=43 // loop_body
                %v270 = vld [vmem:[%s268] sm:$0x1]
                %271 = vst [vmem:[%s269] sm:$0x1] %v270
                %v272 = vld [vmem:[%s268 + $0x6] sm:$0x1]
                %273 = vst [vmem:[%s269 + $0x1] sm:$0x1] %v272
                %v274 = vld [vmem:[%s268 + $0xc] sm:$0x1]
                %275 = vst [vmem:[%s269 + $0x2] sm:$0x1] %v274
                %v276 = vld [vmem:[%s268 + $0x12] sm:$0x1]
                %277 = vst [vmem:[%s269 + $0x3] sm:$0x1] %v276
                %v278 = vld [vmem:[%s268 + $0x18] sm:$0x1]
                %279 = vst [vmem:[%s269 + $0x4] sm:$0x1] %v278
                %v280 = vld [vmem:[%s268 + $0x1e] sm:$0x1]
                %281 = vst [vmem:[%s269 + $0x5] sm:$0x1] %v280
                %v282 = vld [vmem:[%s268 + $0x24] sm:$0x1]
                %283 = vst [vmem:[%s269 + $0x6] sm:$0x1] %v282
                %v284 = vld [vmem:[%s268 + $0x2a] sm:$0x1]
                %285 = vst [vmem:[%s269 + $0x7] sm:$0x1] %v284
              $region49: #{multihead_flow_attention.4} parent=43 // loop_footer
                %s267 = sadd.s32 1, %s263
              $region50: #{multihead_flow_attention.4} parent=43 // loop_footer_branch
                %262 = sbr.rel target = $region46
              $region51: #{multihead_flow_attention.4} parent=43 // loop_exit
                _
            $region44: #{multihead_flow_attention.4} parent=35 // pred_fallthru
              _
          $region36: #{multihead_flow_attention.4} parent=31 // pred_fallthru
            _
          %321 = vnop
        $region32: #{multihead_flow_attention.4} parent=27 // pred_fallthru
          _
        // Predicated region
        $region70: #{multihead_flow_attention.4} parent=27 // pred_check
          %p322 = pneg %p148
        $region71: #{multihead_flow_attention.4} parent=27 // pred_check_branch
          %324 = sbr.rel (%p322) target = $region73
        $region72: #{multihead_flow_attention.4} parent=27 // pred_region
          %s325 = sand.u32 %s138, 1
          %s326 = sand.u32 %s138, 1
          %s327 = smul.addr %s326, 8
          %s328 = scalar_lea.vmem [#allocation9], %s327
          %s329 = smul.u32 8, %s21
          %s330 = sadd.s32 %s20, 1
          %s331 = smul.addr %s19, 3
          %s332 = sadd.s32 %s330, %s331
          %s333 = smul.addr %s329, 6
          %s334 = sadd.s32 %s332, %s333
          %s335 = scalar_lea.vmem %s4, %s334
          // Predicated region
          $region74: #{multihead_flow_attention.4} parent=72 // pred_check
            _
          $region75: #{multihead_flow_attention.4} parent=72 // pred_check_branch
            %337 = sbr.rel (0) target = $region77
          $region76: #{multihead_flow_attention.4} parent=72 // pred_region
            // Predicated region
            $region78: #{multihead_flow_attention.4} parent=76 // pred_check
              _
            $region79: #{multihead_flow_attention.4} parent=76 // pred_check_branch
              %339 = sbr.rel target = $region81
            $region80: #{multihead_flow_attention.4} parent=76 // pred_region
              // Predicated region
              $region93: #{multihead_flow_attention.4} parent=80 // pred_check
                _
              $region94: #{multihead_flow_attention.4} parent=80 // pred_check_branch
                %368 = sbr.rel (0) target = $region96
              $region95: #{multihead_flow_attention.4} parent=80 // pred_region
                loop: start=0, step=1, limit=1
                $region97: #{multihead_flow_attention.4} parent=95 // loop_pre_header
                  _
                $region98: #{multihead_flow_attention.4} parent=95 // loop_header
                  %s370 = sphi 0, %s374
                  %p371 = scmp.ge.s32.totalorder %s370, 1
                  %s375 = sphi %s335, %s335
                  %s376 = sphi %s328, %s328
                $region99: #{multihead_flow_attention.4} parent=95 // loop_header_branch
                  %373 = sbr.rel (%p371) target = $region103
                $region100: #{multihead_flow_attention.4} parent=95 // loop_body
                  _
                $region101: #{multihead_flow_attention.4} parent=95 // loop_footer
                  %s374 = sadd.s32 1, %s370
                $region102: #{multihead_flow_attention.4} parent=95 // loop_footer_branch
                  %369 = sbr.rel target = $region98
                $region103: #{multihead_flow_attention.4} parent=95 // loop_exit
                  _
                loop: start=0, step=1, limit=1
                $region104: #{multihead_flow_attention.4} parent=95 // loop_pre_header
                  _
                $region105: #{multihead_flow_attention.4} parent=95 // loop_header
                  %s379 = sphi 0, %s383
                  %p380 = scmp.ge.s32.totalorder %s379, 1
                  %s384 = sphi %s335, %s335
                  %s385 = sphi %s328, %s328
                $region106: #{multihead_flow_attention.4} parent=95 // loop_header_branch
                  %382 = sbr.rel (%p380) target = $region110
                $region107: #{multihead_flow_attention.4} parent=95 // loop_body
                  %v386 = vld [vmem:[%s384] sm:$0x1]
                  %387 = vst [vmem:[%s385] sm:$0x1] %v386
                  %v388 = vld [vmem:[%s384 + $0x6] sm:$0x1]
                  %389 = vst [vmem:[%s385 + $0x1] sm:$0x1] %v388
                  %v390 = vld [vmem:[%s384 + $0xc] sm:$0x1]
                  %391 = vst [vmem:[%s385 + $0x2] sm:$0x1] %v390
                  %v392 = vld [vmem:[%s384 + $0x12] sm:$0x1]
                  %393 = vst [vmem:[%s385 + $0x3] sm:$0x1] %v392
                  %v394 = vld [vmem:[%s384 + $0x18] sm:$0x1]
                  %395 = vst [vmem:[%s385 + $0x4] sm:$0x1] %v394
                  %v396 = vld [vmem:[%s384 + $0x1e] sm:$0x1]
                  %397 = vst [vmem:[%s385 + $0x5] sm:$0x1] %v396
                  %v398 = vld [vmem:[%s384 + $0x24] sm:$0x1]
                  %399 = vst [vmem:[%s385 + $0x6] sm:$0x1] %v398
                  %v400 = vld [vmem:[%s384 + $0x2a] sm:$0x1]
                  %401 = vst [vmem:[%s385 + $0x7] sm:$0x1] %v400
                $region108: #{multihead_flow_attention.4} parent=95 // loop_footer
                  %s383 = sadd.s32 1, %s379
                $region109: #{multihead_flow_attention.4} parent=95 // loop_footer_branch
                  %378 = sbr.rel target = $region105
                $region110: #{multihead_flow_attention.4} parent=95 // loop_exit
                  _
              $region96: #{multihead_flow_attention.4} parent=80 // pred_fallthru
                _
            $region81: #{multihead_flow_attention.4} parent=76 // pred_fallthru
              _
            // Predicated region
            $region82: #{multihead_flow_attention.4} parent=76 // pred_check
              _
            $region83: #{multihead_flow_attention.4} parent=76 // pred_check_branch
              %341 = sbr.rel (0) target = $region85
            $region84: #{multihead_flow_attention.4} parent=76 // pred_region
              loop: start=0, step=1, limit=1
              $region86: #{multihead_flow_attention.4} parent=84 // loop_pre_header
                _
              $region87: #{multihead_flow_attention.4} parent=84 // loop_header
                %s344 = sphi 0, %s348
                %p345 = scmp.ge.s32.totalorder %s344, 1
                %s349 = sphi %s335, %s335
                %s350 = sphi %s328, %s328
              $region88: #{multihead_flow_attention.4} parent=84 // loop_header_branch
                %347 = sbr.rel (%p345) target = $region92
              $region89: #{multihead_flow_attention.4} parent=84 // loop_body
                %v351 = vld [vmem:[%s349] sm:$0x1]
                %352 = vst [vmem:[%s350] sm:$0x1] %v351
                %v353 = vld [vmem:[%s349 + $0x6] sm:$0x1]
                %354 = vst [vmem:[%s350 + $0x1] sm:$0x1] %v353
                %v355 = vld [vmem:[%s349 + $0xc] sm:$0x1]
                %356 = vst [vmem:[%s350 + $0x2] sm:$0x1] %v355
                %v357 = vld [vmem:[%s349 + $0x12] sm:$0x1]
                %358 = vst [vmem:[%s350 + $0x3] sm:$0x1] %v357
                %v359 = vld [vmem:[%s349 + $0x18] sm:$0x1]
                %360 = vst [vmem:[%s350 + $0x4] sm:$0x1] %v359
                %v361 = vld [vmem:[%s349 + $0x1e] sm:$0x1]
                %362 = vst [vmem:[%s350 + $0x5] sm:$0x1] %v361
                %v363 = vld [vmem:[%s349 + $0x24] sm:$0x1]
                %364 = vst [vmem:[%s350 + $0x6] sm:$0x1] %v363
                %v365 = vld [vmem:[%s349 + $0x2a] sm:$0x1]
                %366 = vst [vmem:[%s350 + $0x7] sm:$0x1] %v365
              $region90: #{multihead_flow_attention.4} parent=84 // loop_footer
                %s348 = sadd.s32 1, %s344
              $region91: #{multihead_flow_attention.4} parent=84 // loop_footer_branch
                %343 = sbr.rel target = $region87
              $region92: #{multihead_flow_attention.4} parent=84 // loop_exit
                _
            $region85: #{multihead_flow_attention.4} parent=76 // pred_fallthru
              _
          $region77: #{multihead_flow_attention.4} parent=72 // pred_fallthru
            _
          %402 = vnop
        $region73: #{multihead_flow_attention.4} parent=27 // pred_fallthru
          _
        // Predicated region
        $region111: #{multihead_flow_attention.4} parent=27 // pred_check
          %p403 = pneg %p178
        $region112: #{multihead_flow_attention.4} parent=27 // pred_check_branch
          %405 = sbr.rel (%p403) target = $region114
        $region113: #{multihead_flow_attention.4} parent=27 // pred_region
          %s406 = sand.u32 %s168, 1
          %s407 = sand.u32 %s168, 1
          %s408 = smul.addr %s407, 8
          %s409 = scalar_lea.vmem [#allocation10], %s408
          %s410 = smul.u32 8, %s21
          %s411 = sadd.s32 %s20, 2
          %s412 = smul.addr %s19, 3
          %s413 = sadd.s32 %s411, %s412
          %s414 = smul.addr %s410, 6
          %s415 = sadd.s32 %s413, %s414
          %s416 = scalar_lea.vmem %s5, %s415
          // Predicated region
          $region115: #{multihead_flow_attention.4} parent=113 // pred_check
            _
          $region116: #{multihead_flow_attention.4} parent=113 // pred_check_branch
            %418 = sbr.rel (0) target = $region118
          $region117: #{multihead_flow_attention.4} parent=113 // pred_region
            // Predicated region
            $region119: #{multihead_flow_attention.4} parent=117 // pred_check
              _
            $region120: #{multihead_flow_attention.4} parent=117 // pred_check_branch
              %420 = sbr.rel target = $region122
            $region121: #{multihead_flow_attention.4} parent=117 // pred_region
              // Predicated region
              $region134: #{multihead_flow_attention.4} parent=121 // pred_check
                _
              $region135: #{multihead_flow_attention.4} parent=121 // pred_check_branch
                %449 = sbr.rel (0) target = $region137
              $region136: #{multihead_flow_attention.4} parent=121 // pred_region
                loop: start=0, step=1, limit=1
                $region138: #{multihead_flow_attention.4} parent=136 // loop_pre_header
                  _
                $region139: #{multihead_flow_attention.4} parent=136 // loop_header
                  %s451 = sphi 0, %s455
                  %p452 = scmp.ge.s32.totalorder %s451, 1
                  %s456 = sphi %s416, %s416
                  %s457 = sphi %s409, %s409
                $region140: #{multihead_flow_attention.4} parent=136 // loop_header_branch
                  %454 = sbr.rel (%p452) target = $region144
                $region141: #{multihead_flow_attention.4} parent=136 // loop_body
                  _
                $region142: #{multihead_flow_attention.4} parent=136 // loop_footer
                  %s455 = sadd.s32 1, %s451
                $region143: #{multihead_flow_attention.4} parent=136 // loop_footer_branch
                  %450 = sbr.rel target = $region139
                $region144: #{multihead_flow_attention.4} parent=136 // loop_exit
                  _
                loop: start=0, step=1, limit=1
                $region145: #{multihead_flow_attention.4} parent=136 // loop_pre_header
                  _
                $region146: #{multihead_flow_attention.4} parent=136 // loop_header
                  %s460 = sphi 0, %s464
                  %p461 = scmp.ge.s32.totalorder %s460, 1
                  %s465 = sphi %s416, %s416
                  %s466 = sphi %s409, %s409
                $region147: #{multihead_flow_attention.4} parent=136 // loop_header_branch
                  %463 = sbr.rel (%p461) target = $region151
                $region148: #{multihead_flow_attention.4} parent=136 // loop_body
                  %v467 = vld [vmem:[%s465] sm:$0x1]
                  %468 = vst [vmem:[%s466] sm:$0x1] %v467
                  %v469 = vld [vmem:[%s465 + $0x6] sm:$0x1]
                  %470 = vst [vmem:[%s466 + $0x1] sm:$0x1] %v469
                  %v471 = vld [vmem:[%s465 + $0xc] sm:$0x1]
                  %472 = vst [vmem:[%s466 + $0x2] sm:$0x1] %v471
                  %v473 = vld [vmem:[%s465 + $0x12] sm:$0x1]
                  %474 = vst [vmem:[%s466 + $0x3] sm:$0x1] %v473
                  %v475 = vld [vmem:[%s465 + $0x18] sm:$0x1]
                  %476 = vst [vmem:[%s466 + $0x4] sm:$0x1] %v475
                  %v477 = vld [vmem:[%s465 + $0x1e] sm:$0x1]
                  %478 = vst [vmem:[%s466 + $0x5] sm:$0x1] %v477
                  %v479 = vld [vmem:[%s465 + $0x24] sm:$0x1]
                  %480 = vst [vmem:[%s466 + $0x6] sm:$0x1] %v479
                  %v481 = vld [vmem:[%s465 + $0x2a] sm:$0x1]
                  %482 = vst [vmem:[%s466 + $0x7] sm:$0x1] %v481
                $region149: #{multihead_flow_attention.4} parent=136 // loop_footer
                  %s464 = sadd.s32 1, %s460
                $region150: #{multihead_flow_attention.4} parent=136 // loop_footer_branch
                  %459 = sbr.rel target = $region146
                $region151: #{multihead_flow_attention.4} parent=136 // loop_exit
                  _
              $region137: #{multihead_flow_attention.4} parent=121 // pred_fallthru
                _
            $region122: #{multihead_flow_attention.4} parent=117 // pred_fallthru
              _
            // Predicated region
            $region123: #{multihead_flow_attention.4} parent=117 // pred_check
              _
            $region124: #{multihead_flow_attention.4} parent=117 // pred_check_branch
              %422 = sbr.rel (0) target = $region126
            $region125: #{multihead_flow_attention.4} parent=117 // pred_region
              loop: start=0, step=1, limit=1
              $region127: #{multihead_flow_attention.4} parent=125 // loop_pre_header
                _
              $region128: #{multihead_flow_attention.4} parent=125 // loop_header
                %s425 = sphi 0, %s429
                %p426 = scmp.ge.s32.totalorder %s425, 1
                %s430 = sphi %s416, %s416
                %s431 = sphi %s409, %s409
              $region129: #{multihead_flow_attention.4} parent=125 // loop_header_branch
                %428 = sbr.rel (%p426) target = $region133
              $region130: #{multihead_flow_attention.4} parent=125 // loop_body
                %v432 = vld [vmem:[%s430] sm:$0x1]
                %433 = vst [vmem:[%s431] sm:$0x1] %v432
                %v434 = vld [vmem:[%s430 + $0x6] sm:$0x1]
                %435 = vst [vmem:[%s431 + $0x1] sm:$0x1] %v434
                %v436 = vld [vmem:[%s430 + $0xc] sm:$0x1]
                %437 = vst [vmem:[%s431 + $0x2] sm:$0x1] %v436
                %v438 = vld [vmem:[%s430 + $0x12] sm:$0x1]
                %439 = vst [vmem:[%s431 + $0x3] sm:$0x1] %v438
                %v440 = vld [vmem:[%s430 + $0x18] sm:$0x1]
                %441 = vst [vmem:[%s431 + $0x4] sm:$0x1] %v440
                %v442 = vld [vmem:[%s430 + $0x1e] sm:$0x1]
                %443 = vst [vmem:[%s431 + $0x5] sm:$0x1] %v442
                %v444 = vld [vmem:[%s430 + $0x24] sm:$0x1]
                %445 = vst [vmem:[%s431 + $0x6] sm:$0x1] %v444
                %v446 = vld [vmem:[%s430 + $0x2a] sm:$0x1]
                %447 = vst [vmem:[%s431 + $0x7] sm:$0x1] %v446
              $region131: #{multihead_flow_attention.4} parent=125 // loop_footer
                %s429 = sadd.s32 1, %s425
              $region132: #{multihead_flow_attention.4} parent=125 // loop_footer_branch
                %424 = sbr.rel target = $region128
              $region133: #{multihead_flow_attention.4} parent=125 // loop_exit
                _
            $region126: #{multihead_flow_attention.4} parent=117 // pred_fallthru
              _
          $region118: #{multihead_flow_attention.4} parent=113 // pred_fallthru
            _
          %483 = vnop
        $region114: #{multihead_flow_attention.4} parent=27 // pred_fallthru
          _
      $region28: #{multihead_flow_attention.4} parent=5 // pred_fallthru
        _
      %p484 = scmp.le.s32.totalorder 1, %s12
      %p485 = scmp.lt.s32.totalorder %s12, 3
      %p486 = pnand %p484, %p485
      %p487 = pneg %p486
      // Predicated region
      $region152: #{multihead_flow_attention.4} parent=5 // pred_check
        _
      $region153: #{multihead_flow_attention.4} parent=5 // pred_check_branch
        %489 = sbr.rel (%p486) target = $region155
      $region154: #{multihead_flow_attention.4} parent=5 // pred_region
        %s490 = ssub.s32 %s12, 1
        %s491 = sand.u32 %s111, 1
        %s492 = sand.u32 %s111, 1
        %s493 = smul.addr %s492, 8
        %s494 = scalar_lea.vmem [#allocation8], %s493
        // Predicated region
        $region156: #{multihead_flow_attention.4} parent=154 // pred_check
          %p495 = pneg %p124
        $region157: #{multihead_flow_attention.4} parent=154 // pred_check_branch
          %497 = sbr.rel (%p495) target = $region159
        $region158: #{multihead_flow_attention.4} parent=154 // pred_region
          _
        $region159: #{multihead_flow_attention.4} parent=154 // pred_fallthru
          _
        %s498 = sand.u32 %s141, 1
        %s499 = sand.u32 %s141, 1
        %s500 = smul.addr %s499, 8
        %s501 = scalar_lea.vmem [#allocation9], %s500
        // Predicated region
        $region160: #{multihead_flow_attention.4} parent=154 // pred_check
          %p502 = pneg %p154
        $region161: #{multihead_flow_attention.4} parent=154 // pred_check_branch
          %504 = sbr.rel (%p502) target = $region163
        $region162: #{multihead_flow_attention.4} parent=154 // pred_region
          _
        $region163: #{multihead_flow_attention.4} parent=154 // pred_fallthru
          _
        %s505 = sand.u32 %s171, 1
        %s506 = sand.u32 %s171, 1
        %s507 = smul.addr %s506, 8
        %s508 = scalar_lea.vmem [#allocation10], %s507
        // Predicated region
        $region164: #{multihead_flow_attention.4} parent=154 // pred_check
          %p509 = pneg %p184
        $region165: #{multihead_flow_attention.4} parent=154 // pred_check_branch
          %511 = sbr.rel (%p509) target = $region167
        $region166: #{multihead_flow_attention.4} parent=154 // pred_region
          _
        $region167: #{multihead_flow_attention.4} parent=154 // pred_fallthru
          _
        %p512 = pneg %p52
        %p513 = pneg %p49
        %p514 = pneg %p73
        %p515 = pneg %p70
        %p516 = pneg %p94
        %p517 = pneg %p91
        %s518 = sand.u32 %s111, 1
        %s519 = sand.u32 %s111, 1
        %s520 = smul.addr %s519, 8
        %s521 = scalar_lea.vmem [#allocation8], %s520
        %p522 = pneg %p124
        %p523 = pneg %p121
        %s524 = sand.u32 %s141, 1
        %s525 = sand.u32 %s141, 1
        %s526 = smul.addr %s525, 8
        %s527 = scalar_lea.vmem [#allocation9], %s526
        %p528 = pneg %p154
        %p529 = pneg %p151
        %s530 = sand.u32 %s171, 1
        %s531 = sand.u32 %s171, 1
        %s532 = smul.addr %s531, 8
        %s533 = scalar_lea.vmem [#allocation10], %s532
        %p534 = pneg %p184
        %p535 = pneg %p181
        %p536 = pneg %p214
        %p537 = pneg %p211
        %s538 = sand.u32 %s201, 1
        %s539 = sand.u32 %s201, 1
        %s540 = smul.addr %s539, 8
        %s541 = scalar_lea.vmem [#allocation11], %s540
        %s542 = smul.u32 8, %s24
        %s543 = smul.u32 8, %s24
        %s544 = smul.u32 8, %s24
        %s545 = smul.u32 8, %s24
        %p546 = scmp.eq.s32.totalorder %s24, 0
        // Predicated region
        $region168: #{multihead_flow_attention.4} parent=154 // pred_check
          %p547 = pneg %p546
        $region169: #{multihead_flow_attention.4} parent=154 // pred_check_branch
          %549 = sbr.rel (%p547) target = $region171
        $region170: #{multihead_flow_attention.4} parent=154 // pred_region
          %vm550 = vcmask 253952
          %551 = vst.msk [vmem:[#allocation2] sm:$0x1] %vm550, 0.0
          %552 = vst.msk [vmem:[#allocation3] sm:$0x1] %vm550, 0.0
          %553 = vst.msk [vmem:[#allocation4] sm:$0x1] %vm550, 0.0
          %554 = vst.msk [vmem:[#allocation5] sm:$0x1] %vm550, 0.0
          %vm555 = vcmask 24576
          %556 = vst.msk [vmem:[#allocation6] sm:$0x1] %vm555, 0.0
          %vm557 = vcmask 64512
          %558 = vst.msk [vmem:[#allocation7] sm:$0xff] %vm557, 0.0
          %559 = vst.msk [vmem:[#allocation7 + $0x8] sm:$0xff] %vm557, 0.0
          %560 = vst.msk [vmem:[#allocation7 + $0x10] sm:$0xff] %vm557, 0.0
          %561 = vst.msk [vmem:[#allocation7 + $0x18] sm:$0xff] %vm557, 0.0
        $region171: #{multihead_flow_attention.4} parent=154 // pred_fallthru
          _
        %v562 = vld [vmem:[%s0] sm:$0xff]
        %v563 = vld [vmem:[%s1] sm:$0xff]
        %v564 = vld [vmem:[%s1 + $0x8] sm:$0xff]
        %v565 = vld [vmem:[%s1 + $0x10] sm:$0xff]
        %v566 = vld [vmem:[%s1 + $0x18] sm:$0xff]
        %v567 = vld [vmem:[%s2] sm:$0xf]
        %v568 = vld [vmem:[%s494] sm:$0x1]
        %v569 = vld [vmem:[%s494 + $0x1] sm:$0x1]
        %v570 = vld [vmem:[%s494 + $0x2] sm:$0x1]
        %v571 = vld [vmem:[%s494 + $0x3] sm:$0x1]
        %v572 = vld [vmem:[%s494 + $0x4] sm:$0x1]
        %v573 = vld [vmem:[%s494 + $0x5] sm:$0x1]
        %v574 = vld [vmem:[%s494 + $0x6] sm:$0x1]
        %v575 = vld [vmem:[%s494 + $0x7] sm:$0x1]
        %v576 = vxor.u32 %v568, 2147483648
        %v577 = vxor.u32 %v569, 2147483648
        %v578 = vxor.u32 %v570, 2147483648
        %v579 = vxor.u32 %v571, 2147483648
        %v580 = vxor.u32 %v572, 2147483648
        %v581 = vxor.u32 %v573, 2147483648
        %v582 = vxor.u32 %v574, 2147483648
        %v583 = vxor.u32 %v575, 2147483648
        %v584 = vmul.f32 %v576, 1.442695
        %v585 = vpow.pop %v584
        %v586 = vmul.f32 %v577, 1.442695
        %v587 = vpow.pop %v586
        %v588 = vmul.f32 %v578, 1.442695
        %v589 = vpow.pop %v588
        %v590 = vmul.f32 %v579, 1.442695
        %v591 = vpow.pop %v590
        %v592 = vmul.f32 %v580, 1.442695
        %v593 = vpow.pop %v592
        %v594 = vmul.f32 %v581, 1.442695
        %v595 = vpow.pop %v594
        %v596 = vmul.f32 %v582, 1.442695
        %v597 = vpow.pop %v596
        %v598 = vmul.f32 %v583, 1.442695
        %v599 = vpow.pop %v598
        %v600 = vadd.f32 %v585, 1.0
        %v601 = vadd.f32 %v587, 1.0
        %v602 = vadd.f32 %v589, 1.0
        %v603 = vadd.f32 %v591, 1.0
        %v604 = vadd.f32 %v593, 1.0
        %v605 = vadd.f32 %v595, 1.0
        %v606 = vadd.f32 %v597, 1.0
        %v607 = vadd.f32 %v599, 1.0
        %v608 = vrcp.pop %v600
        %v609 = vmul.f32 1.0, %v608
        %v610 = vrcp.pop %v601
        %v611 = vmul.f32 1.0, %v610
        %v612 = vrcp.pop %v602
        %v613 = vmul.f32 1.0, %v612
        %v614 = vrcp.pop %v603
        %v615 = vmul.f32 1.0, %v614
        %v616 = vrcp.pop %v604
        %v617 = vmul.f32 1.0, %v616
        %v618 = vrcp.pop %v605
        %v619 = vmul.f32 1.0, %v618
        %v620 = vrcp.pop %v606
        %v621 = vmul.f32 1.0, %v620
        %v622 = vrcp.pop %v607
        %v623 = vmul.f32 1.0, %v622
        %v624 = vld [vmem:[%s501] sm:$0x1]
        %v625 = vld [vmem:[%s501 + $0x1] sm:$0x1]
        %v626 = vld [vmem:[%s501 + $0x2] sm:$0x1]
        %v627 = vld [vmem:[%s501 + $0x3] sm:$0x1]
        %v628 = vld [vmem:[%s501 + $0x4] sm:$0x1]
        %v629 = vld [vmem:[%s501 + $0x5] sm:$0x1]
        %v630 = vld [vmem:[%s501 + $0x6] sm:$0x1]
        %v631 = vld [vmem:[%s501 + $0x7] sm:$0x1]
        %v632 = vxor.u32 %v624, 2147483648
        %v633 = vxor.u32 %v625, 2147483648
        %v634 = vxor.u32 %v626, 2147483648
        %v635 = vxor.u32 %v627, 2147483648
        %v636 = vxor.u32 %v628, 2147483648
        %v637 = vxor.u32 %v629, 2147483648
        %v638 = vxor.u32 %v630, 2147483648
        %v639 = vxor.u32 %v631, 2147483648
        %v640 = vmul.f32 %v632, 1.442695
        %v641 = vpow.pop %v640
        %v642 = vmul.f32 %v633, 1.442695
        %v643 = vpow.pop %v642
        %v644 = vmul.f32 %v634, 1.442695
        %v645 = vpow.pop %v644
        %v646 = vmul.f32 %v635, 1.442695
        %v647 = vpow.pop %v646
        %v648 = vmul.f32 %v636, 1.442695
        %v649 = vpow.pop %v648
        %v650 = vmul.f32 %v637, 1.442695
        %v651 = vpow.pop %v650
        %v652 = vmul.f32 %v638, 1.442695
        %v653 = vpow.pop %v652
        %v654 = vmul.f32 %v639, 1.442695
        %v655 = vpow.pop %v654
        %v656 = vadd.f32 %v641, 1.0
        %v657 = vadd.f32 %v643, 1.0
        %v658 = vadd.f32 %v645, 1.0
        %v659 = vadd.f32 %v647, 1.0
        %v660 = vadd.f32 %v649, 1.0
        %v661 = vadd.f32 %v651, 1.0
        %v662 = vadd.f32 %v653, 1.0
        %v663 = vadd.f32 %v655, 1.0
        %v664 = vrcp.pop %v656
        %v665 = vmul.f32 1.0, %v664
        %v666 = vrcp.pop %v657
        %v667 = vmul.f32 1.0, %v666
        %v668 = vrcp.pop %v658
        %v669 = vmul.f32 1.0, %v668
        %v670 = vrcp.pop %v659
        %v671 = vmul.f32 1.0, %v670
        %v672 = vrcp.pop %v660
        %v673 = vmul.f32 1.0, %v672
        %v674 = vrcp.pop %v661
        %v675 = vmul.f32 1.0, %v674
        %v676 = vrcp.pop %v662
        %v677 = vmul.f32 1.0, %v676
        %v678 = vrcp.pop %v663
        %v679 = vmul.f32 1.0, %v678
        %v680 = vld [vmem:[%s508] sm:$0x1]
        %v681 = vld [vmem:[%s508 + $0x1] sm:$0x1]
        %v682 = vld [vmem:[%s508 + $0x2] sm:$0x1]
        %v683 = vld [vmem:[%s508 + $0x3] sm:$0x1]
        %v684 = vld [vmem:[%s508 + $0x4] sm:$0x1]
        %v685 = vld [vmem:[%s508 + $0x5] sm:$0x1]
        %v686 = vld [vmem:[%s508 + $0x6] sm:$0x1]
        %v687 = vld [vmem:[%s508 + $0x7] sm:$0x1]
        %v688 = vlaneseq
        %v689 = vshrl.u32 %v688, 7
        %v690 = vcvt.s32.f32 %v689
        %v691 = vadd.f32 %v690, 1.0
        %s692 = smul.u32 %s24, 8
        %s693 = scvt.s32.f32 %s692
        %v694 = vstv %s693
        %v695 = vadd.f32 %v691, %v694
        %v696 = vrcp.pop %v695
        %v697 = vld [vmem:[#allocation2] sm:$0x1]
        %v699 = vlaneseq
        %v700 = vshrl.u32 %v699, 7
        %v701 = vsub.s32 0, %v700
        %v702 = vrot.slane %v697, %v701
        %v712 = vcombine.low %v665, %v667
        %v713 = vcombine.low %v669, %v671
        %v714 = vcombine.low %v673, %v675
        %v715 = vcombine.low %v677, %v679
        %v717 = vunpack.c.l.s4 1966171168
        %v718 = vunpack.c.0.s8 %v717
        %v719 = vlaneseq
        %v720 = vshrl.u32 %v719, 7
        %v721 = vsub.s32 %v718, %v720
        %v722 = vrot.slane %v712, %v721
        %v724 = vunpack.c.l.s4 1966171168
        %v725 = vunpack.c.0.s8 %v724
        %v726 = vlaneseq
        %v727 = vshrl.u32 %v726, 7
        %v728 = vsub.s32 %v725, %v727
        %v729 = vrot.slane %v713, %v728
        %v731 = vunpack.c.l.s4 1966171168
        %v732 = vunpack.c.0.s8 %v731
        %v733 = vlaneseq
        %v734 = vshrl.u32 %v733, 7
        %v735 = vsub.s32 %v732, %v734
        %v736 = vrot.slane %v714, %v735
        %v738 = vunpack.c.l.s4 1966171168
        %v739 = vunpack.c.0.s8 %v738
        %v740 = vlaneseq
        %v741 = vshrl.u32 %v740, 7
        %v742 = vsub.s32 %v739, %v741
        %v743 = vrot.slane %v715, %v742
        %v744 = vcombine.low %v722, %v729
        %v745 = vcombine.low %v736, %v743
        %v747 = vunpack.c.l.s4 1966171168
        %v748 = vunpack.c.0.s8 %v747
        %v749 = vlaneseq
        %v750 = vshrl.u32 %v749, 7
        %v751 = vsub.s32 %v748, %v750
        %v752 = vrot.slane %v744, %v751
        %v754 = vunpack.c.l.s4 1966171168
        %v755 = vunpack.c.0.s8 %v754
        %v756 = vlaneseq
        %v757 = vshrl.u32 %v756, 7
        %v758 = vsub.s32 %v755, %v757
        %v759 = vrot.slane %v745, %v758
        %v760 = vcombine.low %v752, %v759
        %vm762 = vcmask 64512
        %v764 = vsel %vm762, %v562, 0
        %766 = vmatprep.subr.mxu0 0.0
        %767 = vmatpush1.msra.mxu0 %v760
        %768 = vmatprep.subr.mxu0 0.0
        %769 = vmatpush1.msra.mxu0 0.0
        %770 = vmatprep.subr.mxu0 0.0
        %771 = vmatpush1.msra.mxu0 0.0
        %772 = vmatprep.subr.mxu0 0.0
        %773 = vmatpush1.msra.mxu0 0.0
        %774 = vmatprep.subr.mxu0 0.0
        %775 = vmatpush1.msra.mxu0 0.0
        %776 = vmatprep.subr.mxu0 0.0
        %777 = vmatpush1.msra.mxu0 0.0
        %778 = vmatprep.subr.mxu0 0.0
        %779 = vmatpush1.msra.mxu0 0.0
        %780 = vmatprep.subr.mxu0 0.0
        %781 = vmatpush1.msra.mxu0 0.0
        %782 = vmatprep.subr.mxu0 0.0
        %783 = vmatpush1.msra.mxu0 0.0
        %784 = vmatprep.subr.mxu0 0.0
        %785 = vmatpush1.msra.mxu0 0.0
        %786 = vmatprep.subr.mxu0 0.0
        %787 = vmatpush1.msra.mxu0 0.0
        %788 = vmatprep.subr.mxu0 0.0
        %789 = vmatpush1.msra.mxu0 0.0
        %790 = vmatprep.subr.mxu0 0.0
        %791 = vmatpush1.msra.mxu0 0.0
        %792 = vmatprep.subr.mxu0 0.0
        %793 = vmatpush1.msra.mxu0 0.0
        %794 = vmatprep.subr.mxu0 0.0
        %795 = vmatpush1.msra.mxu0 0.0
        %796 = vmatprep.subr.mxu0 0.0
        %797 = vmatpush1.msra.mxu0 0.0
        %798 = vmatprep.subr.mxu0 0.0
        %799 = vmatpush1.msra.mxu0 0.0
        %800 = vmatprep.subr.mxu0 0.0
        %801 = vmatpush1.msra.mxu0 0.0
        %802 = vmatprep.subr.mxu0 0.0
        %803 = vmatpush1.msra.mxu0 0.0
        %804 = vmatprep.subr.mxu0 0.0
        %805 = vmatpush1.msra.mxu0 0.0
        %806 = vmatprep.subr.mxu0 0.0
        %807 = vmatpush1.msra.mxu0 0.0
        %808 = vmatprep.subr.mxu0 0.0
        %809 = vmatpush1.msra.mxu0 0.0
        %810 = vmatprep.subr.mxu0 0.0
        %811 = vmatpush1.msra.mxu0 0.0
        %812 = vmatprep.subr.mxu0 0.0
        %813 = vmatpush1.msra.mxu0 0.0
        %814 = vmatprep.subr.mxu0 0.0
        %815 = vmatpush1.msra.mxu0 0.0
        %816 = vmatprep.subr.mxu0 0.0
        %817 = vmatpush1.msra.mxu0 0.0
        %818 = vmatprep.subr.mxu0 0.0
        %819 = vmatpush1.msra.mxu0 0.0
        %820 = vmatprep.subr.mxu0 0.0
        %821 = vmatpush1.msra.mxu0 0.0
        %822 = vmatprep.subr.mxu0 0.0
        %823 = vmatpush1.msra.mxu0 0.0
        %824 = vmatprep.subr.mxu0 0.0
        %825 = vmatpush1.msra.mxu0 0.0
        %826 = vmatprep.subr.mxu0 0.0
        %827 = vmatpush1.msra.mxu0 0.0
        %828 = vmatprep.subr.mxu0 0.0
        %829 = vmatpush1.msra.mxu0 0.0
        %830 = vmatprep.mubr.f32.mxu0 0.0
        %831 = vmatmul.mubr.f32.gmra.mrb[0].mxu0 %v764
        %v832 = vpop.f32.mrb[0].mxu0
        %v833 = vadd.f32 %v702, %v832
        %v834 = vpop.f32.mrb[0].mxu0
        %835 = vdwg.mxu0
        %v836 = vld [vmem:[#allocation3] sm:$0x1]
        %v838 = vlaneseq
        %v839 = vshrl.u32 %v838, 7
        %v840 = vsub.s32 0, %v839
        %v841 = vrot.slane %v836, %v840
        %v851 = vcombine.low %v609, %v611
        %v852 = vcombine.low %v613, %v615
        %v853 = vcombine.low %v617, %v619
        %v854 = vcombine.low %v621, %v623
        %v856 = vunpack.c.l.s4 1966171168
        %v857 = vunpack.c.0.s8 %v856
        %v858 = vlaneseq
        %v859 = vshrl.u32 %v858, 7
        %v860 = vsub.s32 %v857, %v859
        %v861 = vrot.slane %v851, %v860
        %v863 = vunpack.c.l.s4 1966171168
        %v864 = vunpack.c.0.s8 %v863
        %v865 = vlaneseq
        %v866 = vshrl.u32 %v865, 7
        %v867 = vsub.s32 %v864, %v866
        %v868 = vrot.slane %v852, %v867
        %v870 = vunpack.c.l.s4 1966171168
        %v871 = vunpack.c.0.s8 %v870
        %v872 = vlaneseq
        %v873 = vshrl.u32 %v872, 7
        %v874 = vsub.s32 %v871, %v873
        %v875 = vrot.slane %v853, %v874
        %v877 = vunpack.c.l.s4 1966171168
        %v878 = vunpack.c.0.s8 %v877
        %v879 = vlaneseq
        %v880 = vshrl.u32 %v879, 7
        %v881 = vsub.s32 %v878, %v880
        %v882 = vrot.slane %v854, %v881
        %v883 = vcombine.low %v861, %v868
        %v884 = vcombine.low %v875, %v882
        %v886 = vunpack.c.l.s4 1966171168
        %v887 = vunpack.c.0.s8 %v886
        %v888 = vlaneseq
        %v889 = vshrl.u32 %v888, 7
        %v890 = vsub.s32 %v887, %v889
        %v891 = vrot.slane %v883, %v890
        %v893 = vunpack.c.l.s4 1966171168
        %v894 = vunpack.c.0.s8 %v893
        %v895 = vlaneseq
        %v896 = vshrl.u32 %v895, 7
        %v897 = vsub.s32 %v894, %v896
        %v898 = vrot.slane %v884, %v897
        %v899 = vcombine.low %v891, %v898
        %901 = vmatprep.subr.mxu0 0.0
        %902 = vmatpush1.msra.mxu0 %v899
        %903 = vmatprep.subr.mxu0 0.0
        %904 = vmatpush1.msra.mxu0 0.0
        %905 = vmatprep.subr.mxu0 0.0
        %906 = vmatpush1.msra.mxu0 0.0
        %907 = vmatprep.subr.mxu0 0.0
        %908 = vmatpush1.msra.mxu0 0.0
        %909 = vmatprep.subr.mxu0 0.0
        %910 = vmatpush1.msra.mxu0 0.0
        %911 = vmatprep.subr.mxu0 0.0
        %912 = vmatpush1.msra.mxu0 0.0
        %913 = vmatprep.subr.mxu0 0.0
        %914 = vmatpush1.msra.mxu0 0.0
        %915 = vmatprep.subr.mxu0 0.0
        %916 = vmatpush1.msra.mxu0 0.0
        %917 = vmatprep.subr.mxu0 0.0
        %918 = vmatpush1.msra.mxu0 0.0
        %919 = vmatprep.subr.mxu0 0.0
        %920 = vmatpush1.msra.mxu0 0.0
        %921 = vmatprep.subr.mxu0 0.0
        %922 = vmatpush1.msra.mxu0 0.0
        %923 = vmatprep.subr.mxu0 0.0
        %924 = vmatpush1.msra.mxu0 0.0
        %925 = vmatprep.subr.mxu0 0.0
        %926 = vmatpush1.msra.mxu0 0.0
        %927 = vmatprep.subr.mxu0 0.0
        %928 = vmatpush1.msra.mxu0 0.0
        %929 = vmatprep.subr.mxu0 0.0
        %930 = vmatpush1.msra.mxu0 0.0
        %931 = vmatprep.subr.mxu0 0.0
        %932 = vmatpush1.msra.mxu0 0.0
        %933 = vmatprep.subr.mxu0 0.0
        %934 = vmatpush1.msra.mxu0 0.0
        %935 = vmatprep.subr.mxu0 0.0
        %936 = vmatpush1.msra.mxu0 0.0
        %937 = vmatprep.subr.mxu0 0.0
        %938 = vmatpush1.msra.mxu0 0.0
        %939 = vmatprep.subr.mxu0 0.0
        %940 = vmatpush1.msra.mxu0 0.0
        %941 = vmatprep.subr.mxu0 0.0
        %942 = vmatpush1.msra.mxu0 0.0
        %943 = vmatprep.subr.mxu0 0.0
        %944 = vmatpush1.msra.mxu0 0.0
        %945 = vmatprep.subr.mxu0 0.0
        %946 = vmatpush1.msra.mxu0 0.0
        %947 = vmatprep.subr.mxu0 0.0
        %948 = vmatpush1.msra.mxu0 0.0
        %949 = vmatprep.subr.mxu0 0.0
        %950 = vmatpush1.msra.mxu0 0.0
        %951 = vmatprep.subr.mxu0 0.0
        %952 = vmatpush1.msra.mxu0 0.0
        %953 = vmatprep.subr.mxu0 0.0
        %954 = vmatpush1.msra.mxu0 0.0
        %955 = vmatprep.subr.mxu0 0.0
        %956 = vmatpush1.msra.mxu0 0.0
        %957 = vmatprep.subr.mxu0 0.0
        %958 = vmatpush1.msra.mxu0 0.0
        %959 = vmatprep.subr.mxu0 0.0
        %960 = vmatpush1.msra.mxu0 0.0
        %961 = vmatprep.subr.mxu0 0.0
        %962 = vmatpush1.msra.mxu0 0.0
        %963 = vmatprep.subr.mxu0 0.0
        %964 = vmatpush1.msra.mxu0 0.0
        %965 = vmatprep.mubr.f32.mxu0 0.0
        %966 = vmatmul.mubr.f32.gmra.mrb[0].mxu0 %v764
        %v967 = vpop.f32.mrb[0].mxu0
        %v968 = vadd.f32 %v841, %v967
        %v969 = vpop.f32.mrb[0].mxu0
        %970 = vdwg.mxu0
        %v971 = vadd.f32 %v609, 1e-06
        %v972 = vadd.f32 %v611, 1e-06
        %v973 = vadd.f32 %v613, 1e-06
        %v974 = vadd.f32 %v615, 1e-06
        %v975 = vadd.f32 %v617, 1e-06
        %v976 = vadd.f32 %v619, 1e-06
        %v977 = vadd.f32 %v621, 1e-06
        %v978 = vadd.f32 %v623, 1e-06
        %v979 = vadd.f32 %v833, 1e-06
        %v981 = vcombine.high %v979, %v979
        %v983 = vunpack.c.l.s4 1966171168
        %v984 = vunpack.c.0.s8 %v983
        %v985 = vlaneseq
        %v986 = vshrl.u32 %v985, 7
        %v987 = vsub.s32 %v984, %v986
        %v988 = vrot.slane %v979, %v987
        %v990 = vunpack.c.l.s4 1966171168
        %v991 = vunpack.c.0.s8 %v990
        %v992 = vlaneseq
        %v993 = vshrl.u32 %v992, 7
        %v994 = vsub.s32 %v991, %v993
        %v995 = vrot.slane %v981, %v994
        %v996 = vcombine.high %v988, %v988
        %v997 = vcombine.high %v995, %v995
        %v999 = vunpack.c.l.s4 1966171168
        %v1000 = vunpack.c.0.s8 %v999
        %v1001 = vlaneseq
        %v1002 = vshrl.u32 %v1001, 7
        %v1003 = vsub.s32 %v1000, %v1002
        %v1004 = vrot.slane %v988, %v1003
        %v1006 = vunpack.c.l.s4 1966171168
        %v1007 = vunpack.c.0.s8 %v1006
        %v1008 = vlaneseq
        %v1009 = vshrl.u32 %v1008, 7
        %v1010 = vsub.s32 %v1007, %v1009
        %v1011 = vrot.slane %v995, %v1010
        %v1013 = vunpack.c.l.s4 1966171168
        %v1014 = vunpack.c.0.s8 %v1013
        %v1015 = vlaneseq
        %v1016 = vshrl.u32 %v1015, 7
        %v1017 = vsub.s32 %v1014, %v1016
        %v1018 = vrot.slane %v996, %v1017
        %v1020 = vunpack.c.l.s4 1966171168
        %v1021 = vunpack.c.0.s8 %v1020
        %v1022 = vlaneseq
        %v1023 = vshrl.u32 %v1022, 7
        %v1024 = vsub.s32 %v1021, %v1023
        %v1025 = vrot.slane %v997, %v1024
        %v1026 = vcombine.high %v1004, %v1004
        %v1027 = vcombine.high %v1011, %v1011
        %v1028 = vcombine.high %v1018, %v1018
        %v1029 = vcombine.high %v1025, %v1025
        %v1038 = vmul.f32 %v971, %v1004
        %v1039 = vmul.f32 %v972, %v1018
        %v1040 = vmul.f32 %v973, %v1026
        %v1041 = vmul.f32 %v974, %v1028
        %v1042 = vmul.f32 %v975, %v1011
        %v1043 = vmul.f32 %v976, %v1025
        %v1044 = vmul.f32 %v977, %v1027
        %v1045 = vmul.f32 %v978, %v1029
        %v1054 = vcombine.low %v1038, %v1039
        %v1055 = vcombine.low %v1040, %v1041
        %v1056 = vcombine.low %v1042, %v1043
        %v1057 = vcombine.low %v1044, %v1045
        %v1059 = vunpack.c.l.s4 1966171168
        %v1060 = vunpack.c.0.s8 %v1059
        %v1061 = vlaneseq
        %v1062 = vshrl.u32 %v1061, 7
        %v1063 = vsub.s32 %v1060, %v1062
        %v1064 = vrot.slane %v1054, %v1063
        %v1066 = vunpack.c.l.s4 1966171168
        %v1067 = vunpack.c.0.s8 %v1066
        %v1068 = vlaneseq
        %v1069 = vshrl.u32 %v1068, 7
        %v1070 = vsub.s32 %v1067, %v1069
        %v1071 = vrot.slane %v1055, %v1070
        %v1073 = vunpack.c.l.s4 1966171168
        %v1074 = vunpack.c.0.s8 %v1073
        %v1075 = vlaneseq
        %v1076 = vshrl.u32 %v1075, 7
        %v1077 = vsub.s32 %v1074, %v1076
        %v1078 = vrot.slane %v1056, %v1077
        %v1080 = vunpack.c.l.s4 1966171168
        %v1081 = vunpack.c.0.s8 %v1080
        %v1082 = vlaneseq
        %v1083 = vshrl.u32 %v1082, 7
        %v1084 = vsub.s32 %v1081, %v1083
        %v1085 = vrot.slane %v1057, %v1084
        %v1086 = vcombine.low %v1064, %v1071
        %v1087 = vcombine.low %v1078, %v1085
        %v1089 = vunpack.c.l.s4 1966171168
        %v1090 = vunpack.c.0.s8 %v1089
        %v1091 = vlaneseq
        %v1092 = vshrl.u32 %v1091, 7
        %v1093 = vsub.s32 %v1090, %v1092
        %v1094 = vrot.slane %v1086, %v1093
        %v1096 = vunpack.c.l.s4 1966171168
        %v1097 = vunpack.c.0.s8 %v1096
        %v1098 = vlaneseq
        %v1099 = vshrl.u32 %v1098, 7
        %v1100 = vsub.s32 %v1097, %v1099
        %v1101 = vrot.slane %v1087, %v1100
        %v1102 = vcombine.low %v1094, %v1101
        %vm1103 = vcmask 261120
        %v1104 = vsel %vm1103, %v1102, 0
        %1106 = vmatprep.subr.mxu0 0.0
        %1107 = vmatpush1.msra.mxu0 %v563
        %1108 = vmatprep.subr.mxu0 0.0
        %1109 = vmatpush1.msra.mxu0 %v564
        %1110 = vmatprep.subr.mxu0 0.0
        %1111 = vmatpush1.msra.mxu0 %v565
        %1112 = vmatprep.subr.mxu0 0.0
        %1113 = vmatpush1.msra.mxu0 %v566
        %1114 = vmatprep.subr.mxu0 0.0
        %1115 = vmatpush1.msra.mxu0 0.0
        %1116 = vmatprep.subr.mxu0 0.0
        %1117 = vmatpush1.msra.mxu0 0.0
        %1118 = vmatprep.subr.mxu0 0.0
        %1119 = vmatpush1.msra.mxu0 0.0
        %1120 = vmatprep.subr.mxu0 0.0
        %1121 = vmatpush1.msra.mxu0 0.0
        %1122 = vmatprep.subr.mxu0 0.0
        %1123 = vmatpush1.msra.mxu0 0.0
        %1124 = vmatprep.subr.mxu0 0.0
        %1125 = vmatpush1.msra.mxu0 0.0
        %1126 = vmatprep.subr.mxu0 0.0
        %1127 = vmatpush1.msra.mxu0 0.0
        %1128 = vmatprep.subr.mxu0 0.0
        %1129 = vmatpush1.msra.mxu0 0.0
        %1130 = vmatprep.subr.mxu0 0.0
        %1131 = vmatpush1.msra.mxu0 0.0
        %1132 = vmatprep.subr.mxu0 0.0
        %1133 = vmatpush1.msra.mxu0 0.0
        %1134 = vmatprep.subr.mxu0 0.0
        %1135 = vmatpush1.msra.mxu0 0.0
        %1136 = vmatprep.subr.mxu0 0.0
        %1137 = vmatpush1.msra.mxu0 0.0
        %1138 = vmatprep.subr.mxu0 0.0
        %1139 = vmatpush1.msra.mxu0 0.0
        %1140 = vmatprep.subr.mxu0 0.0
        %1141 = vmatpush1.msra.mxu0 0.0
        %1142 = vmatprep.subr.mxu0 0.0
        %1143 = vmatpush1.msra.mxu0 0.0
        %1144 = vmatprep.subr.mxu0 0.0
        %1145 = vmatpush1.msra.mxu0 0.0
        %1146 = vmatprep.subr.mxu0 0.0
        %1147 = vmatpush1.msra.mxu0 0.0
        %1148 = vmatprep.subr.mxu0 0.0
        %1149 = vmatpush1.msra.mxu0 0.0
        %1150 = vmatprep.subr.mxu0 0.0
        %1151 = vmatpush1.msra.mxu0 0.0
        %1152 = vmatprep.subr.mxu0 0.0
        %1153 = vmatpush1.msra.mxu0 0.0
        %1154 = vmatprep.subr.mxu0 0.0
        %1155 = vmatpush1.msra.mxu0 0.0
        %1156 = vmatprep.subr.mxu0 0.0
        %1157 = vmatpush1.msra.mxu0 0.0
        %1158 = vmatprep.subr.mxu0 0.0
        %1159 = vmatpush1.msra.mxu0 0.0
        %1160 = vmatprep.subr.mxu0 0.0
        %1161 = vmatpush1.msra.mxu0 0.0
        %1162 = vmatprep.subr.mxu0 0.0
        %1163 = vmatpush1.msra.mxu0 0.0
        %1164 = vmatprep.subr.mxu0 0.0
        %1165 = vmatpush1.msra.mxu0 0.0
        %1166 = vmatprep.subr.mxu0 0.0
        %1167 = vmatpush1.msra.mxu0 0.0
        %1168 = vmatprep.subr.mxu0 0.0
        %1169 = vmatpush1.msra.mxu0 0.0
        %1170 = vmatprep.mubr.f32.mxu0 0.0
        %1171 = vmatmul.mubr.f32.gmra.mrb[0].mxu0 %v1104
        %v1172 = vpop.f32.mrb[0].mxu0
        %v1173 = vadd.f32 0.0, %v1172
        %v1174 = vpop.f32.mrb[0].mxu0
        %1175 = vdwg.mxu0
        %v1176 = vrcp.pop %v1173
        %v1177 = vadd.f32 %v665, 1e-06
        %v1178 = vadd.f32 %v667, 1e-06
        %v1179 = vadd.f32 %v669, 1e-06
        %v1180 = vadd.f32 %v671, 1e-06
        %v1181 = vadd.f32 %v673, 1e-06
        %v1182 = vadd.f32 %v675, 1e-06
        %v1183 = vadd.f32 %v677, 1e-06
        %v1184 = vadd.f32 %v679, 1e-06
        %v1185 = vadd.f32 %v968, 1e-06
        %v1187 = vcombine.high %v1185, %v1185
        %v1189 = vunpack.c.l.s4 1966171168
        %v1190 = vunpack.c.0.s8 %v1189
        %v1191 = vlaneseq
        %v1192 = vshrl.u32 %v1191, 7
        %v1193 = vsub.s32 %v1190, %v1192
        %v1194 = vrot.slane %v1185, %v1193
        %v1196 = vunpack.c.l.s4 1966171168
        %v1197 = vunpack.c.0.s8 %v1196
        %v1198 = vlaneseq
        %v1199 = vshrl.u32 %v1198, 7
        %v1200 = vsub.s32 %v1197, %v1199
        %v1201 = vrot.slane %v1187, %v1200
        %v1202 = vcombine.high %v1194, %v1194
        %v1203 = vcombine.high %v1201, %v1201
        %v1205 = vunpack.c.l.s4 1966171168
        %v1206 = vunpack.c.0.s8 %v1205
        %v1207 = vlaneseq
        %v1208 = vshrl.u32 %v1207, 7
        %v1209 = vsub.s32 %v1206, %v1208
        %v1210 = vrot.slane %v1194, %v1209
        %v1212 = vunpack.c.l.s4 1966171168
        %v1213 = vunpack.c.0.s8 %v1212
        %v1214 = vlaneseq
        %v1215 = vshrl.u32 %v1214, 7
        %v1216 = vsub.s32 %v1213, %v1215
        %v1217 = vrot.slane %v1201, %v1216
        %v1219 = vunpack.c.l.s4 1966171168
        %v1220 = vunpack.c.0.s8 %v1219
        %v1221 = vlaneseq
        %v1222 = vshrl.u32 %v1221, 7
        %v1223 = vsub.s32 %v1220, %v1222
        %v1224 = vrot.slane %v1202, %v1223
        %v1226 = vunpack.c.l.s4 1966171168
        %v1227 = vunpack.c.0.s8 %v1226
        %v1228 = vlaneseq
        %v1229 = vshrl.u32 %v1228, 7
        %v1230 = vsub.s32 %v1227, %v1229
        %v1231 = vrot.slane %v1203, %v1230
        %v1232 = vcombine.high %v1210, %v1210
        %v1233 = vcombine.high %v1217, %v1217
        %v1234 = vcombine.high %v1224, %v1224
        %v1235 = vcombine.high %v1231, %v1231
        %v1244 = vmul.f32 %v1177, %v1210
        %v1245 = vmul.f32 %v1178, %v1224
        %v1246 = vmul.f32 %v1179, %v1232
        %v1247 = vmul.f32 %v1180, %v1234
        %v1248 = vmul.f32 %v1181, %v1217
        %v1249 = vmul.f32 %v1182, %v1231
        %v1250 = vmul.f32 %v1183, %v1233
        %v1251 = vmul.f32 %v1184, %v1235
        %v1260 = vcombine.low %v1244, %v1245
        %v1261 = vcombine.low %v1246, %v1247
        %v1262 = vcombine.low %v1248, %v1249
        %v1263 = vcombine.low %v1250, %v1251
        %v1265 = vunpack.c.l.s4 1966171168
        %v1266 = vunpack.c.0.s8 %v1265
        %v1267 = vlaneseq
        %v1268 = vshrl.u32 %v1267, 7
        %v1269 = vsub.s32 %v1266, %v1268
        %v1270 = vrot.slane %v1260, %v1269
        %v1272 = vunpack.c.l.s4 1966171168
        %v1273 = vunpack.c.0.s8 %v1272
        %v1274 = vlaneseq
        %v1275 = vshrl.u32 %v1274, 7
        %v1276 = vsub.s32 %v1273, %v1275
        %v1277 = vrot.slane %v1261, %v1276
        %v1279 = vunpack.c.l.s4 1966171168
        %v1280 = vunpack.c.0.s8 %v1279
        %v1281 = vlaneseq
        %v1282 = vshrl.u32 %v1281, 7
        %v1283 = vsub.s32 %v1280, %v1282
        %v1284 = vrot.slane %v1262, %v1283
        %v1286 = vunpack.c.l.s4 1966171168
        %v1287 = vunpack.c.0.s8 %v1286
        %v1288 = vlaneseq
        %v1289 = vshrl.u32 %v1288, 7
        %v1290 = vsub.s32 %v1287, %v1289
        %v1291 = vrot.slane %v1263, %v1290
        %v1292 = vcombine.low %v1270, %v1277
        %v1293 = vcombine.low %v1284, %v1291
        %v1295 = vunpack.c.l.s4 1966171168
        %v1296 = vunpack.c.0.s8 %v1295
        %v1297 = vlaneseq
        %v1298 = vshrl.u32 %v1297, 7
        %v1299 = vsub.s32 %v1296, %v1298
        %v1300 = vrot.slane %v1292, %v1299
        %v1302 = vunpack.c.l.s4 1966171168
        %v1303 = vunpack.c.0.s8 %v1302
        %v1304 = vlaneseq
        %v1305 = vshrl.u32 %v1304, 7
        %v1306 = vsub.s32 %v1303, %v1305
        %v1307 = vrot.slane %v1293, %v1306
        %v1308 = vcombine.low %v1300, %v1307
        %v1309 = vsel %vm1103, %v1308, 0
        %1311 = vmatprep.subr.mxu0 0.0
        %1312 = vmatpush1.msra.mxu0 %v563
        %1313 = vmatprep.subr.mxu0 0.0
        %1314 = vmatpush1.msra.mxu0 %v564
        %1315 = vmatprep.subr.mxu0 0.0
        %1316 = vmatpush1.msra.mxu0 %v565
        %1317 = vmatprep.subr.mxu0 0.0
        %1318 = vmatpush1.msra.mxu0 %v566
        %1319 = vmatprep.subr.mxu0 0.0
        %1320 = vmatpush1.msra.mxu0 0.0
        %1321 = vmatprep.subr.mxu0 0.0
        %1322 = vmatpush1.msra.mxu0 0.0
        %1323 = vmatprep.subr.mxu0 0.0
        %1324 = vmatpush1.msra.mxu0 0.0
        %1325 = vmatprep.subr.mxu0 0.0
        %1326 = vmatpush1.msra.mxu0 0.0
        %1327 = vmatprep.subr.mxu0 0.0
        %1328 = vmatpush1.msra.mxu0 0.0
        %1329 = vmatprep.subr.mxu0 0.0
        %1330 = vmatpush1.msra.mxu0 0.0
        %1331 = vmatprep.subr.mxu0 0.0
        %1332 = vmatpush1.msra.mxu0 0.0
        %1333 = vmatprep.subr.mxu0 0.0
        %1334 = vmatpush1.msra.mxu0 0.0
        %1335 = vmatprep.subr.mxu0 0.0
        %1336 = vmatpush1.msra.mxu0 0.0
        %1337 = vmatprep.subr.mxu0 0.0
        %1338 = vmatpush1.msra.mxu0 0.0
        %1339 = vmatprep.subr.mxu0 0.0
        %1340 = vmatpush1.msra.mxu0 0.0
        %1341 = vmatprep.subr.mxu0 0.0
        %1342 = vmatpush1.msra.mxu0 0.0
        %1343 = vmatprep.subr.mxu0 0.0
        %1344 = vmatpush1.msra.mxu0 0.0
        %1345 = vmatprep.subr.mxu0 0.0
        %1346 = vmatpush1.msra.mxu0 0.0
        %1347 = vmatprep.subr.mxu0 0.0
        %1348 = vmatpush1.msra.mxu0 0.0
        %1349 = vmatprep.subr.mxu0 0.0
        %1350 = vmatpush1.msra.mxu0 0.0
        %1351 = vmatprep.subr.mxu0 0.0
        %1352 = vmatpush1.msra.mxu0 0.0
        %1353 = vmatprep.subr.mxu0 0.0
        %1354 = vmatpush1.msra.mxu0 0.0
        %1355 = vmatprep.subr.mxu0 0.0
        %1356 = vmatpush1.msra.mxu0 0.0
        %1357 = vmatprep.subr.mxu0 0.0
        %1358 = vmatpush1.msra.mxu0 0.0
        %1359 = vmatprep.subr.mxu0 0.0
        %1360 = vmatpush1.msra.mxu0 0.0
        %1361 = vmatprep.subr.mxu0 0.0
        %1362 = vmatpush1.msra.mxu0 0.0
        %1363 = vmatprep.subr.mxu0 0.0
        %1364 = vmatpush1.msra.mxu0 0.0
        %1365 = vmatprep.subr.mxu0 0.0
        %1366 = vmatpush1.msra.mxu0 0.0
        %1367 = vmatprep.subr.mxu0 0.0
        %1368 = vmatpush1.msra.mxu0 0.0
        %1369 = vmatprep.subr.mxu0 0.0
        %1370 = vmatpush1.msra.mxu0 0.0
        %1371 = vmatprep.subr.mxu0 0.0
        %1372 = vmatpush1.msra.mxu0 0.0
        %1373 = vmatprep.subr.mxu0 0.0
        %1374 = vmatpush1.msra.mxu0 0.0
        %1375 = vmatprep.mubr.f32.mxu0 0.0
        %1376 = vmatmul.mubr.f32.gmra.mrb[0].mxu0 %v1309
        %v1377 = vpop.f32.mrb[0].mxu0
        %v1378 = vadd.f32 0.0, %v1377
        %v1379 = vpop.f32.mrb[0].mxu0
        %1380 = vdwg.mxu0
        %v1381 = vrcp.pop %v1378
        %v1382 = vmul.f32 %v1176, %v695
        %v1383 = vmul.f32 %v1381, %v695
        %vm1384 = vcmask 31744
        %v1386 = vsel %vm1384, %v1383, 0
        %vm1388 = vcmask 1043456
        %v1390 = vsel %vm1388, %v567, 0
        %1392 = vmatprep.subr.mxu0 0.0
        %1393 = vmatpush1.msra.mxu0 %v1390
        %1394 = vmatprep.subr.mxu0 0.0
        %1395 = vmatpush1.msra.mxu0 0.0
        %1396 = vmatprep.subr.mxu0 0.0
        %1397 = vmatpush1.msra.mxu0 0.0
        %1398 = vmatprep.subr.mxu0 0.0
        %1399 = vmatpush1.msra.mxu0 0.0
        %1400 = vmatprep.subr.mxu0 0.0
        %1401 = vmatpush1.msra.mxu0 0.0
        %1402 = vmatprep.subr.mxu0 0.0
        %1403 = vmatpush1.msra.mxu0 0.0
        %1404 = vmatprep.subr.mxu0 0.0
        %1405 = vmatpush1.msra.mxu0 0.0
        %1406 = vmatprep.subr.mxu0 0.0
        %1407 = vmatpush1.msra.mxu0 0.0
        %1408 = vmatprep.subr.mxu0 0.0
        %1409 = vmatpush1.msra.mxu0 0.0
        %1410 = vmatprep.subr.mxu0 0.0
        %1411 = vmatpush1.msra.mxu0 0.0
        %1412 = vmatprep.subr.mxu0 0.0
        %1413 = vmatpush1.msra.mxu0 0.0
        %1414 = vmatprep.subr.mxu0 0.0
        %1415 = vmatpush1.msra.mxu0 0.0
        %1416 = vmatprep.subr.mxu0 0.0
        %1417 = vmatpush1.msra.mxu0 0.0
        %1418 = vmatprep.subr.mxu0 0.0
        %1419 = vmatpush1.msra.mxu0 0.0
        %1420 = vmatprep.subr.mxu0 0.0
        %1421 = vmatpush1.msra.mxu0 0.0
        %1422 = vmatprep.subr.mxu0 0.0
        %1423 = vmatpush1.msra.mxu0 0.0
        %1424 = vmatprep.subr.mxu0 0.0
        %1425 = vmatpush1.msra.mxu0 0.0
        %1426 = vmatprep.subr.mxu0 0.0
        %1427 = vmatpush1.msra.mxu0 0.0
        %1428 = vmatprep.subr.mxu0 0.0
        %1429 = vmatpush1.msra.mxu0 0.0
        %1430 = vmatprep.subr.mxu0 0.0
        %1431 = vmatpush1.msra.mxu0 0.0
        %1432 = vmatprep.subr.mxu0 0.0
        %1433 = vmatpush1.msra.mxu0 0.0
        %1434 = vmatprep.subr.mxu0 0.0
        %1435 = vmatpush1.msra.mxu0 0.0
        %1436 = vmatprep.subr.mxu0 0.0
        %1437 = vmatpush1.msra.mxu0 0.0
        %1438 = vmatprep.subr.mxu0 0.0
        %1439 = vmatpush1.msra.mxu0 0.0
        %1440 = vmatprep.subr.mxu0 0.0
        %1441 = vmatpush1.msra.mxu0 0.0
        %1442 = vmatprep.subr.mxu0 0.0
        %1443 = vmatpush1.msra.mxu0 0.0
        %1444 = vmatprep.subr.mxu0 0.0
        %1445 = vmatpush1.msra.mxu0 0.0
        %1446 = vmatprep.subr.mxu0 0.0
        %1447 = vmatpush1.msra.mxu0 0.0
        %1448 = vmatprep.subr.mxu0 0.0
        %1449 = vmatpush1.msra.mxu0 0.0
        %1450 = vmatprep.subr.mxu0 0.0
        %1451 = vmatpush1.msra.mxu0 0.0
        %1452 = vmatprep.subr.mxu0 0.0
        %1453 = vmatpush1.msra.mxu0 0.0
        %1454 = vmatprep.subr.mxu0 0.0
        %1455 = vmatpush1.msra.mxu0 0.0
        %1456 = vmatprep.mubr.f32.mxu0 0.0
        %1457 = vmatmul.mubr.f32.gmra.mrb[0].mxu0 %v1386
        %v1458 = vpop.f32.mrb[0].mxu0
        %v1459 = vadd.f32 0.0, %v1458
        %v1460 = vpop.f32.mrb[0].mxu0
        %1461 = vdwg.mxu0
        %v1463 = vcombine.high %v1459, %v1459
        %v1465 = vunpack.c.l.s4 1966171168
        %v1466 = vunpack.c.0.s8 %v1465
        %v1467 = vlaneseq
        %v1468 = vshrl.u32 %v1467, 7
        %v1469 = vsub.s32 %v1466, %v1468
        %v1470 = vrot.slane %v1459, %v1469
        %v1472 = vunpack.c.l.s4 1966171168
        %v1473 = vunpack.c.0.s8 %v1472
        %v1474 = vlaneseq
        %v1475 = vshrl.u32 %v1474, 7
        %v1476 = vsub.s32 %v1473, %v1475
        %v1477 = vrot.slane %v1463, %v1476
        %v1478 = vcombine.high %v1470, %v1470
        %v1479 = vcombine.high %v1477, %v1477
        %v1481 = vunpack.c.l.s4 1966171168
        %v1482 = vunpack.c.0.s8 %v1481
        %v1483 = vlaneseq
        %v1484 = vshrl.u32 %v1483, 7
        %v1485 = vsub.s32 %v1482, %v1484
        %v1486 = vrot.slane %v1470, %v1485
        %v1488 = vunpack.c.l.s4 1966171168
        %v1489 = vunpack.c.0.s8 %v1488
        %v1490 = vlaneseq
        %v1491 = vshrl.u32 %v1490, 7
        %v1492 = vsub.s32 %v1489, %v1491
        %v1493 = vrot.slane %v1477, %v1492
        %v1495 = vunpack.c.l.s4 1966171168
        %v1496 = vunpack.c.0.s8 %v1495
        %v1497 = vlaneseq
        %v1498 = vshrl.u32 %v1497, 7
        %v1499 = vsub.s32 %v1496, %v1498
        %v1500 = vrot.slane %v1478, %v1499
        %v1502 = vunpack.c.l.s4 1966171168
        %v1503 = vunpack.c.0.s8 %v1502
        %v1504 = vlaneseq
        %v1505 = vshrl.u32 %v1504, 7
        %v1506 = vsub.s32 %v1503, %v1505
        %v1507 = vrot.slane %v1479, %v1506
        %v1508 = vcombine.high %v1486, %v1486
        %v1509 = vcombine.high %v1493, %v1493
        %v1510 = vcombine.high %v1500, %v1500
        %v1511 = vcombine.high %v1507, %v1507
        %v1520 = vmul.f32 %v665, %v1486
        %v1521 = vmul.f32 %v667, %v1500
        %v1522 = vmul.f32 %v669, %v1508
        %v1523 = vmul.f32 %v671, %v1510
        %v1524 = vmul.f32 %v673, %v1493
        %v1525 = vmul.f32 %v675, %v1507
        %v1526 = vmul.f32 %v677, %v1509
        %v1527 = vmul.f32 %v679, %v1511
        %v1529 = vsel %vm1384, %v1382, 0
        %1531 = vmatprep.subr.mxu0 0.0
        %1532 = vmatpush1.msra.mxu0 %v1390
        %1533 = vmatprep.subr.mxu0 0.0
        %1534 = vmatpush1.msra.mxu0 0.0
        %1535 = vmatprep.subr.mxu0 0.0
        %1536 = vmatpush1.msra.mxu0 0.0
        %1537 = vmatprep.subr.mxu0 0.0
        %1538 = vmatpush1.msra.mxu0 0.0
        %1539 = vmatprep.subr.mxu0 0.0
        %1540 = vmatpush1.msra.mxu0 0.0
        %1541 = vmatprep.subr.mxu0 0.0
        %1542 = vmatpush1.msra.mxu0 0.0
        %1543 = vmatprep.subr.mxu0 0.0
        %1544 = vmatpush1.msra.mxu0 0.0
        %1545 = vmatprep.subr.mxu0 0.0
        %1546 = vmatpush1.msra.mxu0 0.0
        %1547 = vmatprep.subr.mxu0 0.0
        %1548 = vmatpush1.msra.mxu0 0.0
        %1549 = vmatprep.subr.mxu0 0.0
        %1550 = vmatpush1.msra.mxu0 0.0
        %1551 = vmatprep.subr.mxu0 0.0
        %1552 = vmatpush1.msra.mxu0 0.0
        %1553 = vmatprep.subr.mxu0 0.0
        %1554 = vmatpush1.msra.mxu0 0.0
        %1555 = vmatprep.subr.mxu0 0.0
        %1556 = vmatpush1.msra.mxu0 0.0
        %1557 = vmatprep.subr.mxu0 0.0
        %1558 = vmatpush1.msra.mxu0 0.0
        %1559 = vmatprep.subr.mxu0 0.0
        %1560 = vmatpush1.msra.mxu0 0.0
        %1561 = vmatprep.subr.mxu0 0.0
        %1562 = vmatpush1.msra.mxu0 0.0
        %1563 = vmatprep.subr.mxu0 0.0
        %1564 = vmatpush1.msra.mxu0 0.0
        %1565 = vmatprep.subr.mxu0 0.0
        %1566 = vmatpush1.msra.mxu0 0.0
        %1567 = vmatprep.subr.mxu0 0.0
        %1568 = vmatpush1.msra.mxu0 0.0
        %1569 = vmatprep.subr.mxu0 0.0
        %1570 = vmatpush1.msra.mxu0 0.0
        %1571 = vmatprep.subr.mxu0 0.0
        %1572 = vmatpush1.msra.mxu0 0.0
        %1573 = vmatprep.subr.mxu0 0.0
        %1574 = vmatpush1.msra.mxu0 0.0
        %1575 = vmatprep.subr.mxu0 0.0
        %1576 = vmatpush1.msra.mxu0 0.0
        %1577 = vmatprep.subr.mxu0 0.0
        %1578 = vmatpush1.msra.mxu0 0.0
        %1579 = vmatprep.subr.mxu0 0.0
        %1580 = vmatpush1.msra.mxu0 0.0
        %1581 = vmatprep.subr.mxu0 0.0
        %1582 = vmatpush1.msra.mxu0 0.0
        %1583 = vmatprep.subr.mxu0 0.0
        %1584 = vmatpush1.msra.mxu0 0.0
        %1585 = vmatprep.subr.mxu0 0.0
        %1586 = vmatpush1.msra.mxu0 0.0
        %1587 = vmatprep.subr.mxu0 0.0
        %1588 = vmatpush1.msra.mxu0 0.0
        %1589 = vmatprep.subr.mxu0 0.0
        %1590 = vmatpush1.msra.mxu0 0.0
        %1591 = vmatprep.subr.mxu0 0.0
        %1592 = vmatpush1.msra.mxu0 0.0
        %1593 = vmatprep.subr.mxu0 0.0
        %1594 = vmatpush1.msra.mxu0 0.0
        %1595 = vmatprep.mubr.f32.mxu0 0.0
        %1596 = vmatmul.mubr.f32.gmra.mrb[0].mxu0 %v1529
        %v1597 = vpop.f32.mrb[0].mxu0
        %v1598 = vadd.f32 0.0, %v1597
        %v1599 = vpop.f32.mrb[0].mxu0
        %1600 = vdwg.mxu0
        %v1602 = vcombine.high %v1598, %v1598
        %v1604 = vunpack.c.l.s4 1966171168
        %v1605 = vunpack.c.0.s8 %v1604
        %v1606 = vlaneseq
        %v1607 = vshrl.u32 %v1606, 7
        %v1608 = vsub.s32 %v1605, %v1607
        %v1609 = vrot.slane %v1598, %v1608
        %v1611 = vunpack.c.l.s4 1966171168
        %v1612 = vunpack.c.0.s8 %v1611
        %v1613 = vlaneseq
        %v1614 = vshrl.u32 %v1613, 7
        %v1615 = vsub.s32 %v1612, %v1614
        %v1616 = vrot.slane %v1602, %v1615
        %v1617 = vcombine.high %v1609, %v1609
        %v1618 = vcombine.high %v1616, %v1616
        %v1620 = vunpack.c.l.s4 1966171168
        %v1621 = vunpack.c.0.s8 %v1620
        %v1622 = vlaneseq
        %v1623 = vshrl.u32 %v1622, 7
        %v1624 = vsub.s32 %v1621, %v1623
        %v1625 = vrot.slane %v1609, %v1624
        %v1627 = vunpack.c.l.s4 1966171168
        %v1628 = vunpack.c.0.s8 %v1627
        %v1629 = vlaneseq
        %v1630 = vshrl.u32 %v1629, 7
        %v1631 = vsub.s32 %v1628, %v1630
        %v1632 = vrot.slane %v1616, %v1631
        %v1634 = vunpack.c.l.s4 1966171168
        %v1635 = vunpack.c.0.s8 %v1634
        %v1636 = vlaneseq
        %v1637 = vshrl.u32 %v1636, 7
        %v1638 = vsub.s32 %v1635, %v1637
        %v1639 = vrot.slane %v1617, %v1638
        %v1641 = vunpack.c.l.s4 1966171168
        %v1642 = vunpack.c.0.s8 %v1641
        %v1643 = vlaneseq
        %v1644 = vshrl.u32 %v1643, 7
        %v1645 = vsub.s32 %v1642, %v1644
        %v1646 = vrot.slane %v1618, %v1645
        %v1647 = vcombine.high %v1625, %v1625
        %v1648 = vcombine.high %v1632, %v1632
        %v1649 = vcombine.high %v1639, %v1639
        %v1650 = vcombine.high %v1646, %v1646
        %v1659 = vmul.f32 %v609, %v1625
        %v1660 = vmul.f32 %v611, %v1639
        %v1661 = vmul.f32 %v613, %v1647
        %v1662 = vmul.f32 %v615, %v1649
        %v1663 = vmul.f32 %v617, %v1632
        %v1664 = vmul.f32 %v619, %v1646
        %v1665 = vmul.f32 %v621, %v1648
        %v1666 = vmul.f32 %v623, %v1650
        %v1667 = vld [vmem:[#allocation4] sm:$0x1]
        %v1669 = vlaneseq
        %v1670 = vshrl.u32 %v1669, 7
        %v1671 = vsub.s32 0, %v1670
        %v1672 = vrot.slane %v1667, %v1671
        %v1682 = vcombine.low %v1520, %v1521
        %v1683 = vcombine.low %v1522, %v1523
        %v1684 = vcombine.low %v1524, %v1525
        %v1685 = vcombine.low %v1526, %v1527
        %v1687 = vunpack.c.l.s4 1966171168
        %v1688 = vunpack.c.0.s8 %v1687
        %v1689 = vlaneseq
        %v1690 = vshrl.u32 %v1689, 7
        %v1691 = vsub.s32 %v1688, %v1690
        %v1692 = vrot.slane %v1682, %v1691
        %v1694 = vunpack.c.l.s4 1966171168
        %v1695 = vunpack.c.0.s8 %v1694
        %v1696 = vlaneseq
        %v1697 = vshrl.u32 %v1696, 7
        %v1698 = vsub.s32 %v1695, %v1697
        %v1699 = vrot.slane %v1683, %v1698
        %v1701 = vunpack.c.l.s4 1966171168
        %v1702 = vunpack.c.0.s8 %v1701
        %v1703 = vlaneseq
        %v1704 = vshrl.u32 %v1703, 7
        %v1705 = vsub.s32 %v1702, %v1704
        %v1706 = vrot.slane %v1684, %v1705
        %v1708 = vunpack.c.l.s4 1966171168
        %v1709 = vunpack.c.0.s8 %v1708
        %v1710 = vlaneseq
        %v1711 = vshrl.u32 %v1710, 7
        %v1712 = vsub.s32 %v1709, %v1711
        %v1713 = vrot.slane %v1685, %v1712
        %v1714 = vcombine.low %v1692, %v1699
        %v1715 = vcombine.low %v1706, %v1713
        %v1717 = vunpack.c.l.s4 1966171168
        %v1718 = vunpack.c.0.s8 %v1717
        %v1719 = vlaneseq
        %v1720 = vshrl.u32 %v1719, 7
        %v1721 = vsub.s32 %v1718, %v1720
        %v1722 = vrot.slane %v1714, %v1721
        %v1724 = vunpack.c.l.s4 1966171168
        %v1725 = vunpack.c.0.s8 %v1724
        %v1726 = vlaneseq
        %v1727 = vshrl.u32 %v1726, 7
        %v1728 = vsub.s32 %v1725, %v1727
        %v1729 = vrot.slane %v1715, %v1728
        %v1730 = vcombine.low %v1722, %v1729
        %1732 = vmatprep.subr.mxu0 0.0
        %1733 = vmatpush1.msra.mxu0 %v1730
        %1734 = vmatprep.subr.mxu0 0.0
        %1735 = vmatpush1.msra.mxu0 0.0
        %1736 = vmatprep.subr.mxu0 0.0
        %1737 = vmatpush1.msra.mxu0 0.0
        %1738 = vmatprep.subr.mxu0 0.0
        %1739 = vmatpush1.msra.mxu0 0.0
        %1740 = vmatprep.subr.mxu0 0.0
        %1741 = vmatpush1.msra.mxu0 0.0
        %1742 = vmatprep.subr.mxu0 0.0
        %1743 = vmatpush1.msra.mxu0 0.0
        %1744 = vmatprep.subr.mxu0 0.0
        %1745 = vmatpush1.msra.mxu0 0.0
        %1746 = vmatprep.subr.mxu0 0.0
        %1747 = vmatpush1.msra.mxu0 0.0
        %1748 = vmatprep.subr.mxu0 0.0
        %1749 = vmatpush1.msra.mxu0 0.0
        %1750 = vmatprep.subr.mxu0 0.0
        %1751 = vmatpush1.msra.mxu0 0.0
        %1752 = vmatprep.subr.mxu0 0.0
        %1753 = vmatpush1.msra.mxu0 0.0
        %1754 = vmatprep.subr.mxu0 0.0
        %1755 = vmatpush1.msra.mxu0 0.0
        %1756 = vmatprep.subr.mxu0 0.0
        %1757 = vmatpush1.msra.mxu0 0.0
        %1758 = vmatprep.subr.mxu0 0.0
        %1759 = vmatpush1.msra.mxu0 0.0
        %1760 = vmatprep.subr.mxu0 0.0
        %1761 = vmatpush1.msra.mxu0 0.0
        %1762 = vmatprep.subr.mxu0 0.0
        %1763 = vmatpush1.msra.mxu0 0.0
        %1764 = vmatprep.subr.mxu0 0.0
        %1765 = vmatpush1.msra.mxu0 0.0
        %1766 = vmatprep.subr.mxu0 0.0
        %1767 = vmatpush1.msra.mxu0 0.0
        %1768 = vmatprep.subr.mxu0 0.0
        %1769 = vmatpush1.msra.mxu0 0.0
        %1770 = vmatprep.subr.mxu0 0.0
        %1771 = vmatpush1.msra.mxu0 0.0
        %1772 = vmatprep.subr.mxu0 0.0
        %1773 = vmatpush1.msra.mxu0 0.0
        %1774 = vmatprep.subr.mxu0 0.0
        %1775 = vmatpush1.msra.mxu0 0.0
        %1776 = vmatprep.subr.mxu0 0.0
        %1777 = vmatpush1.msra.mxu0 0.0
        %1778 = vmatprep.subr.mxu0 0.0
        %1779 = vmatpush1.msra.mxu0 0.0
        %1780 = vmatprep.subr.mxu0 0.0
        %1781 = vmatpush1.msra.mxu0 0.0
        %1782 = vmatprep.subr.mxu0 0.0
        %1783 = vmatpush1.msra.mxu0 0.0
        %1784 = vmatprep.subr.mxu0 0.0
        %1785 = vmatpush1.msra.mxu0 0.0
        %1786 = vmatprep.subr.mxu0 0.0
        %1787 = vmatpush1.msra.mxu0 0.0
        %1788 = vmatprep.subr.mxu0 0.0
        %1789 = vmatpush1.msra.mxu0 0.0
        %1790 = vmatprep.subr.mxu0 0.0
        %1791 = vmatpush1.msra.mxu0 0.0
        %1792 = vmatprep.subr.mxu0 0.0
        %1793 = vmatpush1.msra.mxu0 0.0
        %1794 = vmatprep.subr.mxu0 0.0
        %1795 = vmatpush1.msra.mxu0 0.0
        %1796 = vmatprep.mubr.f32.mxu0 0.0
        %1797 = vmatmul.mubr.f32.gmra.mrb[0].mxu0 %v764
        %v1798 = vpop.f32.mrb[0].mxu0
        %v1799 = vadd.f32 %v1672, %v1798
        %v1800 = vpop.f32.mrb[0].mxu0
        %1801 = vdwg.mxu0
        %v1802 = vld [vmem:[#allocation5] sm:$0x1]
        %v1804 = vlaneseq
        %v1805 = vshrl.u32 %v1804, 7
        %v1806 = vsub.s32 0, %v1805
        %v1807 = vrot.slane %v1802, %v1806
        %v1817 = vcombine.low %v1659, %v1660
        %v1818 = vcombine.low %v1661, %v1662
        %v1819 = vcombine.low %v1663, %v1664
        %v1820 = vcombine.low %v1665, %v1666
        %v1822 = vunpack.c.l.s4 1966171168
        %v1823 = vunpack.c.0.s8 %v1822
        %v1824 = vlaneseq
        %v1825 = vshrl.u32 %v1824, 7
        %v1826 = vsub.s32 %v1823, %v1825
        %v1827 = vrot.slane %v1817, %v1826
        %v1829 = vunpack.c.l.s4 1966171168
        %v1830 = vunpack.c.0.s8 %v1829
        %v1831 = vlaneseq
        %v1832 = vshrl.u32 %v1831, 7
        %v1833 = vsub.s32 %v1830, %v1832
        %v1834 = vrot.slane %v1818, %v1833
        %v1836 = vunpack.c.l.s4 1966171168
        %v1837 = vunpack.c.0.s8 %v1836
        %v1838 = vlaneseq
        %v1839 = vshrl.u32 %v1838, 7
        %v1840 = vsub.s32 %v1837, %v1839
        %v1841 = vrot.slane %v1819, %v1840
        %v1843 = vunpack.c.l.s4 1966171168
        %v1844 = vunpack.c.0.s8 %v1843
        %v1845 = vlaneseq
        %v1846 = vshrl.u32 %v1845, 7
        %v1847 = vsub.s32 %v1844, %v1846
        %v1848 = vrot.slane %v1820, %v1847
        %v1849 = vcombine.low %v1827, %v1834
        %v1850 = vcombine.low %v1841, %v1848
        %v1852 = vunpack.c.l.s4 1966171168
        %v1853 = vunpack.c.0.s8 %v1852
        %v1854 = vlaneseq
        %v1855 = vshrl.u32 %v1854, 7
        %v1856 = vsub.s32 %v1853, %v1855
        %v1857 = vrot.slane %v1849, %v1856
        %v1859 = vunpack.c.l.s4 1966171168
        %v1860 = vunpack.c.0.s8 %v1859
        %v1861 = vlaneseq
        %v1862 = vshrl.u32 %v1861, 7
        %v1863 = vsub.s32 %v1860, %v1862
        %v1864 = vrot.slane %v1850, %v1863
        %v1865 = vcombine.low %v1857, %v1864
        %1867 = vmatprep.subr.mxu0 0.0
        %1868 = vmatpush1.msra.mxu0 %v1865
        %1869 = vmatprep.subr.mxu0 0.0
        %1870 = vmatpush1.msra.mxu0 0.0
        %1871 = vmatprep.subr.mxu0 0.0
        %1872 = vmatpush1.msra.mxu0 0.0
        %1873 = vmatprep.subr.mxu0 0.0
        %1874 = vmatpush1.msra.mxu0 0.0
        %1875 = vmatprep.subr.mxu0 0.0
        %1876 = vmatpush1.msra.mxu0 0.0
        %1877 = vmatprep.subr.mxu0 0.0
        %1878 = vmatpush1.msra.mxu0 0.0
        %1879 = vmatprep.subr.mxu0 0.0
        %1880 = vmatpush1.msra.mxu0 0.0
        %1881 = vmatprep.subr.mxu0 0.0
        %1882 = vmatpush1.msra.mxu0 0.0
        %1883 = vmatprep.subr.mxu0 0.0
        %1884 = vmatpush1.msra.mxu0 0.0
        %1885 = vmatprep.subr.mxu0 0.0
        %1886 = vmatpush1.msra.mxu0 0.0
        %1887 = vmatprep.subr.mxu0 0.0
        %1888 = vmatpush1.msra.mxu0 0.0
        %1889 = vmatprep.subr.mxu0 0.0
        %1890 = vmatpush1.msra.mxu0 0.0
        %1891 = vmatprep.subr.mxu0 0.0
        %1892 = vmatpush1.msra.mxu0 0.0
        %1893 = vmatprep.subr.mxu0 0.0
        %1894 = vmatpush1.msra.mxu0 0.0
        %1895 = vmatprep.subr.mxu0 0.0
        %1896 = vmatpush1.msra.mxu0 0.0
        %1897 = vmatprep.subr.mxu0 0.0
        %1898 = vmatpush1.msra.mxu0 0.0
        %1899 = vmatprep.subr.mxu0 0.0
        %1900 = vmatpush1.msra.mxu0 0.0
        %1901 = vmatprep.subr.mxu0 0.0
        %1902 = vmatpush1.msra.mxu0 0.0
        %1903 = vmatprep.subr.mxu0 0.0
        %1904 = vmatpush1.msra.mxu0 0.0
        %1905 = vmatprep.subr.mxu0 0.0
        %1906 = vmatpush1.msra.mxu0 0.0
        %1907 = vmatprep.subr.mxu0 0.0
        %1908 = vmatpush1.msra.mxu0 0.0
        %1909 = vmatprep.subr.mxu0 0.0
        %1910 = vmatpush1.msra.mxu0 0.0
        %1911 = vmatprep.subr.mxu0 0.0
        %1912 = vmatpush1.msra.mxu0 0.0
        %1913 = vmatprep.subr.mxu0 0.0
        %1914 = vmatpush1.msra.mxu0 0.0
        %1915 = vmatprep.subr.mxu0 0.0
        %1916 = vmatpush1.msra.mxu0 0.0
        %1917 = vmatprep.subr.mxu0 0.0
        %1918 = vmatpush1.msra.mxu0 0.0
        %1919 = vmatprep.subr.mxu0 0.0
        %1920 = vmatpush1.msra.mxu0 0.0
        %1921 = vmatprep.subr.mxu0 0.0
        %1922 = vmatpush1.msra.mxu0 0.0
        %1923 = vmatprep.subr.mxu0 0.0
        %1924 = vmatpush1.msra.mxu0 0.0
        %1925 = vmatprep.subr.mxu0 0.0
        %1926 = vmatpush1.msra.mxu0 0.0
        %1927 = vmatprep.subr.mxu0 0.0
        %1928 = vmatpush1.msra.mxu0 0.0
        %1929 = vmatprep.subr.mxu0 0.0
        %1930 = vmatpush1.msra.mxu0 0.0
        %1931 = vmatprep.mubr.f32.mxu0 0.0
        %1932 = vmatmul.mubr.f32.gmra.mrb[0].mxu0 %v764
        %v1933 = vpop.f32.mrb[0].mxu0
        %v1934 = vadd.f32 %v1807, %v1933
        %v1935 = vpop.f32.mrb[0].mxu0
        %1936 = vdwg.mxu0
        %v1937 = vadd.f32 %v1799, 1e-06
        %v1939 = vcombine.high %v1937, %v1937
        %v1941 = vunpack.c.l.s4 1966171168
        %v1942 = vunpack.c.0.s8 %v1941
        %v1943 = vlaneseq
        %v1944 = vshrl.u32 %v1943, 7
        %v1945 = vsub.s32 %v1942, %v1944
        %v1946 = vrot.slane %v1937, %v1945
        %v1948 = vunpack.c.l.s4 1966171168
        %v1949 = vunpack.c.0.s8 %v1948
        %v1950 = vlaneseq
        %v1951 = vshrl.u32 %v1950, 7
        %v1952 = vsub.s32 %v1949, %v1951
        %v1953 = vrot.slane %v1939, %v1952
        %v1954 = vcombine.high %v1946, %v1946
        %v1955 = vcombine.high %v1953, %v1953
        %v1957 = vunpack.c.l.s4 1966171168
        %v1958 = vunpack.c.0.s8 %v1957
        %v1959 = vlaneseq
        %v1960 = vshrl.u32 %v1959, 7
        %v1961 = vsub.s32 %v1958, %v1960
        %v1962 = vrot.slane %v1946, %v1961
        %v1964 = vunpack.c.l.s4 1966171168
        %v1965 = vunpack.c.0.s8 %v1964
        %v1966 = vlaneseq
        %v1967 = vshrl.u32 %v1966, 7
        %v1968 = vsub.s32 %v1965, %v1967
        %v1969 = vrot.slane %v1953, %v1968
        %v1971 = vunpack.c.l.s4 1966171168
        %v1972 = vunpack.c.0.s8 %v1971
        %v1973 = vlaneseq
        %v1974 = vshrl.u32 %v1973, 7
        %v1975 = vsub.s32 %v1972, %v1974
        %v1976 = vrot.slane %v1954, %v1975
        %v1978 = vunpack.c.l.s4 1966171168
        %v1979 = vunpack.c.0.s8 %v1978
        %v1980 = vlaneseq
        %v1981 = vshrl.u32 %v1980, 7
        %v1982 = vsub.s32 %v1979, %v1981
        %v1983 = vrot.slane %v1955, %v1982
        %v1984 = vcombine.high %v1962, %v1962
        %v1985 = vcombine.high %v1969, %v1969
        %v1986 = vcombine.high %v1976, %v1976
        %v1987 = vcombine.high %v1983, %v1983
        %v1996 = vmul.f32 %v971, %v1962
        %v1997 = vmul.f32 %v972, %v1976
        %v1998 = vmul.f32 %v973, %v1984
        %v1999 = vmul.f32 %v974, %v1986
        %v2000 = vmul.f32 %v975, %v1969
        %v2001 = vmul.f32 %v976, %v1983
        %v2002 = vmul.f32 %v977, %v1985
        %v2003 = vmul.f32 %v978, %v1987
        %v2012 = vcombine.low %v1996, %v1997
        %v2013 = vcombine.low %v1998, %v1999
        %v2014 = vcombine.low %v2000, %v2001
        %v2015 = vcombine.low %v2002, %v2003
        %v2017 = vunpack.c.l.s4 1966171168
        %v2018 = vunpack.c.0.s8 %v2017
        %v2019 = vlaneseq
        %v2020 = vshrl.u32 %v2019, 7
        %v2021 = vsub.s32 %v2018, %v2020
        %v2022 = vrot.slane %v2012, %v2021
        %v2024 = vunpack.c.l.s4 1966171168
        %v2025 = vunpack.c.0.s8 %v2024
        %v2026 = vlaneseq
        %v2027 = vshrl.u32 %v2026, 7
        %v2028 = vsub.s32 %v2025, %v2027
        %v2029 = vrot.slane %v2013, %v2028
        %v2031 = vunpack.c.l.s4 1966171168
        %v2032 = vunpack.c.0.s8 %v2031
        %v2033 = vlaneseq
        %v2034 = vshrl.u32 %v2033, 7
        %v2035 = vsub.s32 %v2032, %v2034
        %v2036 = vrot.slane %v2014, %v2035
        %v2038 = vunpack.c.l.s4 1966171168
        %v2039 = vunpack.c.0.s8 %v2038
        %v2040 = vlaneseq
        %v2041 = vshrl.u32 %v2040, 7
        %v2042 = vsub.s32 %v2039, %v2041
        %v2043 = vrot.slane %v2015, %v2042
        %v2044 = vcombine.low %v2022, %v2029
        %v2045 = vcombine.low %v2036, %v2043
        %v2047 = vunpack.c.l.s4 1966171168
        %v2048 = vunpack.c.0.s8 %v2047
        %v2049 = vlaneseq
        %v2050 = vshrl.u32 %v2049, 7
        %v2051 = vsub.s32 %v2048, %v2050
        %v2052 = vrot.slane %v2044, %v2051
        %v2054 = vunpack.c.l.s4 1966171168
        %v2055 = vunpack.c.0.s8 %v2054
        %v2056 = vlaneseq
        %v2057 = vshrl.u32 %v2056, 7
        %v2058 = vsub.s32 %v2055, %v2057
        %v2059 = vrot.slane %v2045, %v2058
        %v2060 = vcombine.low %v2052, %v2059
        %v2061 = vsel %vm1103, %v2060, 0
        %2063 = vmatprep.subr.mxu0 0.0
        %2064 = vmatpush1.msra.mxu0 %v563
        %2065 = vmatprep.subr.mxu0 0.0
        %2066 = vmatpush1.msra.mxu0 %v564
        %2067 = vmatprep.subr.mxu0 0.0
        %2068 = vmatpush1.msra.mxu0 %v565
        %2069 = vmatprep.subr.mxu0 0.0
        %2070 = vmatpush1.msra.mxu0 %v566
        %2071 = vmatprep.subr.mxu0 0.0
        %2072 = vmatpush1.msra.mxu0 0.0
        %2073 = vmatprep.subr.mxu0 0.0
        %2074 = vmatpush1.msra.mxu0 0.0
        %2075 = vmatprep.subr.mxu0 0.0
        %2076 = vmatpush1.msra.mxu0 0.0
        %2077 = vmatprep.subr.mxu0 0.0
        %2078 = vmatpush1.msra.mxu0 0.0
        %2079 = vmatprep.subr.mxu0 0.0
        %2080 = vmatpush1.msra.mxu0 0.0
        %2081 = vmatprep.subr.mxu0 0.0
        %2082 = vmatpush1.msra.mxu0 0.0
        %2083 = vmatprep.subr.mxu0 0.0
        %2084 = vmatpush1.msra.mxu0 0.0
        %2085 = vmatprep.subr.mxu0 0.0
        %2086 = vmatpush1.msra.mxu0 0.0
        %2087 = vmatprep.subr.mxu0 0.0
        %2088 = vmatpush1.msra.mxu0 0.0
        %2089 = vmatprep.subr.mxu0 0.0
        %2090 = vmatpush1.msra.mxu0 0.0
        %2091 = vmatprep.subr.mxu0 0.0
        %2092 = vmatpush1.msra.mxu0 0.0
        %2093 = vmatprep.subr.mxu0 0.0
        %2094 = vmatpush1.msra.mxu0 0.0
        %2095 = vmatprep.subr.mxu0 0.0
        %2096 = vmatpush1.msra.mxu0 0.0
        %2097 = vmatprep.subr.mxu0 0.0
        %2098 = vmatpush1.msra.mxu0 0.0
        %2099 = vmatprep.subr.mxu0 0.0
        %2100 = vmatpush1.msra.mxu0 0.0
        %2101 = vmatprep.subr.mxu0 0.0
        %2102 = vmatpush1.msra.mxu0 0.0
        %2103 = vmatprep.subr.mxu0 0.0
        %2104 = vmatpush1.msra.mxu0 0.0
        %2105 = vmatprep.subr.mxu0 0.0
        %2106 = vmatpush1.msra.mxu0 0.0
        %2107 = vmatprep.subr.mxu0 0.0
        %2108 = vmatpush1.msra.mxu0 0.0
        %2109 = vmatprep.subr.mxu0 0.0
        %2110 = vmatpush1.msra.mxu0 0.0
        %2111 = vmatprep.subr.mxu0 0.0
        %2112 = vmatpush1.msra.mxu0 0.0
        %2113 = vmatprep.subr.mxu0 0.0
        %2114 = vmatpush1.msra.mxu0 0.0
        %2115 = vmatprep.subr.mxu0 0.0
        %2116 = vmatpush1.msra.mxu0 0.0
        %2117 = vmatprep.subr.mxu0 0.0
        %2118 = vmatpush1.msra.mxu0 0.0
        %2119 = vmatprep.subr.mxu0 0.0
        %2120 = vmatpush1.msra.mxu0 0.0
        %2121 = vmatprep.subr.mxu0 0.0
        %2122 = vmatpush1.msra.mxu0 0.0
        %2123 = vmatprep.subr.mxu0 0.0
        %2124 = vmatpush1.msra.mxu0 0.0
        %2125 = vmatprep.subr.mxu0 0.0
        %2126 = vmatpush1.msra.mxu0 0.0
        %2127 = vmatprep.mubr.f32.mxu0 0.0
        %2128 = vmatmul.mubr.f32.gmra.mrb[0].mxu0 %v2061
        %v2129 = vpop.f32.mrb[0].mxu0
        %v2130 = vadd.f32 0.0, %v2129
        %v2131 = vpop.f32.mrb[0].mxu0
        %2132 = vdwg.mxu0
        %v2133 = vmul.f32 %v2130, %v696
        %v2134 = vadd.f32 %v1934, 1e-06
        %v2136 = vcombine.high %v2134, %v2134
        %v2138 = vunpack.c.l.s4 1966171168
        %v2139 = vunpack.c.0.s8 %v2138
        %v2140 = vlaneseq
        %v2141 = vshrl.u32 %v2140, 7
        %v2142 = vsub.s32 %v2139, %v2141
        %v2143 = vrot.slane %v2134, %v2142
        %v2145 = vunpack.c.l.s4 1966171168
        %v2146 = vunpack.c.0.s8 %v2145
        %v2147 = vlaneseq
        %v2148 = vshrl.u32 %v2147, 7
        %v2149 = vsub.s32 %v2146, %v2148
        %v2150 = vrot.slane %v2136, %v2149
        %v2151 = vcombine.high %v2143, %v2143
        %v2152 = vcombine.high %v2150, %v2150
        %v2154 = vunpack.c.l.s4 1966171168
        %v2155 = vunpack.c.0.s8 %v2154
        %v2156 = vlaneseq
        %v2157 = vshrl.u32 %v2156, 7
        %v2158 = vsub.s32 %v2155, %v2157
        %v2159 = vrot.slane %v2143, %v2158
        %v2161 = vunpack.c.l.s4 1966171168
        %v2162 = vunpack.c.0.s8 %v2161
        %v2163 = vlaneseq
        %v2164 = vshrl.u32 %v2163, 7
        %v2165 = vsub.s32 %v2162, %v2164
        %v2166 = vrot.slane %v2150, %v2165
        %v2168 = vunpack.c.l.s4 1966171168
        %v2169 = vunpack.c.0.s8 %v2168
        %v2170 = vlaneseq
        %v2171 = vshrl.u32 %v2170, 7
        %v2172 = vsub.s32 %v2169, %v2171
        %v2173 = vrot.slane %v2151, %v2172
        %v2175 = vunpack.c.l.s4 1966171168
        %v2176 = vunpack.c.0.s8 %v2175
        %v2177 = vlaneseq
        %v2178 = vshrl.u32 %v2177, 7
        %v2179 = vsub.s32 %v2176, %v2178
        %v2180 = vrot.slane %v2152, %v2179
        %v2181 = vcombine.high %v2159, %v2159
        %v2182 = vcombine.high %v2166, %v2166
        %v2183 = vcombine.high %v2173, %v2173
        %v2184 = vcombine.high %v2180, %v2180
        %v2193 = vmul.f32 %v1177, %v2159
        %v2194 = vmul.f32 %v1178, %v2173
        %v2195 = vmul.f32 %v1179, %v2181
        %v2196 = vmul.f32 %v1180, %v2183
        %v2197 = vmul.f32 %v1181, %v2166
        %v2198 = vmul.f32 %v1182, %v2180
        %v2199 = vmul.f32 %v1183, %v2182
        %v2200 = vmul.f32 %v1184, %v2184
        %v2209 = vcombine.low %v2193, %v2194
        %v2210 = vcombine.low %v2195, %v2196
        %v2211 = vcombine.low %v2197, %v2198
        %v2212 = vcombine.low %v2199, %v2200
        %v2214 = vunpack.c.l.s4 1966171168
        %v2215 = vunpack.c.0.s8 %v2214
        %v2216 = vlaneseq
        %v2217 = vshrl.u32 %v2216, 7
        %v2218 = vsub.s32 %v2215, %v2217
        %v2219 = vrot.slane %v2209, %v2218
        %v2221 = vunpack.c.l.s4 1966171168
        %v2222 = vunpack.c.0.s8 %v2221
        %v2223 = vlaneseq
        %v2224 = vshrl.u32 %v2223, 7
        %v2225 = vsub.s32 %v2222, %v2224
        %v2226 = vrot.slane %v2210, %v2225
        %v2228 = vunpack.c.l.s4 1966171168
        %v2229 = vunpack.c.0.s8 %v2228
        %v2230 = vlaneseq
        %v2231 = vshrl.u32 %v2230, 7
        %v2232 = vsub.s32 %v2229, %v2231
        %v2233 = vrot.slane %v2211, %v2232
        %v2235 = vunpack.c.l.s4 1966171168
        %v2236 = vunpack.c.0.s8 %v2235
        %v2237 = vlaneseq
        %v2238 = vshrl.u32 %v2237, 7
        %v2239 = vsub.s32 %v2236, %v2238
        %v2240 = vrot.slane %v2212, %v2239
        %v2241 = vcombine.low %v2219, %v2226
        %v2242 = vcombine.low %v2233, %v2240
        %v2244 = vunpack.c.l.s4 1966171168
        %v2245 = vunpack.c.0.s8 %v2244
        %v2246 = vlaneseq
        %v2247 = vshrl.u32 %v2246, 7
        %v2248 = vsub.s32 %v2245, %v2247
        %v2249 = vrot.slane %v2241, %v2248
        %v2251 = vunpack.c.l.s4 1966171168
        %v2252 = vunpack.c.0.s8 %v2251
        %v2253 = vlaneseq
        %v2254 = vshrl.u32 %v2253, 7
        %v2255 = vsub.s32 %v2252, %v2254
        %v2256 = vrot.slane %v2242, %v2255
        %v2257 = vcombine.low %v2249, %v2256
        %v2258 = vsel %vm1103, %v2257, 0
        %2260 = vmatprep.subr.mxu0 0.0
        %2261 = vmatpush1.msra.mxu0 %v563
        %2262 = vmatprep.subr.mxu0 0.0
        %2263 = vmatpush1.msra.mxu0 %v564
        %2264 = vmatprep.subr.mxu0 0.0
        %2265 = vmatpush1.msra.mxu0 %v565
        %2266 = vmatprep.subr.mxu0 0.0
        %2267 = vmatpush1.msra.mxu0 %v566
        %2268 = vmatprep.subr.mxu0 0.0
        %2269 = vmatpush1.msra.mxu0 0.0
        %2270 = vmatprep.subr.mxu0 0.0
        %2271 = vmatpush1.msra.mxu0 0.0
        %2272 = vmatprep.subr.mxu0 0.0
        %2273 = vmatpush1.msra.mxu0 0.0
        %2274 = vmatprep.subr.mxu0 0.0
        %2275 = vmatpush1.msra.mxu0 0.0
        %2276 = vmatprep.subr.mxu0 0.0
        %2277 = vmatpush1.msra.mxu0 0.0
        %2278 = vmatprep.subr.mxu0 0.0
        %2279 = vmatpush1.msra.mxu0 0.0
        %2280 = vmatprep.subr.mxu0 0.0
        %2281 = vmatpush1.msra.mxu0 0.0
        %2282 = vmatprep.subr.mxu0 0.0
        %2283 = vmatpush1.msra.mxu0 0.0
        %2284 = vmatprep.subr.mxu0 0.0
        %2285 = vmatpush1.msra.mxu0 0.0
        %2286 = vmatprep.subr.mxu0 0.0
        %2287 = vmatpush1.msra.mxu0 0.0
        %2288 = vmatprep.subr.mxu0 0.0
        %2289 = vmatpush1.msra.mxu0 0.0
        %2290 = vmatprep.subr.mxu0 0.0
        %2291 = vmatpush1.msra.mxu0 0.0
        %2292 = vmatprep.subr.mxu0 0.0
        %2293 = vmatpush1.msra.mxu0 0.0
        %2294 = vmatprep.subr.mxu0 0.0
        %2295 = vmatpush1.msra.mxu0 0.0
        %2296 = vmatprep.subr.mxu0 0.0
        %2297 = vmatpush1.msra.mxu0 0.0
        %2298 = vmatprep.subr.mxu0 0.0
        %2299 = vmatpush1.msra.mxu0 0.0
        %2300 = vmatprep.subr.mxu0 0.0
        %2301 = vmatpush1.msra.mxu0 0.0
        %2302 = vmatprep.subr.mxu0 0.0
        %2303 = vmatpush1.msra.mxu0 0.0
        %2304 = vmatprep.subr.mxu0 0.0
        %2305 = vmatpush1.msra.mxu0 0.0
        %2306 = vmatprep.subr.mxu0 0.0
        %2307 = vmatpush1.msra.mxu0 0.0
        %2308 = vmatprep.subr.mxu0 0.0
        %2309 = vmatpush1.msra.mxu0 0.0
        %2310 = vmatprep.subr.mxu0 0.0
        %2311 = vmatpush1.msra.mxu0 0.0
        %2312 = vmatprep.subr.mxu0 0.0
        %2313 = vmatpush1.msra.mxu0 0.0
        %2314 = vmatprep.subr.mxu0 0.0
        %2315 = vmatpush1.msra.mxu0 0.0
        %2316 = vmatprep.subr.mxu0 0.0
        %2317 = vmatpush1.msra.mxu0 0.0
        %2318 = vmatprep.subr.mxu0 0.0
        %2319 = vmatpush1.msra.mxu0 0.0
        %2320 = vmatprep.subr.mxu0 0.0
        %2321 = vmatpush1.msra.mxu0 0.0
        %2322 = vmatprep.subr.mxu0 0.0
        %2323 = vmatpush1.msra.mxu0 0.0
        %2324 = vmatprep.mubr.f32.mxu0 0.0
        %2325 = vmatmul.mubr.f32.gmra.mrb[0].mxu0 %v2258
        %v2326 = vpop.f32.mrb[0].mxu0
        %v2327 = vadd.f32 0.0, %v2326
        %v2328 = vpop.f32.mrb[0].mxu0
        %2329 = vdwg.mxu0
        %v2330 = vmul.f32 %v2327, %v696
        %v2331 = vmax.f32 %v2330, -5.0
        %v2332 = vmin.f32 %v2331, 5.0
        %v2333 = vxor.u32 %v2133, 2147483648
        %v2334 = vmul.f32 %v2333, 1.442695
        %v2335 = vpow.pop %v2334
        %v2336 = vadd.f32 %v2335, 1.0
        %v2337 = vrcp.pop %v2336
        %v2338 = vmul.f32 1.0, %v2337
        %v2339 = vmul.f32 %v2332, 1.442695
        %v2340 = vpow.pop %v2339
        %v2341 = vld [vmem:[#allocation6] sm:$0x1]
        %v2343 = vlaneseq
        %v2344 = vshrl.u32 %v2343, 7
        %v2345 = vsub.s32 0, %v2344
        %v2346 = vrot.slane %v2341, %v2345
        %2348 = vmatprep.subr.mxu0 0.0
        %2349 = vmatpush1.msra.mxu0 %v2340
        %2350 = vmatprep.subr.mxu0 0.0
        %2351 = vmatpush1.msra.mxu0 0.0
        %2352 = vmatprep.subr.mxu0 0.0
        %2353 = vmatpush1.msra.mxu0 0.0
        %2354 = vmatprep.subr.mxu0 0.0
        %2355 = vmatpush1.msra.mxu0 0.0
        %2356 = vmatprep.subr.mxu0 0.0
        %2357 = vmatpush1.msra.mxu0 0.0
        %2358 = vmatprep.subr.mxu0 0.0
        %2359 = vmatpush1.msra.mxu0 0.0
        %2360 = vmatprep.subr.mxu0 0.0
        %2361 = vmatpush1.msra.mxu0 0.0
        %2362 = vmatprep.subr.mxu0 0.0
        %2363 = vmatpush1.msra.mxu0 0.0
        %2364 = vmatprep.subr.mxu0 0.0
        %2365 = vmatpush1.msra.mxu0 0.0
        %2366 = vmatprep.subr.mxu0 0.0
        %2367 = vmatpush1.msra.mxu0 0.0
        %2368 = vmatprep.subr.mxu0 0.0
        %2369 = vmatpush1.msra.mxu0 0.0
        %2370 = vmatprep.subr.mxu0 0.0
        %2371 = vmatpush1.msra.mxu0 0.0
        %2372 = vmatprep.subr.mxu0 0.0
        %2373 = vmatpush1.msra.mxu0 0.0
        %2374 = vmatprep.subr.mxu0 0.0
        %2375 = vmatpush1.msra.mxu0 0.0
        %2376 = vmatprep.subr.mxu0 0.0
        %2377 = vmatpush1.msra.mxu0 0.0
        %2378 = vmatprep.subr.mxu0 0.0
        %2379 = vmatpush1.msra.mxu0 0.0
        %2380 = vmatprep.subr.mxu0 0.0
        %2381 = vmatpush1.msra.mxu0 0.0
        %2382 = vmatprep.subr.mxu0 0.0
        %2383 = vmatpush1.msra.mxu0 0.0
        %2384 = vmatprep.subr.mxu0 0.0
        %2385 = vmatpush1.msra.mxu0 0.0
        %2386 = vmatprep.subr.mxu0 0.0
        %2387 = vmatpush1.msra.mxu0 0.0
        %2388 = vmatprep.subr.mxu0 0.0
        %2389 = vmatpush1.msra.mxu0 0.0
        %2390 = vmatprep.subr.mxu0 0.0
        %2391 = vmatpush1.msra.mxu0 0.0
        %2392 = vmatprep.subr.mxu0 0.0
        %2393 = vmatpush1.msra.mxu0 0.0
        %2394 = vmatprep.subr.mxu0 0.0
        %2395 = vmatpush1.msra.mxu0 0.0
        %2396 = vmatprep.subr.mxu0 0.0
        %2397 = vmatpush1.msra.mxu0 0.0
        %2398 = vmatprep.subr.mxu0 0.0
        %2399 = vmatpush1.msra.mxu0 0.0
        %2400 = vmatprep.subr.mxu0 0.0
        %2401 = vmatpush1.msra.mxu0 0.0
        %2402 = vmatprep.subr.mxu0 0.0
        %2403 = vmatpush1.msra.mxu0 0.0
        %2404 = vmatprep.subr.mxu0 0.0
        %2405 = vmatpush1.msra.mxu0 0.0
        %2406 = vmatprep.subr.mxu0 0.0
        %2407 = vmatpush1.msra.mxu0 0.0
        %2408 = vmatprep.subr.mxu0 0.0
        %2409 = vmatpush1.msra.mxu0 0.0
        %2410 = vmatprep.subr.mxu0 0.0
        %2411 = vmatpush1.msra.mxu0 0.0
        %2412 = vmatprep.mubr.f32.mxu0 0.0
        %2413 = vmatmul.mubr.f32.gmra.mrb[0].mxu0 %v764
        %v2414 = vpop.f32.mrb[0].mxu0
        %v2415 = vadd.f32 %v2346, %v2414
        %v2416 = vpop.f32.mrb[0].mxu0
        %2417 = vdwg.mxu0
        %v2418 = vrcp.pop %v2415
        %v2419 = vmul.f32 %v2340, %v2418
        %v2420 = vmul.f32 %v2419, %v695
        %v2422 = vsel %vm1384, %v1176, 0
        %2424 = vmatprep.subr.mxu0 0.0
        %2425 = vmatpush1.msra.mxu0 %v1390
        %2426 = vmatprep.subr.mxu0 0.0
        %2427 = vmatpush1.msra.mxu0 0.0
        %2428 = vmatprep.subr.mxu0 0.0
        %2429 = vmatpush1.msra.mxu0 0.0
        %2430 = vmatprep.subr.mxu0 0.0
        %2431 = vmatpush1.msra.mxu0 0.0
        %2432 = vmatprep.subr.mxu0 0.0
        %2433 = vmatpush1.msra.mxu0 0.0
        %2434 = vmatprep.subr.mxu0 0.0
        %2435 = vmatpush1.msra.mxu0 0.0
        %2436 = vmatprep.subr.mxu0 0.0
        %2437 = vmatpush1.msra.mxu0 0.0
        %2438 = vmatprep.subr.mxu0 0.0
        %2439 = vmatpush1.msra.mxu0 0.0
        %2440 = vmatprep.subr.mxu0 0.0
        %2441 = vmatpush1.msra.mxu0 0.0
        %2442 = vmatprep.subr.mxu0 0.0
        %2443 = vmatpush1.msra.mxu0 0.0
        %2444 = vmatprep.subr.mxu0 0.0
        %2445 = vmatpush1.msra.mxu0 0.0
        %2446 = vmatprep.subr.mxu0 0.0
        %2447 = vmatpush1.msra.mxu0 0.0
        %2448 = vmatprep.subr.mxu0 0.0
        %2449 = vmatpush1.msra.mxu0 0.0
        %2450 = vmatprep.subr.mxu0 0.0
        %2451 = vmatpush1.msra.mxu0 0.0
        %2452 = vmatprep.subr.mxu0 0.0
        %2453 = vmatpush1.msra.mxu0 0.0
        %2454 = vmatprep.subr.mxu0 0.0
        %2455 = vmatpush1.msra.mxu0 0.0
        %2456 = vmatprep.subr.mxu0 0.0
        %2457 = vmatpush1.msra.mxu0 0.0
        %2458 = vmatprep.subr.mxu0 0.0
        %2459 = vmatpush1.msra.mxu0 0.0
        %2460 = vmatprep.subr.mxu0 0.0
        %2461 = vmatpush1.msra.mxu0 0.0
        %2462 = vmatprep.subr.mxu0 0.0
        %2463 = vmatpush1.msra.mxu0 0.0
        %2464 = vmatprep.subr.mxu0 0.0
        %2465 = vmatpush1.msra.mxu0 0.0
        %2466 = vmatprep.subr.mxu0 0.0
        %2467 = vmatpush1.msra.mxu0 0.0
        %2468 = vmatprep.subr.mxu0 0.0
        %2469 = vmatpush1.msra.mxu0 0.0
        %2470 = vmatprep.subr.mxu0 0.0
        %2471 = vmatpush1.msra.mxu0 0.0
        %2472 = vmatprep.subr.mxu0 0.0
        %2473 = vmatpush1.msra.mxu0 0.0
        %2474 = vmatprep.subr.mxu0 0.0
        %2475 = vmatpush1.msra.mxu0 0.0
        %2476 = vmatprep.subr.mxu0 0.0
        %2477 = vmatpush1.msra.mxu0 0.0
        %2478 = vmatprep.subr.mxu0 0.0
        %2479 = vmatpush1.msra.mxu0 0.0
        %2480 = vmatprep.subr.mxu0 0.0
        %2481 = vmatpush1.msra.mxu0 0.0
        %2482 = vmatprep.subr.mxu0 0.0
        %2483 = vmatpush1.msra.mxu0 0.0
        %2484 = vmatprep.subr.mxu0 0.0
        %2485 = vmatpush1.msra.mxu0 0.0
        %2486 = vmatprep.subr.mxu0 0.0
        %2487 = vmatpush1.msra.mxu0 0.0
        %2488 = vmatprep.mubr.f32.mxu0 0.0
        %2489 = vmatmul.mubr.f32.gmra.mrb[0].mxu0 %v2422
        %v2490 = vpop.f32.mrb[0].mxu0
        %v2491 = vadd.f32 0.0, %v2490
        %v2492 = vpop.f32.mrb[0].mxu0
        %2493 = vdwg.mxu0
        %v2495 = vcombine.high %v2491, %v2491
        %v2497 = vunpack.c.l.s4 1966171168
        %v2498 = vunpack.c.0.s8 %v2497
        %v2499 = vlaneseq
        %v2500 = vshrl.u32 %v2499, 7
        %v2501 = vsub.s32 %v2498, %v2500
        %v2502 = vrot.slane %v2491, %v2501
        %v2504 = vunpack.c.l.s4 1966171168
        %v2505 = vunpack.c.0.s8 %v2504
        %v2506 = vlaneseq
        %v2507 = vshrl.u32 %v2506, 7
        %v2508 = vsub.s32 %v2505, %v2507
        %v2509 = vrot.slane %v2495, %v2508
        %v2510 = vcombine.high %v2502, %v2502
        %v2511 = vcombine.high %v2509, %v2509
        %v2513 = vunpack.c.l.s4 1966171168
        %v2514 = vunpack.c.0.s8 %v2513
        %v2515 = vlaneseq
        %v2516 = vshrl.u32 %v2515, 7
        %v2517 = vsub.s32 %v2514, %v2516
        %v2518 = vrot.slane %v2502, %v2517
        %v2520 = vunpack.c.l.s4 1966171168
        %v2521 = vunpack.c.0.s8 %v2520
        %v2522 = vlaneseq
        %v2523 = vshrl.u32 %v2522, 7
        %v2524 = vsub.s32 %v2521, %v2523
        %v2525 = vrot.slane %v2509, %v2524
        %v2527 = vunpack.c.l.s4 1966171168
        %v2528 = vunpack.c.0.s8 %v2527
        %v2529 = vlaneseq
        %v2530 = vshrl.u32 %v2529, 7
        %v2531 = vsub.s32 %v2528, %v2530
        %v2532 = vrot.slane %v2510, %v2531
        %v2534 = vunpack.c.l.s4 1966171168
        %v2535 = vunpack.c.0.s8 %v2534
        %v2536 = vlaneseq
        %v2537 = vshrl.u32 %v2536, 7
        %v2538 = vsub.s32 %v2535, %v2537
        %v2539 = vrot.slane %v2511, %v2538
        %v2540 = vcombine.high %v2518, %v2518
        %v2541 = vcombine.high %v2525, %v2525
        %v2542 = vcombine.high %v2532, %v2532
        %v2543 = vcombine.high %v2539, %v2539
        %v2552 = vmul.f32 %v609, %v2518
        %v2553 = vmul.f32 %v611, %v2532
        %v2554 = vmul.f32 %v613, %v2540
        %v2555 = vmul.f32 %v615, %v2542
        %v2556 = vmul.f32 %v617, %v2525
        %v2557 = vmul.f32 %v619, %v2539
        %v2558 = vmul.f32 %v621, %v2541
        %v2559 = vmul.f32 %v623, %v2543
        %v2561 = vsel %vm1384, %v2420, 0
        %2563 = vmatprep.subr.mxu0 0.0
        %2564 = vmatpush1.msra.mxu0 %v1390
        %2565 = vmatprep.subr.mxu0 0.0
        %2566 = vmatpush1.msra.mxu0 0.0
        %2567 = vmatprep.subr.mxu0 0.0
        %2568 = vmatpush1.msra.mxu0 0.0
        %2569 = vmatprep.subr.mxu0 0.0
        %2570 = vmatpush1.msra.mxu0 0.0
        %2571 = vmatprep.subr.mxu0 0.0
        %2572 = vmatpush1.msra.mxu0 0.0
        %2573 = vmatprep.subr.mxu0 0.0
        %2574 = vmatpush1.msra.mxu0 0.0
        %2575 = vmatprep.subr.mxu0 0.0
        %2576 = vmatpush1.msra.mxu0 0.0
        %2577 = vmatprep.subr.mxu0 0.0
        %2578 = vmatpush1.msra.mxu0 0.0
        %2579 = vmatprep.subr.mxu0 0.0
        %2580 = vmatpush1.msra.mxu0 0.0
        %2581 = vmatprep.subr.mxu0 0.0
        %2582 = vmatpush1.msra.mxu0 0.0
        %2583 = vmatprep.subr.mxu0 0.0
        %2584 = vmatpush1.msra.mxu0 0.0
        %2585 = vmatprep.subr.mxu0 0.0
        %2586 = vmatpush1.msra.mxu0 0.0
        %2587 = vmatprep.subr.mxu0 0.0
        %2588 = vmatpush1.msra.mxu0 0.0
        %2589 = vmatprep.subr.mxu0 0.0
        %2590 = vmatpush1.msra.mxu0 0.0
        %2591 = vmatprep.subr.mxu0 0.0
        %2592 = vmatpush1.msra.mxu0 0.0
        %2593 = vmatprep.subr.mxu0 0.0
        %2594 = vmatpush1.msra.mxu0 0.0
        %2595 = vmatprep.subr.mxu0 0.0
        %2596 = vmatpush1.msra.mxu0 0.0
        %2597 = vmatprep.subr.mxu0 0.0
        %2598 = vmatpush1.msra.mxu0 0.0
        %2599 = vmatprep.subr.mxu0 0.0
        %2600 = vmatpush1.msra.mxu0 0.0
        %2601 = vmatprep.subr.mxu0 0.0
        %2602 = vmatpush1.msra.mxu0 0.0
        %2603 = vmatprep.subr.mxu0 0.0
        %2604 = vmatpush1.msra.mxu0 0.0
        %2605 = vmatprep.subr.mxu0 0.0
        %2606 = vmatpush1.msra.mxu0 0.0
        %2607 = vmatprep.subr.mxu0 0.0
        %2608 = vmatpush1.msra.mxu0 0.0
        %2609 = vmatprep.subr.mxu0 0.0
        %2610 = vmatpush1.msra.mxu0 0.0
        %2611 = vmatprep.subr.mxu0 0.0
        %2612 = vmatpush1.msra.mxu0 0.0
        %2613 = vmatprep.subr.mxu0 0.0
        %2614 = vmatpush1.msra.mxu0 0.0
        %2615 = vmatprep.subr.mxu0 0.0
        %2616 = vmatpush1.msra.mxu0 0.0
        %2617 = vmatprep.subr.mxu0 0.0
        %2618 = vmatpush1.msra.mxu0 0.0
        %2619 = vmatprep.subr.mxu0 0.0
        %2620 = vmatpush1.msra.mxu0 0.0
        %2621 = vmatprep.subr.mxu0 0.0
        %2622 = vmatpush1.msra.mxu0 0.0
        %2623 = vmatprep.subr.mxu0 0.0
        %2624 = vmatpush1.msra.mxu0 0.0
        %2625 = vmatprep.subr.mxu0 0.0
        %2626 = vmatpush1.msra.mxu0 0.0
        %2627 = vmatprep.mubr.f32.mxu0 0.0
        %2628 = vmatmul.mubr.f32.gmra.mrb[0].mxu0 %v2561
        %v2629 = vpop.f32.mrb[0].mxu0
        %v2630 = vadd.f32 0.0, %v2629
        %v2631 = vpop.f32.mrb[0].mxu0
        %2632 = vdwg.mxu0
        %v2634 = vcombine.high %v2630, %v2630
        %v2636 = vunpack.c.l.s4 1966171168
        %v2637 = vunpack.c.0.s8 %v2636
        %v2638 = vlaneseq
        %v2639 = vshrl.u32 %v2638, 7
        %v2640 = vsub.s32 %v2637, %v2639
        %v2641 = vrot.slane %v2630, %v2640
        %v2643 = vunpack.c.l.s4 1966171168
        %v2644 = vunpack.c.0.s8 %v2643
        %v2645 = vlaneseq
        %v2646 = vshrl.u32 %v2645, 7
        %v2647 = vsub.s32 %v2644, %v2646
        %v2648 = vrot.slane %v2634, %v2647
        %v2649 = vcombine.high %v2641, %v2641
        %v2650 = vcombine.high %v2648, %v2648
        %v2652 = vunpack.c.l.s4 1966171168
        %v2653 = vunpack.c.0.s8 %v2652
        %v2654 = vlaneseq
        %v2655 = vshrl.u32 %v2654, 7
        %v2656 = vsub.s32 %v2653, %v2655
        %v2657 = vrot.slane %v2641, %v2656
        %v2659 = vunpack.c.l.s4 1966171168
        %v2660 = vunpack.c.0.s8 %v2659
        %v2661 = vlaneseq
        %v2662 = vshrl.u32 %v2661, 7
        %v2663 = vsub.s32 %v2660, %v2662
        %v2664 = vrot.slane %v2648, %v2663
        %v2666 = vunpack.c.l.s4 1966171168
        %v2667 = vunpack.c.0.s8 %v2666
        %v2668 = vlaneseq
        %v2669 = vshrl.u32 %v2668, 7
        %v2670 = vsub.s32 %v2667, %v2669
        %v2671 = vrot.slane %v2649, %v2670
        %v2673 = vunpack.c.l.s4 1966171168
        %v2674 = vunpack.c.0.s8 %v2673
        %v2675 = vlaneseq
        %v2676 = vshrl.u32 %v2675, 7
        %v2677 = vsub.s32 %v2674, %v2676
        %v2678 = vrot.slane %v2650, %v2677
        %v2679 = vcombine.high %v2657, %v2657
        %v2680 = vcombine.high %v2664, %v2664
        %v2681 = vcombine.high %v2671, %v2671
        %v2682 = vcombine.high %v2678, %v2678
        %v2691 = vmul.f32 %v680, %v2657
        %v2692 = vmul.f32 %v681, %v2671
        %v2693 = vmul.f32 %v682, %v2679
        %v2694 = vmul.f32 %v683, %v2681
        %v2695 = vmul.f32 %v684, %v2664
        %v2696 = vmul.f32 %v685, %v2678
        %v2697 = vmul.f32 %v686, %v2680
        %v2698 = vmul.f32 %v687, %v2682
        %vm2699 = vcmask 261127
        %2700 = vst.msk [vmem:[#allocation2 - $0x7] sm:$0x80] %vm2699, %v833
        %2701 = vst.msk [vmem:[#allocation3 - $0x7] sm:$0x80] %vm2699, %v968
        %2702 = vst.msk [vmem:[#allocation4 - $0x7] sm:$0x80] %vm2699, %v1799
        %2703 = vst.msk [vmem:[#allocation5 - $0x7] sm:$0x80] %vm2699, %v1934
        %vm2704 = vcmask 31751
        %2705 = vst.msk [vmem:[#allocation6 - $0x7] sm:$0x80] %vm2704, %v2415
        %v2706 = vld [vmem:[#allocation7] sm:$0xff]
        %v2715 = vcombine.low %v2552, %v2553
        %v2716 = vcombine.low %v2554, %v2555
        %v2717 = vcombine.low %v2556, %v2557
        %v2718 = vcombine.low %v2558, %v2559
        %v2720 = vunpack.c.l.s4 1966171168
        %v2721 = vunpack.c.0.s8 %v2720
        %v2722 = vlaneseq
        %v2723 = vshrl.u32 %v2722, 7
        %v2724 = vsub.s32 %v2721, %v2723
        %v2725 = vrot.slane %v2715, %v2724
        %v2727 = vunpack.c.l.s4 1966171168
        %v2728 = vunpack.c.0.s8 %v2727
        %v2729 = vlaneseq
        %v2730 = vshrl.u32 %v2729, 7
        %v2731 = vsub.s32 %v2728, %v2730
        %v2732 = vrot.slane %v2716, %v2731
        %v2734 = vunpack.c.l.s4 1966171168
        %v2735 = vunpack.c.0.s8 %v2734
        %v2736 = vlaneseq
        %v2737 = vshrl.u32 %v2736, 7
        %v2738 = vsub.s32 %v2735, %v2737
        %v2739 = vrot.slane %v2717, %v2738
        %v2741 = vunpack.c.l.s4 1966171168
        %v2742 = vunpack.c.0.s8 %v2741
        %v2743 = vlaneseq
        %v2744 = vshrl.u32 %v2743, 7
        %v2745 = vsub.s32 %v2742, %v2744
        %v2746 = vrot.slane %v2718, %v2745
        %v2747 = vcombine.low %v2725, %v2732
        %v2748 = vcombine.low %v2739, %v2746
        %v2750 = vunpack.c.l.s4 1966171168
        %v2751 = vunpack.c.0.s8 %v2750
        %v2752 = vlaneseq
        %v2753 = vshrl.u32 %v2752, 7
        %v2754 = vsub.s32 %v2751, %v2753
        %v2755 = vrot.slane %v2747, %v2754
        %v2757 = vunpack.c.l.s4 1966171168
        %v2758 = vunpack.c.0.s8 %v2757
        %v2759 = vlaneseq
        %v2760 = vshrl.u32 %v2759, 7
        %v2761 = vsub.s32 %v2758, %v2760
        %v2762 = vrot.slane %v2748, %v2761
        %v2763 = vcombine.low %v2755, %v2762
        %v2764 = vsel %vm762, %v2763, 0
        %v2766 = vsel %vm762, %v760, 0
        %2768 = vmatprep.subr.mxu0 0.0
        %2769 = vmatpush1.xpose.msra.mxu0 %v2766
        %2770 = vmatprep.subr.mxu0 0.0
        %2771 = vmatpush1.xpose.msra.mxu0 0.0
        %2772 = vmatprep.subr.mxu0 0.0
        %2773 = vmatpush1.xpose.msra.mxu0 0.0
        %2774 = vmatprep.subr.mxu0 0.0
        %2775 = vmatpush1.xpose.msra.mxu0 0.0
        %2776 = vmatprep.subr.mxu0 0.0
        %2777 = vmatpush1.xpose.msra.mxu0 0.0
        %2778 = vmatprep.subr.mxu0 0.0
        %2779 = vmatpush1.xpose.msra.mxu0 0.0
        %2780 = vmatprep.subr.mxu0 0.0
        %2781 = vmatpush1.xpose.msra.mxu0 0.0
        %2782 = vmatprep.subr.mxu0 0.0
        %2783 = vmatpush1.xpose.msra.mxu0 0.0
        %2784 = vmatprep.subr.mxu0 0.0
        %2785 = vmatpush1.xpose.msra.mxu0 0.0
        %2786 = vmatprep.subr.mxu0 0.0
        %2787 = vmatpush1.xpose.msra.mxu0 0.0
        %2788 = vmatprep.subr.mxu0 0.0
        %2789 = vmatpush1.xpose.msra.mxu0 0.0
        %2790 = vmatprep.subr.mxu0 0.0
        %2791 = vmatpush1.xpose.msra.mxu0 0.0
        %2792 = vmatprep.subr.mxu0 0.0
        %2793 = vmatpush1.xpose.msra.mxu0 0.0
        %2794 = vmatprep.subr.mxu0 0.0
        %2795 = vmatpush1.xpose.msra.mxu0 0.0
        %2796 = vmatprep.subr.mxu0 0.0
        %2797 = vmatpush1.xpose.msra.mxu0 0.0
        %2798 = vmatprep.subr.mxu0 0.0
        %2799 = vmatpush1.xpose.msra.mxu0 0.0
        %2800 = vmatprep.subr.mxu0 0.0
        %2801 = vmatpush1.xpose.msra.mxu0 0.0
        %2802 = vmatprep.subr.mxu0 0.0
        %2803 = vmatpush1.xpose.msra.mxu0 0.0
        %2804 = vmatprep.subr.mxu0 0.0
        %2805 = vmatpush1.xpose.msra.mxu0 0.0
        %2806 = vmatprep.subr.mxu0 0.0
        %2807 = vmatpush1.xpose.msra.mxu0 0.0
        %2808 = vmatprep.subr.mxu0 0.0
        %2809 = vmatpush1.xpose.msra.mxu0 0.0
        %2810 = vmatprep.subr.mxu0 0.0
        %2811 = vmatpush1.xpose.msra.mxu0 0.0
        %2812 = vmatprep.subr.mxu0 0.0
        %2813 = vmatpush1.xpose.msra.mxu0 0.0
        %2814 = vmatprep.subr.mxu0 0.0
        %2815 = vmatpush1.xpose.msra.mxu0 0.0
        %2816 = vmatprep.subr.mxu0 0.0
        %2817 = vmatpush1.xpose.msra.mxu0 0.0
        %2818 = vmatprep.subr.mxu0 0.0
        %2819 = vmatpush1.xpose.msra.mxu0 0.0
        %2820 = vmatprep.subr.mxu0 0.0
        %2821 = vmatpush1.xpose.msra.mxu0 0.0
        %2822 = vmatprep.subr.mxu0 0.0
        %2823 = vmatpush1.xpose.msra.mxu0 0.0
        %2824 = vmatprep.subr.mxu0 0.0
        %2825 = vmatpush1.xpose.msra.mxu0 0.0
        %2826 = vmatprep.subr.mxu0 0.0
        %2827 = vmatpush1.xpose.msra.mxu0 0.0
        %2828 = vmatprep.subr.mxu0 0.0
        %2829 = vmatpush1.xpose.msra.mxu0 0.0
        %2830 = vmatprep.subr.mxu0 0.0
        %2831 = vmatpush1.xpose.msra.mxu0 0.0
        %2832 = vmatprep.mubr.f32.mxu0 0.0
        %2833 = vmatmul.mubr.f32.gmra.mrb[0].mxu0 %v2764
        %v2834 = vpop.f32.mrb[0].mxu0
        %v2835 = vadd.f32 0.0, %v2834
        %v2836 = vpop.f32.mrb[0].mxu0
        %2837 = vdwg.mxu0
        %v2838 = vmul.f32 %v2835, %v562
        %2839 = vmatprep.subr.mxu0 0.0
        %2840 = vmatpush1.msra.mxu0 %v2706
        %2841 = vmatprep.subr.mxu0 0.0
        %2842 = vmatpush1.msra.mxu0 0.0
        %2843 = vmatprep.subr.mxu0 0.0
        %2844 = vmatpush1.msra.mxu0 0.0
        %2845 = vmatprep.subr.mxu0 0.0
        %2846 = vmatpush1.msra.mxu0 0.0
        %2847 = vmatprep.subr.mxu0 0.0
        %2848 = vmatpush1.msra.mxu0 0.0
        %2849 = vmatprep.subr.mxu0 0.0
        %2850 = vmatpush1.msra.mxu0 0.0
        %2851 = vmatprep.subr.mxu0 0.0
        %2852 = vmatpush1.msra.mxu0 0.0
        %2853 = vmatprep.subr.mxu0 0.0
        %2854 = vmatpush1.msra.mxu0 0.0
        %2855 = vmatprep.subr.mxu0 0.0
        %2856 = vmatpush1.msra.mxu0 0.0
        %2857 = vmatprep.subr.mxu0 0.0
        %2858 = vmatpush1.msra.mxu0 0.0
        %2859 = vmatprep.subr.mxu0 0.0
        %2860 = vmatpush1.msra.mxu0 0.0
        %2861 = vmatprep.subr.mxu0 0.0
        %2862 = vmatpush1.msra.mxu0 0.0
        %2863 = vmatprep.subr.mxu0 0.0
        %2864 = vmatpush1.msra.mxu0 0.0
        %2865 = vmatprep.subr.mxu0 0.0
        %2866 = vmatpush1.msra.mxu0 0.0
        %2867 = vmatprep.subr.mxu0 0.0
        %2868 = vmatpush1.msra.mxu0 0.0
        %2869 = vmatprep.subr.mxu0 0.0
        %2870 = vmatpush1.msra.mxu0 0.0
        %2871 = vmatprep.subr.mxu0 0.0
        %2872 = vmatpush1.msra.mxu0 0.0
        %2873 = vmatprep.subr.mxu0 0.0
        %2874 = vmatpush1.msra.mxu0 0.0
        %2875 = vmatprep.subr.mxu0 0.0
        %2876 = vmatpush1.msra.mxu0 0.0
        %2877 = vmatprep.subr.mxu0 0.0
        %2878 = vmatpush1.msra.mxu0 0.0
        %2879 = vmatprep.subr.mxu0 0.0
        %2880 = vmatpush1.msra.mxu0 0.0
        %2881 = vmatprep.subr.mxu0 0.0
        %2882 = vmatpush1.msra.mxu0 0.0
        %2883 = vmatprep.subr.mxu0 0.0
        %2884 = vmatpush1.msra.mxu0 0.0
        %2885 = vmatprep.subr.mxu0 0.0
        %2886 = vmatpush1.msra.mxu0 0.0
        %2887 = vmatprep.subr.mxu0 0.0
        %2888 = vmatpush1.msra.mxu0 0.0
        %2889 = vmatprep.subr.mxu0 0.0
        %2890 = vmatpush1.msra.mxu0 0.0
        %2891 = vmatprep.subr.mxu0 0.0
        %2892 = vmatpush1.msra.mxu0 0.0
        %2893 = vmatprep.subr.mxu0 0.0
        %2894 = vmatpush1.msra.mxu0 0.0
        %2895 = vmatprep.subr.mxu0 0.0
        %2896 = vmatpush1.msra.mxu0 0.0
        %2897 = vmatprep.subr.mxu0 0.0
        %2898 = vmatpush1.msra.mxu0 0.0
        %2899 = vmatprep.subr.mxu0 0.0
        %2900 = vmatpush1.msra.mxu0 0.0
        %2901 = vmatprep.subr.mxu0 0.0
        %2902 = vmatpush1.msra.mxu0 0.0
        %2903 = vmatprep.mubr.f32.mxu0 0.0
        %2904 = vmatmul.mubr.f32.gmra.mrb[0].mxu0 %v2764
        %v2905 = vpop.f32.mrb[0].mxu0
        %v2906 = vadd.f32 0.0, %v2905
        %v2907 = vpop.f32.mrb[0].mxu0
        %2908 = vdwg.mxu0
        %v2917 = vcombine.low %v2691, %v2692
        %v2918 = vcombine.low %v2693, %v2694
        %v2919 = vcombine.low %v2695, %v2696
        %v2920 = vcombine.low %v2697, %v2698
        %v2922 = vunpack.c.l.s4 1966171168
        %v2923 = vunpack.c.0.s8 %v2922
        %v2924 = vlaneseq
        %v2925 = vshrl.u32 %v2924, 7
        %v2926 = vsub.s32 %v2923, %v2925
        %v2927 = vrot.slane %v2917, %v2926
        %v2929 = vunpack.c.l.s4 1966171168
        %v2930 = vunpack.c.0.s8 %v2929
        %v2931 = vlaneseq
        %v2932 = vshrl.u32 %v2931, 7
        %v2933 = vsub.s32 %v2930, %v2932
        %v2934 = vrot.slane %v2918, %v2933
        %v2936 = vunpack.c.l.s4 1966171168
        %v2937 = vunpack.c.0.s8 %v2936
        %v2938 = vlaneseq
        %v2939 = vshrl.u32 %v2938, 7
        %v2940 = vsub.s32 %v2937, %v2939
        %v2941 = vrot.slane %v2919, %v2940
        %v2943 = vunpack.c.l.s4 1966171168
        %v2944 = vunpack.c.0.s8 %v2943
        %v2945 = vlaneseq
        %v2946 = vshrl.u32 %v2945, 7
        %v2947 = vsub.s32 %v2944, %v2946
        %v2948 = vrot.slane %v2920, %v2947
        %v2949 = vcombine.low %v2927, %v2934
        %v2950 = vcombine.low %v2941, %v2948
        %v2952 = vunpack.c.l.s4 1966171168
        %v2953 = vunpack.c.0.s8 %v2952
        %v2954 = vlaneseq
        %v2955 = vshrl.u32 %v2954, 7
        %v2956 = vsub.s32 %v2953, %v2955
        %v2957 = vrot.slane %v2949, %v2956
        %v2959 = vunpack.c.l.s4 1966171168
        %v2960 = vunpack.c.0.s8 %v2959
        %v2961 = vlaneseq
        %v2962 = vshrl.u32 %v2961, 7
        %v2963 = vsub.s32 %v2960, %v2962
        %v2964 = vrot.slane %v2950, %v2963
        %v2965 = vcombine.low %v2957, %v2964
        %v2968 = vsel %vm762, %v2838, 0
        %2970 = vmatprep.subr.mxu0 0.0
        %2971 = vmatpush1.msra.mxu0 %v2965
        %2972 = vmatprep.subr.mxu0 0.0
        %2973 = vmatpush1.msra.mxu0 0.0
        %2974 = vmatprep.subr.mxu0 0.0
        %2975 = vmatpush1.msra.mxu0 0.0
        %2976 = vmatprep.subr.mxu0 0.0
        %2977 = vmatpush1.msra.mxu0 0.0
        %2978 = vmatprep.subr.mxu0 0.0
        %2979 = vmatpush1.msra.mxu0 0.0
        %2980 = vmatprep.subr.mxu0 0.0
        %2981 = vmatpush1.msra.mxu0 0.0
        %2982 = vmatprep.subr.mxu0 0.0
        %2983 = vmatpush1.msra.mxu0 0.0
        %2984 = vmatprep.subr.mxu0 0.0
        %2985 = vmatpush1.msra.mxu0 0.0
        %2986 = vmatprep.subr.mxu0 0.0
        %2987 = vmatpush1.msra.mxu0 0.0
        %2988 = vmatprep.subr.mxu0 0.0
        %2989 = vmatpush1.msra.mxu0 0.0
        %2990 = vmatprep.subr.mxu0 0.0
        %2991 = vmatpush1.msra.mxu0 0.0
        %2992 = vmatprep.subr.mxu0 0.0
        %2993 = vmatpush1.msra.mxu0 0.0
        %2994 = vmatprep.subr.mxu0 0.0
        %2995 = vmatpush1.msra.mxu0 0.0
        %2996 = vmatprep.subr.mxu0 0.0
        %2997 = vmatpush1.msra.mxu0 0.0
        %2998 = vmatprep.subr.mxu0 0.0
        %2999 = vmatpush1.msra.mxu0 0.0
        %3000 = vmatprep.subr.mxu0 0.0
        %3001 = vmatpush1.msra.mxu0 0.0
        %3002 = vmatprep.subr.mxu0 0.0
        %3003 = vmatpush1.msra.mxu0 0.0
        %3004 = vmatprep.subr.mxu0 0.0
        %3005 = vmatpush1.msra.mxu0 0.0
        %3006 = vmatprep.subr.mxu0 0.0
        %3007 = vmatpush1.msra.mxu0 0.0
        %3008 = vmatprep.subr.mxu0 0.0
        %3009 = vmatpush1.msra.mxu0 0.0
        %3010 = vmatprep.subr.mxu0 0.0
        %3011 = vmatpush1.msra.mxu0 0.0
        %3012 = vmatprep.subr.mxu0 0.0
        %3013 = vmatpush1.msra.mxu0 0.0
        %3014 = vmatprep.subr.mxu0 0.0
        %3015 = vmatpush1.msra.mxu0 0.0
        %3016 = vmatprep.subr.mxu0 0.0
        %3017 = vmatpush1.msra.mxu0 0.0
        %3018 = vmatprep.subr.mxu0 0.0
        %3019 = vmatpush1.msra.mxu0 0.0
        %3020 = vmatprep.subr.mxu0 0.0
        %3021 = vmatpush1.msra.mxu0 0.0
        %3022 = vmatprep.subr.mxu0 0.0
        %3023 = vmatpush1.msra.mxu0 0.0
        %3024 = vmatprep.subr.mxu0 0.0
        %3025 = vmatpush1.msra.mxu0 0.0
        %3026 = vmatprep.subr.mxu0 0.0
        %3027 = vmatpush1.msra.mxu0 0.0
        %3028 = vmatprep.subr.mxu0 0.0
        %3029 = vmatpush1.msra.mxu0 0.0
        %3030 = vmatprep.subr.mxu0 0.0
        %3031 = vmatpush1.msra.mxu0 0.0
        %3032 = vmatprep.subr.mxu0 0.0
        %3033 = vmatpush1.msra.mxu0 0.0
        %3034 = vmatprep.mubr.f32.mxu0 0.0
        %3035 = vmatmul.mubr.f32.gmra.mrb[0].mxu0 %v2968
        %v3036 = vpop.f32.mrb[0].mxu0
        %v3037 = vadd.f32 %v2906, %v3036
        %v3038 = vpop.f32.mrb[0].mxu0
        %3039 = vdwg.mxu0
        %3041 = vset.pattern.permute.xlu0 0
        %3042 = vperm.xlu0 %3041, %v2338
        %v3043 = vpop.permute.xlu0 %3042
        %v3045 = vmul.f32 %v3037, %v3043
        %v3047 = vcombine.high %v3045, %v3045
        %v3049 = vunpack.c.l.s4 1966171168
        %v3050 = vunpack.c.0.s8 %v3049
        %v3051 = vlaneseq
        %v3052 = vshrl.u32 %v3051, 7
        %v3053 = vsub.s32 %v3050, %v3052
        %v3054 = vrot.slane %v3045, %v3053
        %v3056 = vunpack.c.l.s4 1966171168
        %v3057 = vunpack.c.0.s8 %v3056
        %v3058 = vlaneseq
        %v3059 = vshrl.u32 %v3058, 7
        %v3060 = vsub.s32 %v3057, %v3059
        %v3061 = vrot.slane %v3047, %v3060
        %v3062 = vcombine.high %v3054, %v3054
        %v3063 = vcombine.high %v3061, %v3061
        %v3065 = vunpack.c.l.s4 1966171168
        %v3066 = vunpack.c.0.s8 %v3065
        %v3067 = vlaneseq
        %v3068 = vshrl.u32 %v3067, 7
        %v3069 = vsub.s32 %v3066, %v3068
        %v3070 = vrot.slane %v3054, %v3069
        %v3072 = vunpack.c.l.s4 1966171168
        %v3073 = vunpack.c.0.s8 %v3072
        %v3074 = vlaneseq
        %v3075 = vshrl.u32 %v3074, 7
        %v3076 = vsub.s32 %v3073, %v3075
        %v3077 = vrot.slane %v3061, %v3076
        %v3079 = vunpack.c.l.s4 1966171168
        %v3080 = vunpack.c.0.s8 %v3079
        %v3081 = vlaneseq
        %v3082 = vshrl.u32 %v3081, 7
        %v3083 = vsub.s32 %v3080, %v3082
        %v3084 = vrot.slane %v3062, %v3083
        %v3086 = vunpack.c.l.s4 1966171168
        %v3087 = vunpack.c.0.s8 %v3086
        %v3088 = vlaneseq
        %v3089 = vshrl.u32 %v3088, 7
        %v3090 = vsub.s32 %v3087, %v3089
        %v3091 = vrot.slane %v3063, %v3090
        %v3092 = vcombine.high %v3070, %v3070
        %v3093 = vcombine.high %v3077, %v3077
        %v3094 = vcombine.high %v3084, %v3084
        %v3095 = vcombine.high %v3091, %v3091
        %vm3104 = vcmask 57344
        %3105 = vst.msk [vmem:[%s541] sm:$0x1] %vm3104, %v3070
        %3106 = vst.msk [vmem:[%s541 + $0x1] sm:$0x1] %vm3104, %v3084
        %3107 = vst.msk [vmem:[%s541 + $0x2] sm:$0x1] %vm3104, %v3092
        %3108 = vst.msk [vmem:[%s541 + $0x3] sm:$0x1] %vm3104, %v3094
        %3109 = vst.msk [vmem:[%s541 + $0x4] sm:$0x1] %vm3104, %v3077
        %3110 = vst.msk [vmem:[%s541 + $0x5] sm:$0x1] %vm3104, %v3091
        %3111 = vst.msk [vmem:[%s541 + $0x6] sm:$0x1] %vm3104, %v3093
        %3112 = vst.msk [vmem:[%s541 + $0x7] sm:$0x1] %vm3104, %v3095
        %3113 = vxpose.xlu0.b32.start [1/16] %v760, 128
        %3114 = vxpose.xlu0.b32.cont [2/16] 0.0, 128
        %3115 = vxpose.xlu0.b32.cont [3/16] 0.0, 128
        %3116 = vxpose.xlu0.b32.cont [4/16] 0.0, 128
        %3117 = vxpose.xlu0.b32.cont [5/16] 0.0, 128
        %3118 = vxpose.xlu0.b32.cont [6/16] 0.0, 128
        %3119 = vxpose.xlu0.b32.cont [7/16] 0.0, 128
        %3120 = vxpose.xlu0.b32.cont [8/16] 0.0, 128
        %3121 = vxpose.xlu0.b32.cont [9/16] 0.0, 128
        %3122 = vxpose.xlu0.b32.cont [10/16] 0.0, 128
        %3123 = vxpose.xlu0.b32.cont [11/16] 0.0, 128
        %3124 = vxpose.xlu0.b32.cont [12/16] 0.0, 128
        %3125 = vxpose.xlu0.b32.cont [13/16] 0.0, 128
        %3126 = vxpose.xlu0.b32.cont [14/16] 0.0, 128
        %3127 = vxpose.xlu0.b32.cont [15/16] 0.0, 128
        %3128 = vxpose.xlu0.b32.end [16/16] 0.0, 128
        %v3129 = vpop.trf.xlu0
        %v3130 = vpop.trf.xlu0
        %v3131 = vpop.trf.xlu0
        %v3132 = vpop.trf.xlu0
        %v3133 = vpop.trf.xlu0
        %v3134 = vpop.trf.xlu0
        %v3135 = vpop.trf.xlu0
        %v3136 = vpop.trf.xlu0
        %v3137 = vpop.trf.xlu0
        %v3138 = vpop.trf.xlu0
        %v3139 = vpop.trf.xlu0
        %v3140 = vpop.trf.xlu0
        %v3141 = vpop.trf.xlu0
        %v3142 = vpop.trf.xlu0
        %v3143 = vpop.trf.xlu0
        %v3144 = vpop.trf.xlu0
        %v3146 = vsel %vm762, %v3129, 0
        %3148 = vmatprep.subr.mxu0 0.0
        %3149 = vmatpush1.msra.mxu0 %v2965
        %3150 = vmatprep.subr.mxu0 0.0
        %3151 = vmatpush1.msra.mxu0 0.0
        %3152 = vmatprep.subr.mxu0 0.0
        %3153 = vmatpush1.msra.mxu0 0.0
        %3154 = vmatprep.subr.mxu0 0.0
        %3155 = vmatpush1.msra.mxu0 0.0
        %3156 = vmatprep.subr.mxu0 0.0
        %3157 = vmatpush1.msra.mxu0 0.0
        %3158 = vmatprep.subr.mxu0 0.0
        %3159 = vmatpush1.msra.mxu0 0.0
        %3160 = vmatprep.subr.mxu0 0.0
        %3161 = vmatpush1.msra.mxu0 0.0
        %3162 = vmatprep.subr.mxu0 0.0
        %3163 = vmatpush1.msra.mxu0 0.0
        %3164 = vmatprep.subr.mxu0 0.0
        %3165 = vmatpush1.msra.mxu0 0.0
        %3166 = vmatprep.subr.mxu0 0.0
        %3167 = vmatpush1.msra.mxu0 0.0
        %3168 = vmatprep.subr.mxu0 0.0
        %3169 = vmatpush1.msra.mxu0 0.0
        %3170 = vmatprep.subr.mxu0 0.0
        %3171 = vmatpush1.msra.mxu0 0.0
        %3172 = vmatprep.subr.mxu0 0.0
        %3173 = vmatpush1.msra.mxu0 0.0
        %3174 = vmatprep.subr.mxu0 0.0
        %3175 = vmatpush1.msra.mxu0 0.0
        %3176 = vmatprep.subr.mxu0 0.0
        %3177 = vmatpush1.msra.mxu0 0.0
        %3178 = vmatprep.subr.mxu0 0.0
        %3179 = vmatpush1.msra.mxu0 0.0
        %3180 = vmatprep.subr.mxu0 0.0
        %3181 = vmatpush1.msra.mxu0 0.0
        %3182 = vmatprep.subr.mxu0 0.0
        %3183 = vmatpush1.msra.mxu0 0.0
        %3184 = vmatprep.subr.mxu0 0.0
        %3185 = vmatpush1.msra.mxu0 0.0
        %3186 = vmatprep.subr.mxu0 0.0
        %3187 = vmatpush1.msra.mxu0 0.0
        %3188 = vmatprep.subr.mxu0 0.0
        %3189 = vmatpush1.msra.mxu0 0.0
        %3190 = vmatprep.subr.mxu0 0.0
        %3191 = vmatpush1.msra.mxu0 0.0
        %3192 = vmatprep.subr.mxu0 0.0
        %3193 = vmatpush1.msra.mxu0 0.0
        %3194 = vmatprep.subr.mxu0 0.0
        %3195 = vmatpush1.msra.mxu0 0.0
        %3196 = vmatprep.subr.mxu0 0.0
        %3197 = vmatpush1.msra.mxu0 0.0
        %3198 = vmatprep.subr.mxu0 0.0
        %3199 = vmatpush1.msra.mxu0 0.0
        %3200 = vmatprep.subr.mxu0 0.0
        %3201 = vmatpush1.msra.mxu0 0.0
        %3202 = vmatprep.subr.mxu0 0.0
        %3203 = vmatpush1.msra.mxu0 0.0
        %3204 = vmatprep.subr.mxu0 0.0
        %3205 = vmatpush1.msra.mxu0 0.0
        %3206 = vmatprep.subr.mxu0 0.0
        %3207 = vmatpush1.msra.mxu0 0.0
        %3208 = vmatprep.subr.mxu0 0.0
        %3209 = vmatpush1.msra.mxu0 0.0
        %3210 = vmatprep.subr.mxu0 0.0
        %3211 = vmatpush1.msra.mxu0 0.0
        %3212 = vmatprep.mubr.f32.mxu0 0.0
        %3213 = vmatmul.mubr.f32.gmra.mrb[0].mxu0 %v3146
        %v3214 = vpop.f32.mrb[0].mxu0
        %v3215 = vadd.f32 0.0, %v3214
        %v3216 = vpop.f32.mrb[0].mxu0
        %3217 = vdwg.mxu0
        %v3218 = vadd.f32 %v2706, %v3215
        %3219 = vst.msk [vmem:[#allocation7] sm:$0xff] %vm762, %v3218
        %v3220 = vld [vmem:[#allocation7 + $0x8] sm:$0xff]
        %3221 = vrot.lane.b32.xlu0 %v2763, 120
        %v3222 = vpop.permute.xlu0 %3221
        %3223 = vrot.lane.b32.xlu0 %v760, 120
        %v3224 = vpop.permute.xlu0 %3223
        %v3225 = vsel %vm762, %v3222, 0
        %v3227 = vsel %vm762, %v3224, 0
        %3229 = vmatprep.subr.mxu0 0.0
        %3230 = vmatpush1.xpose.msra.mxu0 %v3227
        %3231 = vmatprep.subr.mxu0 0.0
        %3232 = vmatpush1.xpose.msra.mxu0 0.0
        %3233 = vmatprep.subr.mxu0 0.0
        %3234 = vmatpush1.xpose.msra.mxu0 0.0
        %3235 = vmatprep.subr.mxu0 0.0
        %3236 = vmatpush1.xpose.msra.mxu0 0.0
        %3237 = vmatprep.subr.mxu0 0.0
        %3238 = vmatpush1.xpose.msra.mxu0 0.0
        %3239 = vmatprep.subr.mxu0 0.0
        %3240 = vmatpush1.xpose.msra.mxu0 0.0
        %3241 = vmatprep.subr.mxu0 0.0
        %3242 = vmatpush1.xpose.msra.mxu0 0.0
        %3243 = vmatprep.subr.mxu0 0.0
        %3244 = vmatpush1.xpose.msra.mxu0 0.0
        %3245 = vmatprep.subr.mxu0 0.0
        %3246 = vmatpush1.xpose.msra.mxu0 0.0
        %3247 = vmatprep.subr.mxu0 0.0
        %3248 = vmatpush1.xpose.msra.mxu0 0.0
        %3249 = vmatprep.subr.mxu0 0.0
        %3250 = vmatpush1.xpose.msra.mxu0 0.0
        %3251 = vmatprep.subr.mxu0 0.0
        %3252 = vmatpush1.xpose.msra.mxu0 0.0
        %3253 = vmatprep.subr.mxu0 0.0
        %3254 = vmatpush1.xpose.msra.mxu0 0.0
        %3255 = vmatprep.subr.mxu0 0.0
        %3256 = vmatpush1.xpose.msra.mxu0 0.0
        %3257 = vmatprep.subr.mxu0 0.0
        %3258 = vmatpush1.xpose.msra.mxu0 0.0
        %3259 = vmatprep.subr.mxu0 0.0
        %3260 = vmatpush1.xpose.msra.mxu0 0.0
        %3261 = vmatprep.subr.mxu0 0.0
        %3262 = vmatpush1.xpose.msra.mxu0 0.0
        %3263 = vmatprep.subr.mxu0 0.0
        %3264 = vmatpush1.xpose.msra.mxu0 0.0
        %3265 = vmatprep.subr.mxu0 0.0
        %3266 = vmatpush1.xpose.msra.mxu0 0.0
        %3267 = vmatprep.subr.mxu0 0.0
        %3268 = vmatpush1.xpose.msra.mxu0 0.0
        %3269 = vmatprep.subr.mxu0 0.0
        %3270 = vmatpush1.xpose.msra.mxu0 0.0
        %3271 = vmatprep.subr.mxu0 0.0
        %3272 = vmatpush1.xpose.msra.mxu0 0.0
        %3273 = vmatprep.subr.mxu0 0.0
        %3274 = vmatpush1.xpose.msra.mxu0 0.0
        %3275 = vmatprep.subr.mxu0 0.0
        %3276 = vmatpush1.xpose.msra.mxu0 0.0
        %3277 = vmatprep.subr.mxu0 0.0
        %3278 = vmatpush1.xpose.msra.mxu0 0.0
        %3279 = vmatprep.subr.mxu0 0.0
        %3280 = vmatpush1.xpose.msra.mxu0 0.0
        %3281 = vmatprep.subr.mxu0 0.0
        %3282 = vmatpush1.xpose.msra.mxu0 0.0
        %3283 = vmatprep.subr.mxu0 0.0
        %3284 = vmatpush1.xpose.msra.mxu0 0.0
        %3285 = vmatprep.subr.mxu0 0.0
        %3286 = vmatpush1.xpose.msra.mxu0 0.0
        %3287 = vmatprep.subr.mxu0 0.0
        %3288 = vmatpush1.xpose.msra.mxu0 0.0
        %3289 = vmatprep.subr.mxu0 0.0
        %3290 = vmatpush1.xpose.msra.mxu0 0.0
        %3291 = vmatprep.subr.mxu0 0.0
        %3292 = vmatpush1.xpose.msra.mxu0 0.0
        %3293 = vmatprep.mubr.f32.mxu0 0.0
        %3294 = vmatmul.mubr.f32.gmra.mrb[0].mxu0 %v3225
        %v3295 = vpop.f32.mrb[0].mxu0
        %v3296 = vadd.f32 0.0, %v3295
        %v3297 = vpop.f32.mrb[0].mxu0
        %3298 = vdwg.mxu0
        %v3299 = vmul.f32 %v3296, %v562
        %3300 = vmatprep.subr.mxu0 0.0
        %3301 = vmatpush1.msra.mxu0 %v3220
        %3302 = vmatprep.subr.mxu0 0.0
        %3303 = vmatpush1.msra.mxu0 0.0
        %3304 = vmatprep.subr.mxu0 0.0
        %3305 = vmatpush1.msra.mxu0 0.0
        %3306 = vmatprep.subr.mxu0 0.0
        %3307 = vmatpush1.msra.mxu0 0.0
        %3308 = vmatprep.subr.mxu0 0.0
        %3309 = vmatpush1.msra.mxu0 0.0
        %3310 = vmatprep.subr.mxu0 0.0
        %3311 = vmatpush1.msra.mxu0 0.0
        %3312 = vmatprep.subr.mxu0 0.0
        %3313 = vmatpush1.msra.mxu0 0.0
        %3314 = vmatprep.subr.mxu0 0.0
        %3315 = vmatpush1.msra.mxu0 0.0
        %3316 = vmatprep.subr.mxu0 0.0
        %3317 = vmatpush1.msra.mxu0 0.0
        %3318 = vmatprep.subr.mxu0 0.0
        %3319 = vmatpush1.msra.mxu0 0.0
        %3320 = vmatprep.subr.mxu0 0.0
        %3321 = vmatpush1.msra.mxu0 0.0
        %3322 = vmatprep.subr.mxu0 0.0
        %3323 = vmatpush1.msra.mxu0 0.0
        %3324 = vmatprep.subr.mxu0 0.0
        %3325 = vmatpush1.msra.mxu0 0.0
        %3326 = vmatprep.subr.mxu0 0.0
        %3327 = vmatpush1.msra.mxu0 0.0
        %3328 = vmatprep.subr.mxu0 0.0
        %3329 = vmatpush1.msra.mxu0 0.0
        %3330 = vmatprep.subr.mxu0 0.0
        %3331 = vmatpush1.msra.mxu0 0.0
        %3332 = vmatprep.subr.mxu0 0.0
        %3333 = vmatpush1.msra.mxu0 0.0
        %3334 = vmatprep.subr.mxu0 0.0
        %3335 = vmatpush1.msra.mxu0 0.0
        %3336 = vmatprep.subr.mxu0 0.0
        %3337 = vmatpush1.msra.mxu0 0.0
        %3338 = vmatprep.subr.mxu0 0.0
        %3339 = vmatpush1.msra.mxu0 0.0
        %3340 = vmatprep.subr.mxu0 0.0
        %3341 = vmatpush1.msra.mxu0 0.0
        %3342 = vmatprep.subr.mxu0 0.0
        %3343 = vmatpush1.msra.mxu0 0.0
        %3344 = vmatprep.subr.mxu0 0.0
        %3345 = vmatpush1.msra.mxu0 0.0
        %3346 = vmatprep.subr.mxu0 0.0
        %3347 = vmatpush1.msra.mxu0 0.0
        %3348 = vmatprep.subr.mxu0 0.0
        %3349 = vmatpush1.msra.mxu0 0.0
        %3350 = vmatprep.subr.mxu0 0.0
        %3351 = vmatpush1.msra.mxu0 0.0
        %3352 = vmatprep.subr.mxu0 0.0
        %3353 = vmatpush1.msra.mxu0 0.0
        %3354 = vmatprep.subr.mxu0 0.0
        %3355 = vmatpush1.msra.mxu0 0.0
        %3356 = vmatprep.subr.mxu0 0.0
        %3357 = vmatpush1.msra.mxu0 0.0
        %3358 = vmatprep.subr.mxu0 0.0
        %3359 = vmatpush1.msra.mxu0 0.0
        %3360 = vmatprep.subr.mxu0 0.0
        %3361 = vmatpush1.msra.mxu0 0.0
        %3362 = vmatprep.subr.mxu0 0.0
        %3363 = vmatpush1.msra.mxu0 0.0
        %3364 = vmatprep.mubr.f32.mxu0 0.0
        %3365 = vmatmul.mubr.f32.gmra.mrb[0].mxu0 %v3225
        %v3366 = vpop.f32.mrb[0].mxu0
        %v3367 = vadd.f32 0.0, %v3366
        %v3368 = vpop.f32.mrb[0].mxu0
        %3369 = vdwg.mxu0
        %3370 = vrot.lane.b32.xlu0 %v2965, 120
        %v3371 = vpop.permute.xlu0 %3370
        %v3374 = vsel %vm762, %v3299, 0
        %3376 = vmatprep.subr.mxu0 0.0
        %3377 = vmatpush1.msra.mxu0 %v3371
        %3378 = vmatprep.subr.mxu0 0.0
        %3379 = vmatpush1.msra.mxu0 0.0
        %3380 = vmatprep.subr.mxu0 0.0
        %3381 = vmatpush1.msra.mxu0 0.0
        %3382 = vmatprep.subr.mxu0 0.0
        %3383 = vmatpush1.msra.mxu0 0.0
        %3384 = vmatprep.subr.mxu0 0.0
        %3385 = vmatpush1.msra.mxu0 0.0
        %3386 = vmatprep.subr.mxu0 0.0
        %3387 = vmatpush1.msra.mxu0 0.0
        %3388 = vmatprep.subr.mxu0 0.0
        %3389 = vmatpush1.msra.mxu0 0.0
        %3390 = vmatprep.subr.mxu0 0.0
        %3391 = vmatpush1.msra.mxu0 0.0
        %3392 = vmatprep.subr.mxu0 0.0
        %3393 = vmatpush1.msra.mxu0 0.0
        %3394 = vmatprep.subr.mxu0 0.0
        %3395 = vmatpush1.msra.mxu0 0.0
        %3396 = vmatprep.subr.mxu0 0.0
        %3397 = vmatpush1.msra.mxu0 0.0
        %3398 = vmatprep.subr.mxu0 0.0
        %3399 = vmatpush1.msra.mxu0 0.0
        %3400 = vmatprep.subr.mxu0 0.0
        %3401 = vmatpush1.msra.mxu0 0.0
        %3402 = vmatprep.subr.mxu0 0.0
        %3403 = vmatpush1.msra.mxu0 0.0
        %3404 = vmatprep.subr.mxu0 0.0
        %3405 = vmatpush1.msra.mxu0 0.0
        %3406 = vmatprep.subr.mxu0 0.0
        %3407 = vmatpush1.msra.mxu0 0.0
        %3408 = vmatprep.subr.mxu0 0.0
        %3409 = vmatpush1.msra.mxu0 0.0
        %3410 = vmatprep.subr.mxu0 0.0
        %3411 = vmatpush1.msra.mxu0 0.0
        %3412 = vmatprep.subr.mxu0 0.0
        %3413 = vmatpush1.msra.mxu0 0.0
        %3414 = vmatprep.subr.mxu0 0.0
        %3415 = vmatpush1.msra.mxu0 0.0
        %3416 = vmatprep.subr.mxu0 0.0
        %3417 = vmatpush1.msra.mxu0 0.0
        %3418 = vmatprep.subr.mxu0 0.0
        %3419 = vmatpush1.msra.mxu0 0.0
        %3420 = vmatprep.subr.mxu0 0.0
        %3421 = vmatpush1.msra.mxu0 0.0
        %3422 = vmatprep.subr.mxu0 0.0
        %3423 = vmatpush1.msra.mxu0 0.0
        %3424 = vmatprep.subr.mxu0 0.0
        %3425 = vmatpush1.msra.mxu0 0.0
        %3426 = vmatprep.subr.mxu0 0.0
        %3427 = vmatpush1.msra.mxu0 0.0
        %3428 = vmatprep.subr.mxu0 0.0
        %3429 = vmatpush1.msra.mxu0 0.0
        %3430 = vmatprep.subr.mxu0 0.0
        %3431 = vmatpush1.msra.mxu0 0.0
        %3432 = vmatprep.subr.mxu0 0.0
        %3433 = vmatpush1.msra.mxu0 0.0
        %3434 = vmatprep.subr.mxu0 0.0
        %3435 = vmatpush1.msra.mxu0 0.0
        %3436 = vmatprep.subr.mxu0 0.0
        %3437 = vmatpush1.msra.mxu0 0.0
        %3438 = vmatprep.subr.mxu0 0.0
        %3439 = vmatpush1.msra.mxu0 0.0
        %3440 = vmatprep.mubr.f32.mxu0 0.0
        %3441 = vmatmul.mubr.f32.gmra.mrb[0].mxu0 %v3374
        %v3442 = vpop.f32.mrb[0].mxu0
        %v3443 = vadd.f32 %v3367, %v3442
        %v3444 = vpop.f32.mrb[0].mxu0
        %3445 = vdwg.mxu0
        %3446 = vset.pattern.permute.xlu0 1
        %3447 = vperm.xlu0 %3446, %v2338
        %v3448 = vpop.permute.xlu0 %3447
        %v3450 = vmul.f32 %v3443, %v3448
        %v3452 = vcombine.high %v3450, %v3450
        %v3454 = vunpack.c.l.s4 1966171168
        %v3455 = vunpack.c.0.s8 %v3454
        %v3456 = vlaneseq
        %v3457 = vshrl.u32 %v3456, 7
        %v3458 = vsub.s32 %v3455, %v3457
        %v3459 = vrot.slane %v3450, %v3458
        %v3461 = vunpack.c.l.s4 1966171168
        %v3462 = vunpack.c.0.s8 %v3461
        %v3463 = vlaneseq
        %v3464 = vshrl.u32 %v3463, 7
        %v3465 = vsub.s32 %v3462, %v3464
        %v3466 = vrot.slane %v3452, %v3465
        %v3467 = vcombine.high %v3459, %v3459
        %v3468 = vcombine.high %v3466, %v3466
        %v3470 = vunpack.c.l.s4 1966171168
        %v3471 = vunpack.c.0.s8 %v3470
        %v3472 = vlaneseq
        %v3473 = vshrl.u32 %v3472, 7
        %v3474 = vsub.s32 %v3471, %v3473
        %v3475 = vrot.slane %v3459, %v3474
        %v3477 = vunpack.c.l.s4 1966171168
        %v3478 = vunpack.c.0.s8 %v3477
        %v3479 = vlaneseq
        %v3480 = vshrl.u32 %v3479, 7
        %v3481 = vsub.s32 %v3478, %v3480
        %v3482 = vrot.slane %v3466, %v3481
        %v3484 = vunpack.c.l.s4 1966171168
        %v3485 = vunpack.c.0.s8 %v3484
        %v3486 = vlaneseq
        %v3487 = vshrl.u32 %v3486, 7
        %v3488 = vsub.s32 %v3485, %v3487
        %v3489 = vrot.slane %v3467, %v3488
        %v3491 = vunpack.c.l.s4 1966171168
        %v3492 = vunpack.c.0.s8 %v3491
        %v3493 = vlaneseq
        %v3494 = vshrl.u32 %v3493, 7
        %v3495 = vsub.s32 %v3492, %v3494
        %v3496 = vrot.slane %v3468, %v3495
        %v3497 = vcombine.high %v3475, %v3475
        %v3498 = vcombine.high %v3482, %v3482
        %v3499 = vcombine.high %v3489, %v3489
        %v3500 = vcombine.high %v3496, %v3496
        %v3501 = vlaneseq
        %v3502 = vshrl.u32 %v3501, 7
        %v3503 = vsub.s32 0, %v3502
        %v3504 = vrot.slane %v3475, %v3503
        %v3505 = vlaneseq
        %v3506 = vshrl.u32 %v3505, 7
        %v3507 = vsub.s32 0, %v3506
        %v3508 = vrot.slane %v3489, %v3507
        %v3509 = vlaneseq
        %v3510 = vshrl.u32 %v3509, 7
        %v3511 = vsub.s32 0, %v3510
        %v3512 = vrot.slane %v3497, %v3511
        %v3513 = vlaneseq
        %v3514 = vshrl.u32 %v3513, 7
        %v3515 = vsub.s32 0, %v3514
        %v3516 = vrot.slane %v3499, %v3515
        %v3517 = vlaneseq
        %v3518 = vshrl.u32 %v3517, 7
        %v3519 = vsub.s32 0, %v3518
        %v3520 = vrot.slane %v3482, %v3519
        %v3521 = vlaneseq
        %v3522 = vshrl.u32 %v3521, 7
        %v3523 = vsub.s32 0, %v3522
        %v3524 = vrot.slane %v3496, %v3523
        %v3525 = vlaneseq
        %v3526 = vshrl.u32 %v3525, 7
        %v3527 = vsub.s32 0, %v3526
        %v3528 = vrot.slane %v3498, %v3527
        %v3529 = vlaneseq
        %v3530 = vshrl.u32 %v3529, 7
        %v3531 = vsub.s32 0, %v3530
        %v3532 = vrot.slane %v3500, %v3531
        %3533 = vrot.lane.b32.xlu0 %v3504, 8
        %v3534 = vpop.permute.xlu0 %3533
        %3535 = vrot.lane.b32.xlu0 %v3508, 8
        %v3536 = vpop.permute.xlu0 %3535
        %3537 = vrot.lane.b32.xlu0 %v3512, 8
        %v3538 = vpop.permute.xlu0 %3537
        %3539 = vrot.lane.b32.xlu0 %v3516, 8
        %v3540 = vpop.permute.xlu0 %3539
        %3541 = vrot.lane.b32.xlu0 %v3520, 8
        %v3542 = vpop.permute.xlu0 %3541
        %3543 = vrot.lane.b32.xlu0 %v3524, 8
        %v3544 = vpop.permute.xlu0 %3543
        %3545 = vrot.lane.b32.xlu0 %v3528, 8
        %v3546 = vpop.permute.xlu0 %3545
        %3547 = vrot.lane.b32.xlu0 %v3532, 8
        %v3548 = vpop.permute.xlu0 %3547
        %vm3557 = vcmask 122944
        %3558 = vst.msk [vmem:[%s541] sm:$0x1] %vm3557, %v3534
        %3559 = vst.msk [vmem:[%s541 + $0x1] sm:$0x1] %vm3557, %v3536
        %3560 = vst.msk [vmem:[%s541 + $0x2] sm:$0x1] %vm3557, %v3538
        %3561 = vst.msk [vmem:[%s541 + $0x3] sm:$0x1] %vm3557, %v3540
        %3562 = vst.msk [vmem:[%s541 + $0x4] sm:$0x1] %vm3557, %v3542
        %3563 = vst.msk [vmem:[%s541 + $0x5] sm:$0x1] %vm3557, %v3544
        %3564 = vst.msk [vmem:[%s541 + $0x6] sm:$0x1] %vm3557, %v3546
        %3565 = vst.msk [vmem:[%s541 + $0x7] sm:$0x1] %vm3557, %v3548
        %3567 = vxpose.xlu0.b32.start [1/16] %v3224, 128
        %3568 = vxpose.xlu0.b32.cont [2/16] 0.0, 128
        %3569 = vxpose.xlu0.b32.cont [3/16] 0.0, 128
        %3570 = vxpose.xlu0.b32.cont [4/16] 0.0, 128
        %3571 = vxpose.xlu0.b32.cont [5/16] 0.0, 128
        %3572 = vxpose.xlu0.b32.cont [6/16] 0.0, 128
        %3573 = vxpose.xlu0.b32.cont [7/16] 0.0, 128
        %3574 = vxpose.xlu0.b32.cont [8/16] 0.0, 128
        %3575 = vxpose.xlu0.b32.cont [9/16] 0.0, 128
        %3576 = vxpose.xlu0.b32.cont [10/16] 0.0, 128
        %3577 = vxpose.xlu0.b32.cont [11/16] 0.0, 128
        %3578 = vxpose.xlu0.b32.cont [12/16] 0.0, 128
        %3579 = vxpose.xlu0.b32.cont [13/16] 0.0, 128
        %3580 = vxpose.xlu0.b32.cont [14/16] 0.0, 128
        %3581 = vxpose.xlu0.b32.cont [15/16] 0.0, 128
        %3582 = vxpose.xlu0.b32.end [16/16] 0.0, 128
        %v3583 = vpop.trf.xlu0
        %v3584 = vpop.trf.xlu0
        %v3585 = vpop.trf.xlu0
        %v3586 = vpop.trf.xlu0
        %v3587 = vpop.trf.xlu0
        %v3588 = vpop.trf.xlu0
        %v3589 = vpop.trf.xlu0
        %v3590 = vpop.trf.xlu0
        %v3591 = vpop.trf.xlu0
        %v3592 = vpop.trf.xlu0
        %v3593 = vpop.trf.xlu0
        %v3594 = vpop.trf.xlu0
        %v3595 = vpop.trf.xlu0
        %v3596 = vpop.trf.xlu0
        %v3597 = vpop.trf.xlu0
        %v3598 = vpop.trf.xlu0
        %v3600 = vsel %vm762, %v3583, 0
        %3602 = vmatprep.subr.mxu0 0.0
        %3603 = vmatpush1.msra.mxu0 %v3371
        %3604 = vmatprep.subr.mxu0 0.0
        %3605 = vmatpush1.msra.mxu0 0.0
        %3606 = vmatprep.subr.mxu0 0.0
        %3607 = vmatpush1.msra.mxu0 0.0
        %3608 = vmatprep.subr.mxu0 0.0
        %3609 = vmatpush1.msra.mxu0 0.0
        %3610 = vmatprep.subr.mxu0 0.0
        %3611 = vmatpush1.msra.mxu0 0.0
        %3612 = vmatprep.subr.mxu0 0.0
        %3613 = vmatpush1.msra.mxu0 0.0
        %3614 = vmatprep.subr.mxu0 0.0
        %3615 = vmatpush1.msra.mxu0 0.0
        %3616 = vmatprep.subr.mxu0 0.0
        %3617 = vmatpush1.msra.mxu0 0.0
        %3618 = vmatprep.subr.mxu0 0.0
        %3619 = vmatpush1.msra.mxu0 0.0
        %3620 = vmatprep.subr.mxu0 0.0
        %3621 = vmatpush1.msra.mxu0 0.0
        %3622 = vmatprep.subr.mxu0 0.0
        %3623 = vmatpush1.msra.mxu0 0.0
        %3624 = vmatprep.subr.mxu0 0.0
        %3625 = vmatpush1.msra.mxu0 0.0
        %3626 = vmatprep.subr.mxu0 0.0
        %3627 = vmatpush1.msra.mxu0 0.0
        %3628 = vmatprep.subr.mxu0 0.0
        %3629 = vmatpush1.msra.mxu0 0.0
        %3630 = vmatprep.subr.mxu0 0.0
        %3631 = vmatpush1.msra.mxu0 0.0
        %3632 = vmatprep.subr.mxu0 0.0
        %3633 = vmatpush1.msra.mxu0 0.0
        %3634 = vmatprep.subr.mxu0 0.0
        %3635 = vmatpush1.msra.mxu0 0.0
        %3636 = vmatprep.subr.mxu0 0.0
        %3637 = vmatpush1.msra.mxu0 0.0
        %3638 = vmatprep.subr.mxu0 0.0
        %3639 = vmatpush1.msra.mxu0 0.0
        %3640 = vmatprep.subr.mxu0 0.0
        %3641 = vmatpush1.msra.mxu0 0.0
        %3642 = vmatprep.subr.mxu0 0.0
        %3643 = vmatpush1.msra.mxu0 0.0
        %3644 = vmatprep.subr.mxu0 0.0
        %3645 = vmatpush1.msra.mxu0 0.0
        %3646 = vmatprep.subr.mxu0 0.0
        %3647 = vmatpush1.msra.mxu0 0.0
        %3648 = vmatprep.subr.mxu0 0.0
        %3649 = vmatpush1.msra.mxu0 0.0
        %3650 = vmatprep.subr.mxu0 0.0
        %3651 = vmatpush1.msra.mxu0 0.0
        %3652 = vmatprep.subr.mxu0 0.0
        %3653 = vmatpush1.msra.mxu0 0.0
        %3654 = vmatprep.subr.mxu0 0.0
        %3655 = vmatpush1.msra.mxu0 0.0
        %3656 = vmatprep.subr.mxu0 0.0
        %3657 = vmatpush1.msra.mxu0 0.0
        %3658 = vmatprep.subr.mxu0 0.0
        %3659 = vmatpush1.msra.mxu0 0.0
        %3660 = vmatprep.subr.mxu0 0.0
        %3661 = vmatpush1.msra.mxu0 0.0
        %3662 = vmatprep.subr.mxu0 0.0
        %3663 = vmatpush1.msra.mxu0 0.0
        %3664 = vmatprep.subr.mxu0 0.0
        %3665 = vmatpush1.msra.mxu0 0.0
        %3666 = vmatprep.mubr.f32.mxu0 0.0
        %3667 = vmatmul.mubr.f32.gmra.mrb[0].mxu0 %v3600
        %v3668 = vpop.f32.mrb[0].mxu0
        %v3669 = vadd.f32 0.0, %v3668
        %v3670 = vpop.f32.mrb[0].mxu0
        %3671 = vdwg.mxu0
        %v3672 = vadd.f32 %v3220, %v3669
        %3673 = vst.msk [vmem:[#allocation7 + $0x8] sm:$0xff] %vm762, %v3672
        %v3674 = vld [vmem:[#allocation7 + $0x10] sm:$0xff]
        %3675 = vrot.lane.b32.xlu0 %v2763, 112
        %v3676 = vpop.permute.xlu0 %3675
        %3677 = vrot.lane.b32.xlu0 %v760, 112
        %v3678 = vpop.permute.xlu0 %3677
        %v3679 = vsel %vm762, %v3676, 0
        %v3681 = vsel %vm762, %v3678, 0
        %3683 = vmatprep.subr.mxu0 0.0
        %3684 = vmatpush1.xpose.msra.mxu0 %v3681
        %3685 = vmatprep.subr.mxu0 0.0
        %3686 = vmatpush1.xpose.msra.mxu0 0.0
        %3687 = vmatprep.subr.mxu0 0.0
        %3688 = vmatpush1.xpose.msra.mxu0 0.0
        %3689 = vmatprep.subr.mxu0 0.0
        %3690 = vmatpush1.xpose.msra.mxu0 0.0
        %3691 = vmatprep.subr.mxu0 0.0
        %3692 = vmatpush1.xpose.msra.mxu0 0.0
        %3693 = vmatprep.subr.mxu0 0.0
        %3694 = vmatpush1.xpose.msra.mxu0 0.0
        %3695 = vmatprep.subr.mxu0 0.0
        %3696 = vmatpush1.xpose.msra.mxu0 0.0
        %3697 = vmatprep.subr.mxu0 0.0
        %3698 = vmatpush1.xpose.msra.mxu0 0.0
        %3699 = vmatprep.subr.mxu0 0.0
        %3700 = vmatpush1.xpose.msra.mxu0 0.0
        %3701 = vmatprep.subr.mxu0 0.0
        %3702 = vmatpush1.xpose.msra.mxu0 0.0
        %3703 = vmatprep.subr.mxu0 0.0
        %3704 = vmatpush1.xpose.msra.mxu0 0.0
        %3705 = vmatprep.subr.mxu0 0.0
        %3706 = vmatpush1.xpose.msra.mxu0 0.0
        %3707 = vmatprep.subr.mxu0 0.0
        %3708 = vmatpush1.xpose.msra.mxu0 0.0
        %3709 = vmatprep.subr.mxu0 0.0
        %3710 = vmatpush1.xpose.msra.mxu0 0.0
        %3711 = vmatprep.subr.mxu0 0.0
        %3712 = vmatpush1.xpose.msra.mxu0 0.0
        %3713 = vmatprep.subr.mxu0 0.0
        %3714 = vmatpush1.xpose.msra.mxu0 0.0
        %3715 = vmatprep.subr.mxu0 0.0
        %3716 = vmatpush1.xpose.msra.mxu0 0.0
        %3717 = vmatprep.subr.mxu0 0.0
        %3718 = vmatpush1.xpose.msra.mxu0 0.0
        %3719 = vmatprep.subr.mxu0 0.0
        %3720 = vmatpush1.xpose.msra.mxu0 0.0
        %3721 = vmatprep.subr.mxu0 0.0
        %3722 = vmatpush1.xpose.msra.mxu0 0.0
        %3723 = vmatprep.subr.mxu0 0.0
        %3724 = vmatpush1.xpose.msra.mxu0 0.0
        %3725 = vmatprep.subr.mxu0 0.0
        %3726 = vmatpush1.xpose.msra.mxu0 0.0
        %3727 = vmatprep.subr.mxu0 0.0
        %3728 = vmatpush1.xpose.msra.mxu0 0.0
        %3729 = vmatprep.subr.mxu0 0.0
        %3730 = vmatpush1.xpose.msra.mxu0 0.0
        %3731 = vmatprep.subr.mxu0 0.0
        %3732 = vmatpush1.xpose.msra.mxu0 0.0
        %3733 = vmatprep.subr.mxu0 0.0
        %3734 = vmatpush1.xpose.msra.mxu0 0.0
        %3735 = vmatprep.subr.mxu0 0.0
        %3736 = vmatpush1.xpose.msra.mxu0 0.0
        %3737 = vmatprep.subr.mxu0 0.0
        %3738 = vmatpush1.xpose.msra.mxu0 0.0
        %3739 = vmatprep.subr.mxu0 0.0
        %3740 = vmatpush1.xpose.msra.mxu0 0.0
        %3741 = vmatprep.subr.mxu0 0.0
        %3742 = vmatpush1.xpose.msra.mxu0 0.0
        %3743 = vmatprep.subr.mxu0 0.0
        %3744 = vmatpush1.xpose.msra.mxu0 0.0
        %3745 = vmatprep.subr.mxu0 0.0
        %3746 = vmatpush1.xpose.msra.mxu0 0.0
        %3747 = vmatprep.mubr.f32.mxu0 0.0
        %3748 = vmatmul.mubr.f32.gmra.mrb[0].mxu0 %v3679
        %v3749 = vpop.f32.mrb[0].mxu0
        %v3750 = vadd.f32 0.0, %v3749
        %v3751 = vpop.f32.mrb[0].mxu0
        %3752 = vdwg.mxu0
        %v3753 = vmul.f32 %v3750, %v562
        %3754 = vmatprep.subr.mxu0 0.0
        %3755 = vmatpush1.msra.mxu0 %v3674
        %3756 = vmatprep.subr.mxu0 0.0
        %3757 = vmatpush1.msra.mxu0 0.0
        %3758 = vmatprep.subr.mxu0 0.0
        %3759 = vmatpush1.msra.mxu0 0.0
        %3760 = vmatprep.subr.mxu0 0.0
        %3761 = vmatpush1.msra.mxu0 0.0
        %3762 = vmatprep.subr.mxu0 0.0
        %3763 = vmatpush1.msra.mxu0 0.0
        %3764 = vmatprep.subr.mxu0 0.0
        %3765 = vmatpush1.msra.mxu0 0.0
        %3766 = vmatprep.subr.mxu0 0.0
        %3767 = vmatpush1.msra.mxu0 0.0
        %3768 = vmatprep.subr.mxu0 0.0
        %3769 = vmatpush1.msra.mxu0 0.0
        %3770 = vmatprep.subr.mxu0 0.0
        %3771 = vmatpush1.msra.mxu0 0.0
        %3772 = vmatprep.subr.mxu0 0.0
        %3773 = vmatpush1.msra.mxu0 0.0
        %3774 = vmatprep.subr.mxu0 0.0
        %3775 = vmatpush1.msra.mxu0 0.0
        %3776 = vmatprep.subr.mxu0 0.0
        %3777 = vmatpush1.msra.mxu0 0.0
        %3778 = vmatprep.subr.mxu0 0.0
        %3779 = vmatpush1.msra.mxu0 0.0
        %3780 = vmatprep.subr.mxu0 0.0
        %3781 = vmatpush1.msra.mxu0 0.0
        %3782 = vmatprep.subr.mxu0 0.0
        %3783 = vmatpush1.msra.mxu0 0.0
        %3784 = vmatprep.subr.mxu0 0.0
        %3785 = vmatpush1.msra.mxu0 0.0
        %3786 = vmatprep.subr.mxu0 0.0
        %3787 = vmatpush1.msra.mxu0 0.0
        %3788 = vmatprep.subr.mxu0 0.0
        %3789 = vmatpush1.msra.mxu0 0.0
        %3790 = vmatprep.subr.mxu0 0.0
        %3791 = vmatpush1.msra.mxu0 0.0
        %3792 = vmatprep.subr.mxu0 0.0
        %3793 = vmatpush1.msra.mxu0 0.0
        %3794 = vmatprep.subr.mxu0 0.0
        %3795 = vmatpush1.msra.mxu0 0.0
        %3796 = vmatprep.subr.mxu0 0.0
        %3797 = vmatpush1.msra.mxu0 0.0
        %3798 = vmatprep.subr.mxu0 0.0
        %3799 = vmatpush1.msra.mxu0 0.0
        %3800 = vmatprep.subr.mxu0 0.0
        %3801 = vmatpush1.msra.mxu0 0.0
        %3802 = vmatprep.subr.mxu0 0.0
        %3803 = vmatpush1.msra.mxu0 0.0
        %3804 = vmatprep.subr.mxu0 0.0
        %3805 = vmatpush1.msra.mxu0 0.0
        %3806 = vmatprep.subr.mxu0 0.0
        %3807 = vmatpush1.msra.mxu0 0.0
        %3808 = vmatprep.subr.mxu0 0.0
        %3809 = vmatpush1.msra.mxu0 0.0
        %3810 = vmatprep.subr.mxu0 0.0
        %3811 = vmatpush1.msra.mxu0 0.0
        %3812 = vmatprep.subr.mxu0 0.0
        %3813 = vmatpush1.msra.mxu0 0.0
        %3814 = vmatprep.subr.mxu0 0.0
        %3815 = vmatpush1.msra.mxu0 0.0
        %3816 = vmatprep.subr.mxu0 0.0
        %3817 = vmatpush1.msra.mxu0 0.0
        %3818 = vmatprep.mubr.f32.mxu0 0.0
        %3819 = vmatmul.mubr.f32.gmra.mrb[0].mxu0 %v3679
        %v3820 = vpop.f32.mrb[0].mxu0
        %v3821 = vadd.f32 0.0, %v3820
        %v3822 = vpop.f32.mrb[0].mxu0
        %3823 = vdwg.mxu0
        %3824 = vrot.lane.b32.xlu0 %v2965, 112
        %v3825 = vpop.permute.xlu0 %3824
        %v3828 = vsel %vm762, %v3753, 0
        %3830 = vmatprep.subr.mxu0 0.0
        %3831 = vmatpush1.msra.mxu0 %v3825
        %3832 = vmatprep.subr.mxu0 0.0
        %3833 = vmatpush1.msra.mxu0 0.0
        %3834 = vmatprep.subr.mxu0 0.0
        %3835 = vmatpush1.msra.mxu0 0.0
        %3836 = vmatprep.subr.mxu0 0.0
        %3837 = vmatpush1.msra.mxu0 0.0
        %3838 = vmatprep.subr.mxu0 0.0
        %3839 = vmatpush1.msra.mxu0 0.0
        %3840 = vmatprep.subr.mxu0 0.0
        %3841 = vmatpush1.msra.mxu0 0.0
        %3842 = vmatprep.subr.mxu0 0.0
        %3843 = vmatpush1.msra.mxu0 0.0
        %3844 = vmatprep.subr.mxu0 0.0
        %3845 = vmatpush1.msra.mxu0 0.0
        %3846 = vmatprep.subr.mxu0 0.0
        %3847 = vmatpush1.msra.mxu0 0.0
        %3848 = vmatprep.subr.mxu0 0.0
        %3849 = vmatpush1.msra.mxu0 0.0
        %3850 = vmatprep.subr.mxu0 0.0
        %3851 = vmatpush1.msra.mxu0 0.0
        %3852 = vmatprep.subr.mxu0 0.0
        %3853 = vmatpush1.msra.mxu0 0.0
        %3854 = vmatprep.subr.mxu0 0.0
        %3855 = vmatpush1.msra.mxu0 0.0
        %3856 = vmatprep.subr.mxu0 0.0
        %3857 = vmatpush1.msra.mxu0 0.0
        %3858 = vmatprep.subr.mxu0 0.0
        %3859 = vmatpush1.msra.mxu0 0.0
        %3860 = vmatprep.subr.mxu0 0.0
        %3861 = vmatpush1.msra.mxu0 0.0
        %3862 = vmatprep.subr.mxu0 0.0
        %3863 = vmatpush1.msra.mxu0 0.0
        %3864 = vmatprep.subr.mxu0 0.0
        %3865 = vmatpush1.msra.mxu0 0.0
        %3866 = vmatprep.subr.mxu0 0.0
        %3867 = vmatpush1.msra.mxu0 0.0
        %3868 = vmatprep.subr.mxu0 0.0
        %3869 = vmatpush1.msra.mxu0 0.0
        %3870 = vmatprep.subr.mxu0 0.0
        %3871 = vmatpush1.msra.mxu0 0.0
        %3872 = vmatprep.subr.mxu0 0.0
        %3873 = vmatpush1.msra.mxu0 0.0
        %3874 = vmatprep.subr.mxu0 0.0
        %3875 = vmatpush1.msra.mxu0 0.0
        %3876 = vmatprep.subr.mxu0 0.0
        %3877 = vmatpush1.msra.mxu0 0.0
        %3878 = vmatprep.subr.mxu0 0.0
        %3879 = vmatpush1.msra.mxu0 0.0
        %3880 = vmatprep.subr.mxu0 0.0
        %3881 = vmatpush1.msra.mxu0 0.0
        %3882 = vmatprep.subr.mxu0 0.0
        %3883 = vmatpush1.msra.mxu0 0.0
        %3884 = vmatprep.subr.mxu0 0.0
        %3885 = vmatpush1.msra.mxu0 0.0
        %3886 = vmatprep.subr.mxu0 0.0
        %3887 = vmatpush1.msra.mxu0 0.0
        %3888 = vmatprep.subr.mxu0 0.0
        %3889 = vmatpush1.msra.mxu0 0.0
        %3890 = vmatprep.subr.mxu0 0.0
        %3891 = vmatpush1.msra.mxu0 0.0
        %3892 = vmatprep.subr.mxu0 0.0
        %3893 = vmatpush1.msra.mxu0 0.0
        %3894 = vmatprep.mubr.f32.mxu0 0.0
        %3895 = vmatmul.mubr.f32.gmra.mrb[0].mxu0 %v3828
        %v3896 = vpop.f32.mrb[0].mxu0
        %v3897 = vadd.f32 %v3821, %v3896
        %v3898 = vpop.f32.mrb[0].mxu0
        %3899 = vdwg.mxu0
        %3900 = vset.pattern.permute.xlu0 2
        %3901 = vperm.xlu0 %3900, %v2338
        %v3902 = vpop.permute.xlu0 %3901
        %v3904 = vmul.f32 %v3897, %v3902
        %v3906 = vcombine.high %v3904, %v3904
        %v3908 = vunpack.c.l.s4 1966171168
        %v3909 = vunpack.c.0.s8 %v3908
        %v3910 = vlaneseq
        %v3911 = vshrl.u32 %v3910, 7
        %v3912 = vsub.s32 %v3909, %v3911
        %v3913 = vrot.slane %v3904, %v3912
        %v3915 = vunpack.c.l.s4 1966171168
        %v3916 = vunpack.c.0.s8 %v3915
        %v3917 = vlaneseq
        %v3918 = vshrl.u32 %v3917, 7
        %v3919 = vsub.s32 %v3916, %v3918
        %v3920 = vrot.slane %v3906, %v3919
        %v3921 = vcombine.high %v3913, %v3913
        %v3922 = vcombine.high %v3920, %v3920
        %v3924 = vunpack.c.l.s4 1966171168
        %v3925 = vunpack.c.0.s8 %v3924
        %v3926 = vlaneseq
        %v3927 = vshrl.u32 %v3926, 7
        %v3928 = vsub.s32 %v3925, %v3927
        %v3929 = vrot.slane %v3913, %v3928
        %v3931 = vunpack.c.l.s4 1966171168
        %v3932 = vunpack.c.0.s8 %v3931
        %v3933 = vlaneseq
        %v3934 = vshrl.u32 %v3933, 7
        %v3935 = vsub.s32 %v3932, %v3934
        %v3936 = vrot.slane %v3920, %v3935
        %v3938 = vunpack.c.l.s4 1966171168
        %v3939 = vunpack.c.0.s8 %v3938
        %v3940 = vlaneseq
        %v3941 = vshrl.u32 %v3940, 7
        %v3942 = vsub.s32 %v3939, %v3941
        %v3943 = vrot.slane %v3921, %v3942
        %v3945 = vunpack.c.l.s4 1966171168
        %v3946 = vunpack.c.0.s8 %v3945
        %v3947 = vlaneseq
        %v3948 = vshrl.u32 %v3947, 7
        %v3949 = vsub.s32 %v3946, %v3948
        %v3950 = vrot.slane %v3922, %v3949
        %v3951 = vcombine.high %v3929, %v3929
        %v3952 = vcombine.high %v3936, %v3936
        %v3953 = vcombine.high %v3943, %v3943
        %v3954 = vcombine.high %v3950, %v3950
        %v3955 = vlaneseq
        %v3956 = vshrl.u32 %v3955, 7
        %v3957 = vsub.s32 0, %v3956
        %v3958 = vrot.slane %v3929, %v3957
        %v3959 = vlaneseq
        %v3960 = vshrl.u32 %v3959, 7
        %v3961 = vsub.s32 0, %v3960
        %v3962 = vrot.slane %v3943, %v3961
        %v3963 = vlaneseq
        %v3964 = vshrl.u32 %v3963, 7
        %v3965 = vsub.s32 0, %v3964
        %v3966 = vrot.slane %v3951, %v3965
        %v3967 = vlaneseq
        %v3968 = vshrl.u32 %v3967, 7
        %v3969 = vsub.s32 0, %v3968
        %v3970 = vrot.slane %v3953, %v3969
        %v3971 = vlaneseq
        %v3972 = vshrl.u32 %v3971, 7
        %v3973 = vsub.s32 0, %v3972
        %v3974 = vrot.slane %v3936, %v3973
        %v3975 = vlaneseq
        %v3976 = vshrl.u32 %v3975, 7
        %v3977 = vsub.s32 0, %v3976
        %v3978 = vrot.slane %v3950, %v3977
        %v3979 = vlaneseq
        %v3980 = vshrl.u32 %v3979, 7
        %v3981 = vsub.s32 0, %v3980
        %v3982 = vrot.slane %v3952, %v3981
        %v3983 = vlaneseq
        %v3984 = vshrl.u32 %v3983, 7
        %v3985 = vsub.s32 0, %v3984
        %v3986 = vrot.slane %v3954, %v3985
        %3987 = vrot.lane.b32.xlu0 %v3958, 16
        %v3988 = vpop.permute.xlu0 %3987
        %3989 = vrot.lane.b32.xlu0 %v3962, 16
        %v3990 = vpop.permute.xlu0 %3989
        %3991 = vrot.lane.b32.xlu0 %v3966, 16
        %v3992 = vpop.permute.xlu0 %3991
        %3993 = vrot.lane.b32.xlu0 %v3970, 16
        %v3994 = vpop.permute.xlu0 %3993
        %3995 = vrot.lane.b32.xlu0 %v3974, 16
        %v3996 = vpop.permute.xlu0 %3995
        %3997 = vrot.lane.b32.xlu0 %v3978, 16
        %v3998 = vpop.permute.xlu0 %3997
        %3999 = vrot.lane.b32.xlu0 %v3982, 16
        %v4000 = vpop.permute.xlu0 %3999
        %4001 = vrot.lane.b32.xlu0 %v3986, 16
        %v4002 = vpop.permute.xlu0 %4001
        %vm4011 = vcmask 188544
        %4012 = vst.msk [vmem:[%s541] sm:$0x1] %vm4011, %v3988
        %4013 = vst.msk [vmem:[%s541 + $0x1] sm:$0x1] %vm4011, %v3990
        %4014 = vst.msk [vmem:[%s541 + $0x2] sm:$0x1] %vm4011, %v3992
        %4015 = vst.msk [vmem:[%s541 + $0x3] sm:$0x1] %vm4011, %v3994
        %4016 = vst.msk [vmem:[%s541 + $0x4] sm:$0x1] %vm4011, %v3996
        %4017 = vst.msk [vmem:[%s541 + $0x5] sm:$0x1] %vm4011, %v3998
        %4018 = vst.msk [vmem:[%s541 + $0x6] sm:$0x1] %vm4011, %v4000
        %4019 = vst.msk [vmem:[%s541 + $0x7] sm:$0x1] %vm4011, %v4002
        %4021 = vxpose.xlu0.b32.start [1/16] %v3678, 128
        %4022 = vxpose.xlu0.b32.cont [2/16] 0.0, 128
        %4023 = vxpose.xlu0.b32.cont [3/16] 0.0, 128
        %4024 = vxpose.xlu0.b32.cont [4/16] 0.0, 128
        %4025 = vxpose.xlu0.b32.cont [5/16] 0.0, 128
        %4026 = vxpose.xlu0.b32.cont [6/16] 0.0, 128
        %4027 = vxpose.xlu0.b32.cont [7/16] 0.0, 128
        %4028 = vxpose.xlu0.b32.cont [8/16] 0.0, 128
        %4029 = vxpose.xlu0.b32.cont [9/16] 0.0, 128
        %4030 = vxpose.xlu0.b32.cont [10/16] 0.0, 128
        %4031 = vxpose.xlu0.b32.cont [11/16] 0.0, 128
        %4032 = vxpose.xlu0.b32.cont [12/16] 0.0, 128
        %4033 = vxpose.xlu0.b32.cont [13/16] 0.0, 128
        %4034 = vxpose.xlu0.b32.cont [14/16] 0.0, 128
        %4035 = vxpose.xlu0.b32.cont [15/16] 0.0, 128
        %4036 = vxpose.xlu0.b32.end [16/16] 0.0, 128
        %v4037 = vpop.trf.xlu0
        %v4038 = vpop.trf.xlu0
        %v4039 = vpop.trf.xlu0
        %v4040 = vpop.trf.xlu0
        %v4041 = vpop.trf.xlu0
        %v4042 = vpop.trf.xlu0
        %v4043 = vpop.trf.xlu0
        %v4044 = vpop.trf.xlu0
        %v4045 = vpop.trf.xlu0
        %v4046 = vpop.trf.xlu0
        %v4047 = vpop.trf.xlu0
        %v4048 = vpop.trf.xlu0
        %v4049 = vpop.trf.xlu0
        %v4050 = vpop.trf.xlu0
        %v4051 = vpop.trf.xlu0
        %v4052 = vpop.trf.xlu0
        %v4054 = vsel %vm762, %v4037, 0
        %4056 = vmatprep.subr.mxu0 0.0
        %4057 = vmatpush1.msra.mxu0 %v3825
        %4058 = vmatprep.subr.mxu0 0.0
        %4059 = vmatpush1.msra.mxu0 0.0
        %4060 = vmatprep.subr.mxu0 0.0
        %4061 = vmatpush1.msra.mxu0 0.0
        %4062 = vmatprep.subr.mxu0 0.0
        %4063 = vmatpush1.msra.mxu0 0.0
        %4064 = vmatprep.subr.mxu0 0.0
        %4065 = vmatpush1.msra.mxu0 0.0
        %4066 = vmatprep.subr.mxu0 0.0
        %4067 = vmatpush1.msra.mxu0 0.0
        %4068 = vmatprep.subr.mxu0 0.0
        %4069 = vmatpush1.msra.mxu0 0.0
        %4070 = vmatprep.subr.mxu0 0.0
        %4071 = vmatpush1.msra.mxu0 0.0
        %4072 = vmatprep.subr.mxu0 0.0
        %4073 = vmatpush1.msra.mxu0 0.0
        %4074 = vmatprep.subr.mxu0 0.0
        %4075 = vmatpush1.msra.mxu0 0.0
        %4076 = vmatprep.subr.mxu0 0.0
        %4077 = vmatpush1.msra.mxu0 0.0
        %4078 = vmatprep.subr.mxu0 0.0
        %4079 = vmatpush1.msra.mxu0 0.0
        %4080 = vmatprep.subr.mxu0 0.0
        %4081 = vmatpush1.msra.mxu0 0.0
        %4082 = vmatprep.subr.mxu0 0.0
        %4083 = vmatpush1.msra.mxu0 0.0
        %4084 = vmatprep.subr.mxu0 0.0
        %4085 = vmatpush1.msra.mxu0 0.0
        %4086 = vmatprep.subr.mxu0 0.0
        %4087 = vmatpush1.msra.mxu0 0.0
        %4088 = vmatprep.subr.mxu0 0.0
        %4089 = vmatpush1.msra.mxu0 0.0
        %4090 = vmatprep.subr.mxu0 0.0
        %4091 = vmatpush1.msra.mxu0 0.0
        %4092 = vmatprep.subr.mxu0 0.0
        %4093 = vmatpush1.msra.mxu0 0.0
        %4094 = vmatprep.subr.mxu0 0.0
        %4095 = vmatpush1.msra.mxu0 0.0
        %4096 = vmatprep.subr.mxu0 0.0
        %4097 = vmatpush1.msra.mxu0 0.0
        %4098 = vmatprep.subr.mxu0 0.0
        %4099 = vmatpush1.msra.mxu0 0.0
        %4100 = vmatprep.subr.mxu0 0.0
        %4101 = vmatpush1.msra.mxu0 0.0
        %4102 = vmatprep.subr.mxu0 0.0
        %4103 = vmatpush1.msra.mxu0 0.0
        %4104 = vmatprep.subr.mxu0 0.0
        %4105 = vmatpush1.msra.mxu0 0.0
        %4106 = vmatprep.subr.mxu0 0.0
        %4107 = vmatpush1.msra.mxu0 0.0
        %4108 = vmatprep.subr.mxu0 0.0
        %4109 = vmatpush1.msra.mxu0 0.0
        %4110 = vmatprep.subr.mxu0 0.0
        %4111 = vmatpush1.msra.mxu0 0.0
        %4112 = vmatprep.subr.mxu0 0.0
        %4113 = vmatpush1.msra.mxu0 0.0
        %4114 = vmatprep.subr.mxu0 0.0
        %4115 = vmatpush1.msra.mxu0 0.0
        %4116 = vmatprep.subr.mxu0 0.0
        %4117 = vmatpush1.msra.mxu0 0.0
        %4118 = vmatprep.subr.mxu0 0.0
        %4119 = vmatpush1.msra.mxu0 0.0
        %4120 = vmatprep.mubr.f32.mxu0 0.0
        %4121 = vmatmul.mubr.f32.gmra.mrb[0].mxu0 %v4054
        %v4122 = vpop.f32.mrb[0].mxu0
        %v4123 = vadd.f32 0.0, %v4122
        %v4124 = vpop.f32.mrb[0].mxu0
        %4125 = vdwg.mxu0
        %v4126 = vadd.f32 %v3674, %v4123
        %4127 = vst.msk [vmem:[#allocation7 + $0x10] sm:$0xff] %vm762, %v4126
        %v4128 = vld [vmem:[#allocation7 + $0x18] sm:$0xff]
        %4129 = vrot.lane.b32.xlu0 %v2763, 104
        %v4130 = vpop.permute.xlu0 %4129
        %4131 = vrot.lane.b32.xlu0 %v760, 104
        %v4132 = vpop.permute.xlu0 %4131
        %v4133 = vsel %vm762, %v4130, 0
        %v4135 = vsel %vm762, %v4132, 0
        %4137 = vmatprep.subr.mxu0 0.0
        %4138 = vmatpush1.xpose.msra.mxu0 %v4135
        %4139 = vmatprep.subr.mxu0 0.0
        %4140 = vmatpush1.xpose.msra.mxu0 0.0
        %4141 = vmatprep.subr.mxu0 0.0
        %4142 = vmatpush1.xpose.msra.mxu0 0.0
        %4143 = vmatprep.subr.mxu0 0.0
        %4144 = vmatpush1.xpose.msra.mxu0 0.0
        %4145 = vmatprep.subr.mxu0 0.0
        %4146 = vmatpush1.xpose.msra.mxu0 0.0
        %4147 = vmatprep.subr.mxu0 0.0
        %4148 = vmatpush1.xpose.msra.mxu0 0.0
        %4149 = vmatprep.subr.mxu0 0.0
        %4150 = vmatpush1.xpose.msra.mxu0 0.0
        %4151 = vmatprep.subr.mxu0 0.0
        %4152 = vmatpush1.xpose.msra.mxu0 0.0
        %4153 = vmatprep.subr.mxu0 0.0
        %4154 = vmatpush1.xpose.msra.mxu0 0.0
        %4155 = vmatprep.subr.mxu0 0.0
        %4156 = vmatpush1.xpose.msra.mxu0 0.0
        %4157 = vmatprep.subr.mxu0 0.0
        %4158 = vmatpush1.xpose.msra.mxu0 0.0
        %4159 = vmatprep.subr.mxu0 0.0
        %4160 = vmatpush1.xpose.msra.mxu0 0.0
        %4161 = vmatprep.subr.mxu0 0.0
        %4162 = vmatpush1.xpose.msra.mxu0 0.0
        %4163 = vmatprep.subr.mxu0 0.0
        %4164 = vmatpush1.xpose.msra.mxu0 0.0
        %4165 = vmatprep.subr.mxu0 0.0
        %4166 = vmatpush1.xpose.msra.mxu0 0.0
        %4167 = vmatprep.subr.mxu0 0.0
        %4168 = vmatpush1.xpose.msra.mxu0 0.0
        %4169 = vmatprep.subr.mxu0 0.0
        %4170 = vmatpush1.xpose.msra.mxu0 0.0
        %4171 = vmatprep.subr.mxu0 0.0
        %4172 = vmatpush1.xpose.msra.mxu0 0.0
        %4173 = vmatprep.subr.mxu0 0.0
        %4174 = vmatpush1.xpose.msra.mxu0 0.0
        %4175 = vmatprep.subr.mxu0 0.0
        %4176 = vmatpush1.xpose.msra.mxu0 0.0
        %4177 = vmatprep.subr.mxu0 0.0
        %4178 = vmatpush1.xpose.msra.mxu0 0.0
        %4179 = vmatprep.subr.mxu0 0.0
        %4180 = vmatpush1.xpose.msra.mxu0 0.0
        %4181 = vmatprep.subr.mxu0 0.0
        %4182 = vmatpush1.xpose.msra.mxu0 0.0
        %4183 = vmatprep.subr.mxu0 0.0
        %4184 = vmatpush1.xpose.msra.mxu0 0.0
        %4185 = vmatprep.subr.mxu0 0.0
        %4186 = vmatpush1.xpose.msra.mxu0 0.0
        %4187 = vmatprep.subr.mxu0 0.0
        %4188 = vmatpush1.xpose.msra.mxu0 0.0
        %4189 = vmatprep.subr.mxu0 0.0
        %4190 = vmatpush1.xpose.msra.mxu0 0.0
        %4191 = vmatprep.subr.mxu0 0.0
        %4192 = vmatpush1.xpose.msra.mxu0 0.0
        %4193 = vmatprep.subr.mxu0 0.0
        %4194 = vmatpush1.xpose.msra.mxu0 0.0
        %4195 = vmatprep.subr.mxu0 0.0
        %4196 = vmatpush1.xpose.msra.mxu0 0.0
        %4197 = vmatprep.subr.mxu0 0.0
        %4198 = vmatpush1.xpose.msra.mxu0 0.0
        %4199 = vmatprep.subr.mxu0 0.0
        %4200 = vmatpush1.xpose.msra.mxu0 0.0
        %4201 = vmatprep.mubr.f32.mxu0 0.0
        %4202 = vmatmul.mubr.f32.gmra.mrb[0].mxu0 %v4133
        %v4203 = vpop.f32.mrb[0].mxu0
        %v4204 = vadd.f32 0.0, %v4203
        %v4205 = vpop.f32.mrb[0].mxu0
        %4206 = vdwg.mxu0
        %v4207 = vmul.f32 %v4204, %v562
        %4208 = vmatprep.subr.mxu0 0.0
        %4209 = vmatpush1.msra.mxu0 %v4128
        %4210 = vmatprep.subr.mxu0 0.0
        %4211 = vmatpush1.msra.mxu0 0.0
        %4212 = vmatprep.subr.mxu0 0.0
        %4213 = vmatpush1.msra.mxu0 0.0
        %4214 = vmatprep.subr.mxu0 0.0
        %4215 = vmatpush1.msra.mxu0 0.0
        %4216 = vmatprep.subr.mxu0 0.0
        %4217 = vmatpush1.msra.mxu0 0.0
        %4218 = vmatprep.subr.mxu0 0.0
        %4219 = vmatpush1.msra.mxu0 0.0
        %4220 = vmatprep.subr.mxu0 0.0
        %4221 = vmatpush1.msra.mxu0 0.0
        %4222 = vmatprep.subr.mxu0 0.0
        %4223 = vmatpush1.msra.mxu0 0.0
        %4224 = vmatprep.subr.mxu0 0.0
        %4225 = vmatpush1.msra.mxu0 0.0
        %4226 = vmatprep.subr.mxu0 0.0
        %4227 = vmatpush1.msra.mxu0 0.0
        %4228 = vmatprep.subr.mxu0 0.0
        %4229 = vmatpush1.msra.mxu0 0.0
        %4230 = vmatprep.subr.mxu0 0.0
        %4231 = vmatpush1.msra.mxu0 0.0
        %4232 = vmatprep.subr.mxu0 0.0
        %4233 = vmatpush1.msra.mxu0 0.0
        %4234 = vmatprep.subr.mxu0 0.0
        %4235 = vmatpush1.msra.mxu0 0.0
        %4236 = vmatprep.subr.mxu0 0.0
        %4237 = vmatpush1.msra.mxu0 0.0
        %4238 = vmatprep.subr.mxu0 0.0
        %4239 = vmatpush1.msra.mxu0 0.0
        %4240 = vmatprep.subr.mxu0 0.0
        %4241 = vmatpush1.msra.mxu0 0.0
        %4242 = vmatprep.subr.mxu0 0.0
        %4243 = vmatpush1.msra.mxu0 0.0
        %4244 = vmatprep.subr.mxu0 0.0
        %4245 = vmatpush1.msra.mxu0 0.0
        %4246 = vmatprep.subr.mxu0 0.0
        %4247 = vmatpush1.msra.mxu0 0.0
        %4248 = vmatprep.subr.mxu0 0.0
        %4249 = vmatpush1.msra.mxu0 0.0
        %4250 = vmatprep.subr.mxu0 0.0
        %4251 = vmatpush1.msra.mxu0 0.0
        %4252 = vmatprep.subr.mxu0 0.0
        %4253 = vmatpush1.msra.mxu0 0.0
        %4254 = vmatprep.subr.mxu0 0.0
        %4255 = vmatpush1.msra.mxu0 0.0
        %4256 = vmatprep.subr.mxu0 0.0
        %4257 = vmatpush1.msra.mxu0 0.0
        %4258 = vmatprep.subr.mxu0 0.0
        %4259 = vmatpush1.msra.mxu0 0.0
        %4260 = vmatprep.subr.mxu0 0.0
        %4261 = vmatpush1.msra.mxu0 0.0
        %4262 = vmatprep.subr.mxu0 0.0
        %4263 = vmatpush1.msra.mxu0 0.0
        %4264 = vmatprep.subr.mxu0 0.0
        %4265 = vmatpush1.msra.mxu0 0.0
        %4266 = vmatprep.subr.mxu0 0.0
        %4267 = vmatpush1.msra.mxu0 0.0
        %4268 = vmatprep.subr.mxu0 0.0
        %4269 = vmatpush1.msra.mxu0 0.0
        %4270 = vmatprep.subr.mxu0 0.0
        %4271 = vmatpush1.msra.mxu0 0.0
        %4272 = vmatprep.mubr.f32.mxu0 0.0
        %4273 = vmatmul.mubr.f32.gmra.mrb[0].mxu0 %v4133
        %v4274 = vpop.f32.mrb[0].mxu0
        %v4275 = vadd.f32 0.0, %v4274
        %v4276 = vpop.f32.mrb[0].mxu0
        %4277 = vdwg.mxu0
        %4278 = vrot.lane.b32.xlu0 %v2965, 104
        %v4279 = vpop.permute.xlu0 %4278
        %v4282 = vsel %vm762, %v4207, 0
        %4284 = vmatprep.subr.mxu0 0.0
        %4285 = vmatpush1.msra.mxu0 %v4279
        %4286 = vmatprep.subr.mxu0 0.0
        %4287 = vmatpush1.msra.mxu0 0.0
        %4288 = vmatprep.subr.mxu0 0.0
        %4289 = vmatpush1.msra.mxu0 0.0
        %4290 = vmatprep.subr.mxu0 0.0
        %4291 = vmatpush1.msra.mxu0 0.0
        %4292 = vmatprep.subr.mxu0 0.0
        %4293 = vmatpush1.msra.mxu0 0.0
        %4294 = vmatprep.subr.mxu0 0.0
        %4295 = vmatpush1.msra.mxu0 0.0
        %4296 = vmatprep.subr.mxu0 0.0
        %4297 = vmatpush1.msra.mxu0 0.0
        %4298 = vmatprep.subr.mxu0 0.0
        %4299 = vmatpush1.msra.mxu0 0.0
        %4300 = vmatprep.subr.mxu0 0.0
        %4301 = vmatpush1.msra.mxu0 0.0
        %4302 = vmatprep.subr.mxu0 0.0
        %4303 = vmatpush1.msra.mxu0 0.0
        %4304 = vmatprep.subr.mxu0 0.0
        %4305 = vmatpush1.msra.mxu0 0.0
        %4306 = vmatprep.subr.mxu0 0.0
        %4307 = vmatpush1.msra.mxu0 0.0
        %4308 = vmatprep.subr.mxu0 0.0
        %4309 = vmatpush1.msra.mxu0 0.0
        %4310 = vmatprep.subr.mxu0 0.0
        %4311 = vmatpush1.msra.mxu0 0.0
        %4312 = vmatprep.subr.mxu0 0.0
        %4313 = vmatpush1.msra.mxu0 0.0
        %4314 = vmatprep.subr.mxu0 0.0
        %4315 = vmatpush1.msra.mxu0 0.0
        %4316 = vmatprep.subr.mxu0 0.0
        %4317 = vmatpush1.msra.mxu0 0.0
        %4318 = vmatprep.subr.mxu0 0.0
        %4319 = vmatpush1.msra.mxu0 0.0
        %4320 = vmatprep.subr.mxu0 0.0
        %4321 = vmatpush1.msra.mxu0 0.0
        %4322 = vmatprep.subr.mxu0 0.0
        %4323 = vmatpush1.msra.mxu0 0.0
        %4324 = vmatprep.subr.mxu0 0.0
        %4325 = vmatpush1.msra.mxu0 0.0
        %4326 = vmatprep.subr.mxu0 0.0
        %4327 = vmatpush1.msra.mxu0 0.0
        %4328 = vmatprep.subr.mxu0 0.0
        %4329 = vmatpush1.msra.mxu0 0.0
        %4330 = vmatprep.subr.mxu0 0.0
        %4331 = vmatpush1.msra.mxu0 0.0
        %4332 = vmatprep.subr.mxu0 0.0
        %4333 = vmatpush1.msra.mxu0 0.0
        %4334 = vmatprep.subr.mxu0 0.0
        %4335 = vmatpush1.msra.mxu0 0.0
        %4336 = vmatprep.subr.mxu0 0.0
        %4337 = vmatpush1.msra.mxu0 0.0
        %4338 = vmatprep.subr.mxu0 0.0
        %4339 = vmatpush1.msra.mxu0 0.0
        %4340 = vmatprep.subr.mxu0 0.0
        %4341 = vmatpush1.msra.mxu0 0.0
        %4342 = vmatprep.subr.mxu0 0.0
        %4343 = vmatpush1.msra.mxu0 0.0
        %4344 = vmatprep.subr.mxu0 0.0
        %4345 = vmatpush1.msra.mxu0 0.0
        %4346 = vmatprep.subr.mxu0 0.0
        %4347 = vmatpush1.msra.mxu0 0.0
        %4348 = vmatprep.mubr.f32.mxu0 0.0
        %4349 = vmatmul.mubr.f32.gmra.mrb[0].mxu0 %v4282
        %v4350 = vpop.f32.mrb[0].mxu0
        %v4351 = vadd.f32 %v4275, %v4350
        %v4352 = vpop.f32.mrb[0].mxu0
        %4353 = vdwg.mxu0
        %4354 = vset.pattern.permute.xlu0 3
        %4355 = vperm.xlu0 %4354, %v2338
        %v4356 = vpop.permute.xlu0 %4355
        %v4358 = vmul.f32 %v4351, %v4356
        %v4360 = vcombine.high %v4358, %v4358
        %v4362 = vunpack.c.l.s4 1966171168
        %v4363 = vunpack.c.0.s8 %v4362
        %v4364 = vlaneseq
        %v4365 = vshrl.u32 %v4364, 7
        %v4366 = vsub.s32 %v4363, %v4365
        %v4367 = vrot.slane %v4358, %v4366
        %v4369 = vunpack.c.l.s4 1966171168
        %v4370 = vunpack.c.0.s8 %v4369
        %v4371 = vlaneseq
        %v4372 = vshrl.u32 %v4371, 7
        %v4373 = vsub.s32 %v4370, %v4372
        %v4374 = vrot.slane %v4360, %v4373
        %v4375 = vcombine.high %v4367, %v4367
        %v4376 = vcombine.high %v4374, %v4374
        %v4378 = vunpack.c.l.s4 1966171168
        %v4379 = vunpack.c.0.s8 %v4378
        %v4380 = vlaneseq
        %v4381 = vshrl.u32 %v4380, 7
        %v4382 = vsub.s32 %v4379, %v4381
        %v4383 = vrot.slane %v4367, %v4382
        %v4385 = vunpack.c.l.s4 1966171168
        %v4386 = vunpack.c.0.s8 %v4385
        %v4387 = vlaneseq
        %v4388 = vshrl.u32 %v4387, 7
        %v4389 = vsub.s32 %v4386, %v4388
        %v4390 = vrot.slane %v4374, %v4389
        %v4392 = vunpack.c.l.s4 1966171168
        %v4393 = vunpack.c.0.s8 %v4392
        %v4394 = vlaneseq
        %v4395 = vshrl.u32 %v4394, 7
        %v4396 = vsub.s32 %v4393, %v4395
        %v4397 = vrot.slane %v4375, %v4396
        %v4399 = vunpack.c.l.s4 1966171168
        %v4400 = vunpack.c.0.s8 %v4399
        %v4401 = vlaneseq
        %v4402 = vshrl.u32 %v4401, 7
        %v4403 = vsub.s32 %v4400, %v4402
        %v4404 = vrot.slane %v4376, %v4403
        %v4405 = vcombine.high %v4383, %v4383
        %v4406 = vcombine.high %v4390, %v4390
        %v4407 = vcombine.high %v4397, %v4397
        %v4408 = vcombine.high %v4404, %v4404
        %v4409 = vlaneseq
        %v4410 = vshrl.u32 %v4409, 7
        %v4411 = vsub.s32 0, %v4410
        %v4412 = vrot.slane %v4383, %v4411
        %v4413 = vlaneseq
        %v4414 = vshrl.u32 %v4413, 7
        %v4415 = vsub.s32 0, %v4414
        %v4416 = vrot.slane %v4397, %v4415
        %v4417 = vlaneseq
        %v4418 = vshrl.u32 %v4417, 7
        %v4419 = vsub.s32 0, %v4418
        %v4420 = vrot.slane %v4405, %v4419
        %v4421 = vlaneseq
        %v4422 = vshrl.u32 %v4421, 7
        %v4423 = vsub.s32 0, %v4422
        %v4424 = vrot.slane %v4407, %v4423
        %v4425 = vlaneseq
        %v4426 = vshrl.u32 %v4425, 7
        %v4427 = vsub.s32 0, %v4426
        %v4428 = vrot.slane %v4390, %v4427
        %v4429 = vlaneseq
        %v4430 = vshrl.u32 %v4429, 7
        %v4431 = vsub.s32 0, %v4430
        %v4432 = vrot.slane %v4404, %v4431
        %v4433 = vlaneseq
        %v4434 = vshrl.u32 %v4433, 7
        %v4435 = vsub.s32 0, %v4434
        %v4436 = vrot.slane %v4406, %v4435
        %v4437 = vlaneseq
        %v4438 = vshrl.u32 %v4437, 7
        %v4439 = vsub.s32 0, %v4438
        %v4440 = vrot.slane %v4408, %v4439
        %4441 = vrot.lane.b32.xlu0 %v4412, 24
        %v4442 = vpop.permute.xlu0 %4441
        %4443 = vrot.lane.b32.xlu0 %v4416, 24
        %v4444 = vpop.permute.xlu0 %4443
        %4445 = vrot.lane.b32.xlu0 %v4420, 24
        %v4446 = vpop.permute.xlu0 %4445
        %4447 = vrot.lane.b32.xlu0 %v4424, 24
        %v4448 = vpop.permute.xlu0 %4447
        %4449 = vrot.lane.b32.xlu0 %v4428, 24
        %v4450 = vpop.permute.xlu0 %4449
        %4451 = vrot.lane.b32.xlu0 %v4432, 24
        %v4452 = vpop.permute.xlu0 %4451
        %4453 = vrot.lane.b32.xlu0 %v4436, 24
        %v4454 = vpop.permute.xlu0 %4453
        %4455 = vrot.lane.b32.xlu0 %v4440, 24
        %v4456 = vpop.permute.xlu0 %4455
        %vm4465 = vcmask 254144
        %4466 = vst.msk [vmem:[%s541] sm:$0x1] %vm4465, %v4442
        %4467 = vst.msk [vmem:[%s541 + $0x1] sm:$0x1] %vm4465, %v4444
        %4468 = vst.msk [vmem:[%s541 + $0x2] sm:$0x1] %vm4465, %v4446
        %4469 = vst.msk [vmem:[%s541 + $0x3] sm:$0x1] %vm4465, %v4448
        %4470 = vst.msk [vmem:[%s541 + $0x4] sm:$0x1] %vm4465, %v4450
        %4471 = vst.msk [vmem:[%s541 + $0x5] sm:$0x1] %vm4465, %v4452
        %4472 = vst.msk [vmem:[%s541 + $0x6] sm:$0x1] %vm4465, %v4454
        %4473 = vst.msk [vmem:[%s541 + $0x7] sm:$0x1] %vm4465, %v4456
        %4475 = vxpose.xlu0.b32.start [1/16] %v4132, 128
        %4476 = vxpose.xlu0.b32.cont [2/16] 0.0, 128
        %4477 = vxpose.xlu0.b32.cont [3/16] 0.0, 128
        %4478 = vxpose.xlu0.b32.cont [4/16] 0.0, 128
        %4479 = vxpose.xlu0.b32.cont [5/16] 0.0, 128
        %4480 = vxpose.xlu0.b32.cont [6/16] 0.0, 128
        %4481 = vxpose.xlu0.b32.cont [7/16] 0.0, 128
        %4482 = vxpose.xlu0.b32.cont [8/16] 0.0, 128
        %4483 = vxpose.xlu0.b32.cont [9/16] 0.0, 128
        %4484 = vxpose.xlu0.b32.cont [10/16] 0.0, 128
        %4485 = vxpose.xlu0.b32.cont [11/16] 0.0, 128
        %4486 = vxpose.xlu0.b32.cont [12/16] 0.0, 128
        %4487 = vxpose.xlu0.b32.cont [13/16] 0.0, 128
        %4488 = vxpose.xlu0.b32.cont [14/16] 0.0, 128
        %4489 = vxpose.xlu0.b32.cont [15/16] 0.0, 128
        %4490 = vxpose.xlu0.b32.end [16/16] 0.0, 128
        %v4491 = vpop.trf.xlu0
        %v4492 = vpop.trf.xlu0
        %v4493 = vpop.trf.xlu0
        %v4494 = vpop.trf.xlu0
        %v4495 = vpop.trf.xlu0
        %v4496 = vpop.trf.xlu0
        %v4497 = vpop.trf.xlu0
        %v4498 = vpop.trf.xlu0
        %v4499 = vpop.trf.xlu0
        %v4500 = vpop.trf.xlu0
        %v4501 = vpop.trf.xlu0
        %v4502 = vpop.trf.xlu0
        %v4503 = vpop.trf.xlu0
        %v4504 = vpop.trf.xlu0
        %v4505 = vpop.trf.xlu0
        %v4506 = vpop.trf.xlu0
        %v4508 = vsel %vm762, %v4491, 0
        %4510 = vmatprep.subr.mxu0 0.0
        %4511 = vmatpush1.msra.mxu0 %v4279
        %4512 = vmatprep.subr.mxu0 0.0
        %4513 = vmatpush1.msra.mxu0 0.0
        %4514 = vmatprep.subr.mxu0 0.0
        %4515 = vmatpush1.msra.mxu0 0.0
        %4516 = vmatprep.subr.mxu0 0.0
        %4517 = vmatpush1.msra.mxu0 0.0
        %4518 = vmatprep.subr.mxu0 0.0
        %4519 = vmatpush1.msra.mxu0 0.0
        %4520 = vmatprep.subr.mxu0 0.0
        %4521 = vmatpush1.msra.mxu0 0.0
        %4522 = vmatprep.subr.mxu0 0.0
        %4523 = vmatpush1.msra.mxu0 0.0
        %4524 = vmatprep.subr.mxu0 0.0
        %4525 = vmatpush1.msra.mxu0 0.0
        %4526 = vmatprep.subr.mxu0 0.0
        %4527 = vmatpush1.msra.mxu0 0.0
        %4528 = vmatprep.subr.mxu0 0.0
        %4529 = vmatpush1.msra.mxu0 0.0
        %4530 = vmatprep.subr.mxu0 0.0
        %4531 = vmatpush1.msra.mxu0 0.0
        %4532 = vmatprep.subr.mxu0 0.0
        %4533 = vmatpush1.msra.mxu0 0.0
        %4534 = vmatprep.subr.mxu0 0.0
        %4535 = vmatpush1.msra.mxu0 0.0
        %4536 = vmatprep.subr.mxu0 0.0
        %4537 = vmatpush1.msra.mxu0 0.0
        %4538 = vmatprep.subr.mxu0 0.0
        %4539 = vmatpush1.msra.mxu0 0.0
        %4540 = vmatprep.subr.mxu0 0.0
        %4541 = vmatpush1.msra.mxu0 0.0
        %4542 = vmatprep.subr.mxu0 0.0
        %4543 = vmatpush1.msra.mxu0 0.0
        %4544 = vmatprep.subr.mxu0 0.0
        %4545 = vmatpush1.msra.mxu0 0.0
        %4546 = vmatprep.subr.mxu0 0.0
        %4547 = vmatpush1.msra.mxu0 0.0
        %4548 = vmatprep.subr.mxu0 0.0
        %4549 = vmatpush1.msra.mxu0 0.0
        %4550 = vmatprep.subr.mxu0 0.0
        %4551 = vmatpush1.msra.mxu0 0.0
        %4552 = vmatprep.subr.mxu0 0.0
        %4553 = vmatpush1.msra.mxu0 0.0
        %4554 = vmatprep.subr.mxu0 0.0
        %4555 = vmatpush1.msra.mxu0 0.0
        %4556 = vmatprep.subr.mxu0 0.0
        %4557 = vmatpush1.msra.mxu0 0.0
        %4558 = vmatprep.subr.mxu0 0.0
        %4559 = vmatpush1.msra.mxu0 0.0
        %4560 = vmatprep.subr.mxu0 0.0
        %4561 = vmatpush1.msra.mxu0 0.0
        %4562 = vmatprep.subr.mxu0 0.0
        %4563 = vmatpush1.msra.mxu0 0.0
        %4564 = vmatprep.subr.mxu0 0.0
        %4565 = vmatpush1.msra.mxu0 0.0
        %4566 = vmatprep.subr.mxu0 0.0
        %4567 = vmatpush1.msra.mxu0 0.0
        %4568 = vmatprep.subr.mxu0 0.0
        %4569 = vmatpush1.msra.mxu0 0.0
        %4570 = vmatprep.subr.mxu0 0.0
        %4571 = vmatpush1.msra.mxu0 0.0
        %4572 = vmatprep.subr.mxu0 0.0
        %4573 = vmatpush1.msra.mxu0 0.0
        %4574 = vmatprep.mubr.f32.mxu0 0.0
        %4575 = vmatmul.mubr.f32.gmra.mrb[0].mxu0 %v4508
        %v4576 = vpop.f32.mrb[0].mxu0
        %v4577 = vadd.f32 0.0, %v4576
        %v4578 = vpop.f32.mrb[0].mxu0
        %4579 = vdwg.mxu0
        %v4580 = vadd.f32 %v4128, %v4577
        %4581 = vst.msk [vmem:[#allocation7 + $0x18] sm:$0xff] %vm762, %v4580
        %s4582 = sand.u32 %s201, 1
        %s4583 = sand.u32 %s201, 1
        %s4584 = smul.addr %s4583, 8
        %s4585 = scalar_lea.vmem [#allocation11], %s4584
        // Predicated region
        $region172: #{multihead_flow_attention.4} parent=154 // pred_check
          %p4586 = pneg %p211
        $region173: #{multihead_flow_attention.4} parent=154 // pred_check_branch
          %4588 = sbr.rel (%p4586) target = $region175
        $region174: #{multihead_flow_attention.4} parent=154 // pred_region
          %s4589 = smul.u32 8, %s24
          %s4590 = sadd.s32 %s23, %s22
          %s4591 = smul.addr %s4589, 2
          %s4592 = sadd.s32 %s4590, %s4591
          %s4593 = scalar_lea.vmem %s6, %s4592
          // Predicated region
          $region176: #{multihead_flow_attention.4} parent=174 // pred_check
            _
          $region177: #{multihead_flow_attention.4} parent=174 // pred_check_branch
            %4595 = sbr.rel (0) target = $region179
          $region178: #{multihead_flow_attention.4} parent=174 // pred_region
            // Predicated region
            $region180: #{multihead_flow_attention.4} parent=178 // pred_check
              _
            $region181: #{multihead_flow_attention.4} parent=178 // pred_check_branch
              %4597 = sbr.rel target = $region183
            $region182: #{multihead_flow_attention.4} parent=178 // pred_region
              // Predicated region
              $region195: #{multihead_flow_attention.4} parent=182 // pred_check
                _
              $region196: #{multihead_flow_attention.4} parent=182 // pred_check_branch
                %4626 = sbr.rel (0) target = $region198
              $region197: #{multihead_flow_attention.4} parent=182 // pred_region
                loop: start=0, step=1, limit=1
                $region199: #{multihead_flow_attention.4} parent=197 // loop_pre_header
                  _
                $region200: #{multihead_flow_attention.4} parent=197 // loop_header
                  %s4628 = sphi 0, %s4632
                  %p4629 = scmp.ge.s32.totalorder %s4628, 1
                  %s4633 = sphi %s4585, %s4585
                  %s4634 = sphi %s4593, %s4593
                $region201: #{multihead_flow_attention.4} parent=197 // loop_header_branch
                  %4631 = sbr.rel (%p4629) target = $region205
                $region202: #{multihead_flow_attention.4} parent=197 // loop_body
                  _
                $region203: #{multihead_flow_attention.4} parent=197 // loop_footer
                  %s4632 = sadd.s32 1, %s4628
                $region204: #{multihead_flow_attention.4} parent=197 // loop_footer_branch
                  %4627 = sbr.rel target = $region200
                $region205: #{multihead_flow_attention.4} parent=197 // loop_exit
                  _
                loop: start=0, step=1, limit=1
                $region206: #{multihead_flow_attention.4} parent=197 // loop_pre_header
                  _
                $region207: #{multihead_flow_attention.4} parent=197 // loop_header
                  %s4637 = sphi 0, %s4641
                  %p4638 = scmp.ge.s32.totalorder %s4637, 1
                  %s4642 = sphi %s4585, %s4585
                  %s4643 = sphi %s4593, %s4593
                $region208: #{multihead_flow_attention.4} parent=197 // loop_header_branch
                  %4640 = sbr.rel (%p4638) target = $region212
                $region209: #{multihead_flow_attention.4} parent=197 // loop_body
                  %v4644 = vld [vmem:[%s4642] sm:$0x1]
                  %4645 = vst [vmem:[%s4643] sm:$0x1] %v4644
                  %v4646 = vld [vmem:[%s4642 + $0x1] sm:$0x1]
                  %4647 = vst [vmem:[%s4643 + $0x2] sm:$0x1] %v4646
                  %v4648 = vld [vmem:[%s4642 + $0x2] sm:$0x1]
                  %4649 = vst [vmem:[%s4643 + $0x4] sm:$0x1] %v4648
                  %v4650 = vld [vmem:[%s4642 + $0x3] sm:$0x1]
                  %4651 = vst [vmem:[%s4643 + $0x6] sm:$0x1] %v4650
                  %v4652 = vld [vmem:[%s4642 + $0x4] sm:$0x1]
                  %4653 = vst [vmem:[%s4643 + $0x8] sm:$0x1] %v4652
                  %v4654 = vld [vmem:[%s4642 + $0x5] sm:$0x1]
                  %4655 = vst [vmem:[%s4643 + $0xa] sm:$0x1] %v4654
                  %v4656 = vld [vmem:[%s4642 + $0x6] sm:$0x1]
                  %4657 = vst [vmem:[%s4643 + $0xc] sm:$0x1] %v4656
                  %v4658 = vld [vmem:[%s4642 + $0x7] sm:$0x1]
                  %4659 = vst [vmem:[%s4643 + $0xe] sm:$0x1] %v4658
                $region210: #{multihead_flow_attention.4} parent=197 // loop_footer
                  %s4641 = sadd.s32 1, %s4637
                $region211: #{multihead_flow_attention.4} parent=197 // loop_footer_branch
                  %4636 = sbr.rel target = $region207
                $region212: #{multihead_flow_attention.4} parent=197 // loop_exit
                  _
              $region198: #{multihead_flow_attention.4} parent=182 // pred_fallthru
                _
            $region183: #{multihead_flow_attention.4} parent=178 // pred_fallthru
              _
            // Predicated region
            $region184: #{multihead_flow_attention.4} parent=178 // pred_check
              _
            $region185: #{multihead_flow_attention.4} parent=178 // pred_check_branch
              %4599 = sbr.rel (0) target = $region187
            $region186: #{multihead_flow_attention.4} parent=178 // pred_region
              loop: start=0, step=1, limit=1
              $region188: #{multihead_flow_attention.4} parent=186 // loop_pre_header
                _
              $region189: #{multihead_flow_attention.4} parent=186 // loop_header
                %s4602 = sphi 0, %s4606
                %p4603 = scmp.ge.s32.totalorder %s4602, 1
                %s4607 = sphi %s4585, %s4585
                %s4608 = sphi %s4593, %s4593
              $region190: #{multihead_flow_attention.4} parent=186 // loop_header_branch
                %4605 = sbr.rel (%p4603) target = $region194
              $region191: #{multihead_flow_attention.4} parent=186 // loop_body
                %v4609 = vld [vmem:[%s4607] sm:$0x1]
                %4610 = vst [vmem:[%s4608] sm:$0x1] %v4609
                %v4611 = vld [vmem:[%s4607 + $0x1] sm:$0x1]
                %4612 = vst [vmem:[%s4608 + $0x2] sm:$0x1] %v4611
                %v4613 = vld [vmem:[%s4607 + $0x2] sm:$0x1]
                %4614 = vst [vmem:[%s4608 + $0x4] sm:$0x1] %v4613
                %v4615 = vld [vmem:[%s4607 + $0x3] sm:$0x1]
                %4616 = vst [vmem:[%s4608 + $0x6] sm:$0x1] %v4615
                %v4617 = vld [vmem:[%s4607 + $0x4] sm:$0x1]
                %4618 = vst [vmem:[%s4608 + $0x8] sm:$0x1] %v4617
                %v4619 = vld [vmem:[%s4607 + $0x5] sm:$0x1]
                %4620 = vst [vmem:[%s4608 + $0xa] sm:$0x1] %v4619
                %v4621 = vld [vmem:[%s4607 + $0x6] sm:$0x1]
                %4622 = vst [vmem:[%s4608 + $0xc] sm:$0x1] %v4621
                %v4623 = vld [vmem:[%s4607 + $0x7] sm:$0x1]
                %4624 = vst [vmem:[%s4608 + $0xe] sm:$0x1] %v4623
              $region192: #{multihead_flow_attention.4} parent=186 // loop_footer
                %s4606 = sadd.s32 1, %s4602
              $region193: #{multihead_flow_attention.4} parent=186 // loop_footer_branch
                %4601 = sbr.rel target = $region189
              $region194: #{multihead_flow_attention.4} parent=186 // loop_exit
                _
            $region187: #{multihead_flow_attention.4} parent=178 // pred_fallthru
              _
          $region179: #{multihead_flow_attention.4} parent=174 // pred_fallthru
            _
          %4660 = vnop
        $region175: #{multihead_flow_attention.4} parent=154 // pred_fallthru
          _
      $region155: #{multihead_flow_attention.4} parent=5 // pred_fallthru
        _
      %p4661 = scmp.le.s32.totalorder 2, %s12
      // Predicated region
      $region213: #{multihead_flow_attention.4} parent=5 // pred_check
        %p4662 = pneg %p4661
      $region214: #{multihead_flow_attention.4} parent=5 // pred_check_branch
        %4664 = sbr.rel (%p4662) target = $region216
      $region215: #{multihead_flow_attention.4} parent=5 // pred_region
        %s4665 = ssub.s32 %s12, 2
        // Predicated region
        $region217: #{multihead_flow_attention.4} parent=215 // pred_check
          %p4666 = pneg %p217
        $region218: #{multihead_flow_attention.4} parent=215 // pred_check_branch
          %4668 = sbr.rel (%p4666) target = $region220
        $region219: #{multihead_flow_attention.4} parent=215 // pred_region
          %s4669 = sand.u32 %s202, 1
          %s4670 = sand.u32 %s202, 1
          %s4671 = smul.addr %s4670, 8
          %s4672 = scalar_lea.vmem [#allocation11], %s4671
        $region220: #{multihead_flow_attention.4} parent=215 // pred_fallthru
          _
      $region216: #{multihead_flow_attention.4} parent=5 // pred_fallthru
        _
    $region6: #{multihead_flow_attention.4} parent=1 // loop_footer
      %s16 = sadd.s32 1, %s12
    $region7: #{multihead_flow_attention.4} parent=1 // loop_footer_branch
      %11 = sbr.rel target = $region3
    $region8: #{multihead_flow_attention.4} parent=1 // loop_exit
      _

</llo_original>
